<compile_context>
chip_gen: v7x
topology: tpu7x:2x2x1
jax: 0.10.0
libtpu: 0.0.40
codegen_flags: <defaults>
</compile_context>

<pallas_src>
import math
import jax
import jax.numpy as jnp
from jax.experimental import pallas as pl
from jax.experimental.pallas import tpu as pltpu

# ---- hyperparameters consistent with the module's __init__ ----
VOCAB = 50          # vocab_size
VOCAB_PAD = 64      # padded so the one-hot matmul K-dim is aligned
E   = 32            # embedding_dim (d_model)
HID = 64            # hidden_dim (dim_feedforward)
LAT = 16            # latent_dim   (2*LAT == E so mu|logvar share the 32-lane output)
L   = 2             # num_layers
H   = 4             # num_heads
DH  = E // H        # head dim
S   = 8             # sequence length
B   = 2             # batch size
BS  = B * S
EPS = 1e-5          # LayerNorm eps (PyTorch default)

# ---- single parameter-slab layout (width 128 lanes, all offsets static) ----
R_EMB    = 0                       # (VOCAB_PAD, E)  embedding table * sqrt(E)
R_PE     = R_EMB + VOCAB_PAD       # (BS, E)         pos-encoding, tiled batch-major
R_HEAD   = R_PE + BS               # (E, 2*LAT)      [fc_mu | fc_logvar] weight (transposed)
R_BHEAD  = R_HEAD + E              # (1, 2*LAT)      [fc_mu | fc_logvar] bias (8 rows reserved)
R_LAYER0 = R_BHEAD + 8             # first per-layer block
# per-layer block (relative offsets):
R_L_WA   = 0                       # (E, 128): lanes 0:96 = in_proj.T (Q cols pre-scaled),
                                   #           lanes 96:128 = out_proj.T
R_L_W1   = E                       # (E, HID): linear1.weight.T
R_L_W2   = 2 * E                   # (HID, E): linear2.weight.T  (pre-transposed)
R_L_VEC  = 2 * E + HID             # (8, 128): bias / LayerNorm vector rows
LAYER_ROWS = R_L_VEC + 8           # 136
TOTAL_ROWS = R_LAYER0 + L * LAYER_ROWS   # 392 (multiple of 8)

# row indices inside the per-layer vector block
_V_BIN, _V_BO, _V_LN1W, _V_LN1B, _V_LN2W, _V_LN2B, _V_B1, _V_B2 = range(8)


def _layernorm(x, w, b):
    mu = jnp.mean(x, axis=-1, keepdims=True)
    var = jnp.mean((x - mu) ** 2, axis=-1, keepdims=True)
    return (x - mu) * jax.lax.rsqrt(var + EPS) * w + b


def encoder_kernel(onehot_ref, slab_ref, out_ref):
    # Everything is tiny -> fully VMEM resident, single grid point.
    # Activation rows are batch-major: row index = b*S + s.

    # ---- embedding gather (one-hot matmul vs. pre-scaled table) + pos-encoding ----
    x = jnp.dot(onehot_ref[...], slab_ref[R_EMB:R_EMB + VOCAB_PAD, 0:E],
                preferred_element_type=jnp.float32)            # (BS, E)
    x = x + slab_ref[R_PE:R_PE + BS, 0:E]

    for l in range(L):
        base = R_LAYER0 + l * LAYER_ROWS
        w_in_t = slab_ref[base:base + E, 0:3 * E]              # (E, 3E), Q cols pre-scaled
        w_o_t  = slab_ref[base:base + E, 3 * E:4 * E]          # (E, E)
        w1_t   = slab_ref[base + R_L_W1:base + R_L_W1 + E, 0:HID]    # (E, HID)
        w2_t   = slab_ref[base + R_L_W2:base + R_L_W2 + HID, 0:E]    # (HID, E)
        vecs   = slab_ref[base + R_L_VEC:base + R_L_VEC + 8, :]      # (8, 128) -> one vreg
        b_in = vecs[_V_BIN:_V_BIN + 1, 0:3 * E]                # Q part pre-scaled
        b_o  = vecs[_V_BO:_V_BO + 1, 0:E]
        ln1w = vecs[_V_LN1W:_V_LN1W + 1, 0:E]
        ln1b = vecs[_V_LN1B:_V_LN1B + 1, 0:E]
        ln2w = vecs[_V_LN2W:_V_LN2W + 1, 0:E]
        ln2b = vecs[_V_LN2B:_V_LN2B + 1, 0:E]
        b1   = vecs[_V_B1:_V_B1 + 1, 0:HID]
        b2   = vecs[_V_B2:_V_B2 + 1, 0:E]

        # ---- multi-head self-attention (post-LN layer, no mask) ----
        qkv = jnp.dot(x, w_in_t, preferred_element_type=jnp.float32) + b_in   # (BS, 3E)
        attn = b_o                                             # out_proj bias, broadcasts
        for h in range(H):
            qh = qkv[:, h * DH:(h + 1) * DH].reshape(B, S, DH)
            kh = qkv[:, E + h * DH:E + (h + 1) * DH].reshape(B, S, DH)
            vh = qkv[:, 2 * E + h * DH:2 * E + (h + 1) * DH].reshape(B, S, DH)
            sc = jnp.einsum('bsd,btd->bst', qh, kh,
                            preferred_element_type=jnp.float32)        # scale folded in W_q
            sc = sc - jnp.max(sc, axis=-1, keepdims=True)
            p = jnp.exp(sc)
            p = p * pl.reciprocal(jnp.sum(p, axis=-1, keepdims=True), approx=True)
            oh = jnp.einsum('bst,btd->bsd', p, vh,
                            preferred_element_type=jnp.float32).reshape(BS, DH)
            # accumulate straight into the out-projection: no head concat needed
            attn = attn + jnp.dot(oh, w_o_t[h * DH:(h + 1) * DH, :],
                                  preferred_element_type=jnp.float32)
        x = _layernorm(x + attn, ln1w, ln1b)

        # ---- feed-forward: linear1 -> relu -> linear2 (pre-transposed) ----
        ff = jnp.dot(x, w1_t, preferred_element_type=jnp.float32) + b1
        ff = jnp.maximum(ff, 0.0)
        ff = jnp.dot(ff, w2_t, preferred_element_type=jnp.float32) + b2
        x = _layernorm(x + ff, ln2w, ln2b)

    # ---- merged output: rows 0:BS = encoded (batch-major), rows BS:BS+S = [mu|logvar] ----
    out_ref[0:BS, :] = x

    # encoded_src.mean(dim=1) == mean over the batch axis (rows are b-major)
    mean_x = x[0:S, :]
    for b in range(1, B):
        mean_x = mean_x + x[b * S:(b + 1) * S, :]
    mean_x = mean_x * (1.0 / float(B))                          # (S, E)

    whead = slab_ref[R_HEAD:R_HEAD + E, 0:2 * LAT]              # (E, 2*LAT)
    bhead = slab_ref[R_BHEAD:R_BHEAD + 1, 0:2 * LAT]            # (1, 2*LAT)
    out_ref[BS:BS + S, :] = (jnp.dot(mean_x, whead, preferred_element_type=jnp.float32)
                             + bhead)


def positional_encoding(max_len, d_model):
    pos = jnp.arange(max_len, dtype=jnp.float32)[:, None]
    div = jnp.exp(jnp.arange(0, d_model, 2, dtype=jnp.float32)
                  * -(math.log(10000.0) / d_model))
    pe = jnp.zeros((max_len, d_model), jnp.float32)
    pe = pe.at[:, 0::2].set(jnp.sin(pos * div))
    pe = pe.at[:, 1::2].set(jnp.cos(pos * div))
    return pe


def make_params(key):
    ks = jax.random.split(key, 16)
    init = lambda k, shp, s=0.1: s * jax.random.normal(k, shp, jnp.float32)
    return dict(
        emb=init(ks[0], (VOCAB, E), 1.0),
        w_in=init(ks[1], (L, 3 * E, E)),   b_in=init(ks[2], (L, 1, 3 * E)),
        w_o=init(ks[3], (L, E, E)),        b_o=init(ks[4], (L, 1, E)),
        ln1w=jnp.ones((L, 1, E), jnp.float32), ln1b=jnp.zeros((L, 1, E), jnp.float32),
        ln2w=jnp.ones((L, 1, E), jnp.float32), ln2b=jnp.zeros((L, 1, E), jnp.float32),
        w1=init(ks[5], (L, HID, E)),       b1=init(ks[6], (L, 1, HID)),
        w2=init(ks[7], (L, E, HID)),       b2=init(ks[8], (L, 1, E)),
        wmu=init(ks[9], (LAT, E)),         bmu=init(ks[10], (1, LAT)),
        wlv=init(ks[11], (LAT, E)),        blv=init(ks[12], (1, LAT)),
    )


def pack_params(params):
    """Collapse all PyTorch-layout parameters into ONE f32 (392, 128) VMEM slab.

    Constant folding done here so the kernel never multiplies by sqrt(E) or
    1/sqrt(DH): the embedding table is pre-scaled by sqrt(E) and the Q columns
    of in_proj weight/bias are pre-scaled by 1/sqrt(DH)."""
    slab = jnp.zeros((TOTAL_ROWS, 128), jnp.float32)
    qscale = 1.0 / math.sqrt(DH)

    # embedding table * sqrt(E), padded rows are zero and never selected
    emb_scaled = params['emb'] * math.sqrt(E)
    emb_pad = jnp.pad(emb_scaled, ((0, VOCAB_PAD - VOCAB), (0, 0)))
    slab = slab.at[R_EMB:R_EMB + VOCAB_PAD, 0:E].set(emb_pad)

    # positional encoding tiled batch-major (row b*S+s gets pe[s])
    pe_tiled = jnp.tile(positional_encoding(S, E), (B, 1))
    slab = slab.at[R_PE:R_PE + BS, 0:E].set(pe_tiled)

    # fused latent heads
    whead = jnp.concatenate([params['wmu'], params['wlv']], axis=0).T    # (E, 2*LAT)
    bhead = jnp.concatenate([params['bmu'], params['blv']], axis=1)      # (1, 2*LAT)
    slab = slab.at[R_HEAD:R_HEAD + E, 0:2 * LAT].set(whead)
    slab = slab.at[R_BHEAD:R_BHEAD + 1, 0:2 * LAT].set(bhead)

    for l in range(L):
        base = R_LAYER0 + l * LAYER_ROWS

        w_in_t = params['w_in'][l].T                                     # (E, 3E)
        w_in_t = w_in_t.at[:, 0:E].multiply(qscale)                      # fold 1/sqrt(DH)
        slab = slab.at[base:base + E, 0:3 * E].set(w_in_t)
        slab = slab.at[base:base + E, 3 * E:4 * E].set(params['w_o'][l].T)
        slab = slab.at[base + R_L_W1:base + R_L_W1 + E, 0:HID].set(params['w1'][l].T)
        slab = slab.at[base + R_L_W2:base + R_L_W2 + HID, 0:E].set(params['w2'][l].T)

        b_in = params['b_in'][l]
        b_in = b_in.at[:, 0:E].multiply(qscale)                          # fold 1/sqrt(DH)
        vrow = base + R_L_VEC

        def setrow(s, r, v):
            v = jnp.reshape(v, (1, -1)).astype(jnp.float32)
            return s.at[vrow + r:vrow + r + 1, 0:v.shape[1]].set(v)

        slab = setrow(slab, _V_BIN, b_in)
        slab = setrow(slab, _V_BO, params['b_o'][l])
        slab = setrow(slab, _V_LN1W, params['ln1w'][l])
        slab = setrow(slab, _V_LN1B, params['ln1b'][l])
        slab = setrow(slab, _V_LN2W, params['ln2w'][l])
        slab = setrow(slab, _V_LN2B, params['ln2b'][l])
        slab = setrow(slab, _V_B1, params['b1'][l])
        slab = setrow(slab, _V_B2, params['b2'][l])
    return slab


def transformer_vae_encoder(src, slab):
    """src: (S, B) int32 token ids (PyTorch seq-first). Returns (mu, logvar, encoded_src)."""
    # batch-major flat token ids -> f32 one-hot built in the wrapper (tiny XLA op);
    # out-of-range ids would silently select a zero (padded) embedding row.
    ids = jnp.transpose(src).reshape(BS).astype(jnp.int32)
    onehot = (ids[:, None] == jnp.arange(VOCAB_PAD, dtype=jnp.int32)[None, :]
              ).astype(jnp.float32)                                      # (BS, VOCAB_PAD)

    vmem = pl.BlockSpec(memory_space=pltpu.MemorySpace.VMEM)
    out = pl.pallas_call(
        encoder_kernel,
        out_shape=jax.ShapeDtypeStruct((BS + S, E), jnp.float32),        # one merged output
        in_specs=[vmem, vmem],                                           # two DMAs total
        out_specs=vmem,
    )(onehot, slab)

    enc_flat = out[0:BS]                                                 # (BS, E) batch-major
    head = out[BS:BS + S]                                                # (S, 2*LAT)
    mu = head[:, :LAT]
    logvar = head[:, LAT:]
    encoded_src = jnp.transpose(enc_flat.reshape(B, S, E), (1, 0, 2))    # (S, B, E)
    return mu, logvar, encoded_src


if __name__ == "__main__":
    key = jax.random.PRNGKey(0)
    pkey, skey = jax.random.split(key)
    params = make_params(pkey)
    slab = pack_params(params)
    src = jax.random.randint(skey, (S, B), 0, VOCAB, dtype=jnp.int32)

    fwd = jax.jit(lambda s: transformer_vae_encoder(s, slab))
    mu, logvar, enc = fwd(src)
    jax.block_until_ready((mu, logvar, enc))

    assert mu.shape == (S, LAT)
    assert logvar.shape == (S, LAT)
    assert enc.shape == (S, B, E)
    assert jnp.all(jnp.isfinite(mu)) and jnp.all(jnp.isfinite(logvar)) and jnp.all(jnp.isfinite(enc))
    print("KERNEL_OK")
</pallas_src>

<mosaic_0001>
module attributes {stable_mosaic.version = 11 : i64} {
  func.func @encoder_kernel(%arg0: memref<16x64xf32, #tpu.memory_space<vmem>>, %arg1: memref<392x128xf32, #tpu.memory_space<vmem>>, %arg2: memref<24x32xf32, #tpu.memory_space<vmem>>) attributes {dimension_semantics = [], scalar_prefetch = 0 : i64, scratch_operands = 0 : i64, tpu.core_type = #tpu.core_type<tc>} {
    %c0 = arith.constant 0 : index
    %c0_0 = arith.constant 0 : index
    %0 = vector.load %arg0[%c0, %c0_0] : memref<16x64xf32, #tpu.memory_space<vmem>>, vector<16x64xf32>
    %c0_1 = arith.constant 0 : index
    %c0_2 = arith.constant 0 : index
    %1 = vector.load %arg1[%c0_1, %c0_2] : memref<392x128xf32, #tpu.memory_space<vmem>>, vector<64x32xf32>
    %cst = arith.constant dense<0.000000e+00> : vector<16x32xf32>
    %2 = tpu.matmul %0, %1, %cst {dimension_numbers = #tpu.dot_dimension_numbers<[1], [0], [0], [1], [0, 0, 1, 1], [], []>} : vector<16x64xf32>, vector<64x32xf32>, vector<16x32xf32> -> vector<16x32xf32>
    %c64 = arith.constant 64 : index
    %c0_3 = arith.constant 0 : index
    %3 = vector.load %arg1[%c64, %c0_3] : memref<392x128xf32, #tpu.memory_space<vmem>>, vector<16x32xf32>
    %4 = arith.addf %2, %3 : vector<16x32xf32>
    %c120 = arith.constant 120 : index
    %c0_4 = arith.constant 0 : index
    %5 = vector.load %arg1[%c120, %c0_4] : memref<392x128xf32, #tpu.memory_space<vmem>>, vector<32x96xf32>
    %c120_5 = arith.constant 120 : index
    %c96 = arith.constant 96 : index
    %6 = vector.load %arg1[%c120_5, %c96] : memref<392x128xf32, #tpu.memory_space<vmem>>, vector<32x32xf32>
    %c152 = arith.constant 152 : index
    %c0_6 = arith.constant 0 : index
    %7 = vector.load %arg1[%c152, %c0_6] : memref<392x128xf32, #tpu.memory_space<vmem>>, vector<32x64xf32>
    %c184 = arith.constant 184 : index
    %c0_7 = arith.constant 0 : index
    %8 = vector.load %arg1[%c184, %c0_7] : memref<392x128xf32, #tpu.memory_space<vmem>>, vector<64x32xf32>
    %c248 = arith.constant 248 : index
    %c0_8 = arith.constant 0 : index
    %9 = vector.load %arg1[%c248, %c0_8] : memref<392x128xf32, #tpu.memory_space<vmem>>, vector<8x128xf32>
    %10 = vector.extract_strided_slice %9 {offsets = [0, 0], sizes = [1, 96], strides = [1, 1]} : vector<8x128xf32> to vector<1x96xf32>
    %11 = vector.extract_strided_slice %9 {offsets = [1, 0], sizes = [1, 32], strides = [1, 1]} : vector<8x128xf32> to vector<1x32xf32>
    %12 = vector.extract_strided_slice %9 {offsets = [2, 0], sizes = [1, 32], strides = [1, 1]} : vector<8x128xf32> to vector<1x32xf32>
    %13 = vector.extract_strided_slice %9 {offsets = [3, 0], sizes = [1, 32], strides = [1, 1]} : vector<8x128xf32> to vector<1x32xf32>
    %14 = vector.extract_strided_slice %9 {offsets = [4, 0], sizes = [1, 32], strides = [1, 1]} : vector<8x128xf32> to vector<1x32xf32>
    %15 = vector.extract_strided_slice %9 {offsets = [5, 0], sizes = [1, 32], strides = [1, 1]} : vector<8x128xf32> to vector<1x32xf32>
    %16 = vector.extract_strided_slice %9 {offsets = [6, 0], sizes = [1, 64], strides = [1, 1]} : vector<8x128xf32> to vector<1x64xf32>
    %17 = vector.extract_strided_slice %9 {offsets = [7, 0], sizes = [1, 32], strides = [1, 1]} : vector<8x128xf32> to vector<1x32xf32>
    %cst_9 = arith.constant dense<0.000000e+00> : vector<16x96xf32>
    %18 = tpu.matmul %4, %5, %cst_9 {dimension_numbers = #tpu.dot_dimension_numbers<[1], [0], [0], [1], [0, 0, 1, 1], [], []>} : vector<16x32xf32>, vector<32x96xf32>, vector<16x96xf32> -> vector<16x96xf32>
    %19 = vector.broadcast %10 : vector<1x96xf32> to vector<16x96xf32>
    %20 = arith.addf %18, %19 : vector<16x96xf32>
    %21 = vector.extract_strided_slice %20 {offsets = [0, 0], sizes = [16, 8], strides = [1, 1]} : vector<16x96xf32> to vector<16x8xf32>
    %22 = vector.shape_cast %21 : vector<16x8xf32> to vector<2x8x8xf32>
    %23 = vector.extract_strided_slice %20 {offsets = [0, 32], sizes = [16, 8], strides = [1, 1]} : vector<16x96xf32> to vector<16x8xf32>
    %24 = vector.shape_cast %23 : vector<16x8xf32> to vector<2x8x8xf32>
    %25 = vector.extract_strided_slice %20 {offsets = [0, 64], sizes = [16, 8], strides = [1, 1]} : vector<16x96xf32> to vector<16x8xf32>
    %26 = vector.shape_cast %25 : vector<16x8xf32> to vector<2x8x8xf32>
    "tpu.trace_start"() <{level = 10 : i32, message = "bsd,btd->bst"}> : () -> ()
    %cst_10 = arith.constant dense<0.000000e+00> : vector<2x8x8xf32>
    %27 = tpu.matmul %22, %24, %cst_10 {dimension_numbers = #tpu.dot_dimension_numbers<[2], [2], [1], [1], [0, 0, 0, 1, 1, 1], [0], [0]>} : vector<2x8x8xf32>, vector<2x8x8xf32>, vector<2x8x8xf32> -> vector<2x8x8xf32>
    "tpu.trace_stop"() : () -> ()
    %cst_11 = arith.constant dense<0xFF800000> : vector<2x8xf32>
    %28 = vector.multi_reduction <maximumf>, %27, %cst_11 [2] : vector<2x8x8xf32> to vector<2x8xf32>
    %29 = vector.shape_cast %28 : vector<2x8xf32> to vector<2x8x1xf32>
    %30 = vector.broadcast %29 : vector<2x8x1xf32> to vector<2x8x8xf32>
    %31 = arith.subf %27, %30 : vector<2x8x8xf32>
    %32 = math.exp %31 : vector<2x8x8xf32>
    %cst_12 = arith.constant dense<0.000000e+00> : vector<2x8xf32>
    %33 = vector.multi_reduction <add>, %32, %cst_12 [2] : vector<2x8x8xf32> to vector<2x8xf32>
    %34 = vector.shape_cast %33 : vector<2x8xf32> to vector<2x8x1xf32>
    %35 = tpu.reciprocal %34 {approx = true} : vector<2x8x1xf32> -> vector<2x8x1xf32>
    %36 = vector.broadcast %35 : vector<2x8x1xf32> to vector<2x8x8xf32>
    %37 = arith.mulf %32, %36 : vector<2x8x8xf32>
    "tpu.trace_start"() <{level = 10 : i32, message = "bst,btd->bsd"}> : () -> ()
    %cst_13 = arith.constant dense<0.000000e+00> : vector<2x8x8xf32>
    %38 = tpu.matmul %37, %26, %cst_13 {dimension_numbers = #tpu.dot_dimension_numbers<[2], [1], [1], [2], [0, 0, 0, 1, 1, 2], [0], [0]>} : vector<2x8x8xf32>, vector<2x8x8xf32>, vector<2x8x8xf32> -> vector<2x8x8xf32>
    "tpu.trace_stop"() : () -> ()
    %39 = vector.shape_cast %38 : vector<2x8x8xf32> to vector<16x8xf32>
    %40 = vector.extract_strided_slice %6 {offsets = [0, 0], sizes = [8, 32], strides = [1, 1]} : vector<32x32xf32> to vector<8x32xf32>
    %cst_14 = arith.constant dense<0.000000e+00> : vector<16x32xf32>
    %41 = tpu.matmul %39, %40, %cst_14 {dimension_numbers = #tpu.dot_dimension_numbers<[1], [0], [0], [1], [0, 0, 1, 1], [], []>} : vector<16x8xf32>, vector<8x32xf32>, vector<16x32xf32> -> vector<16x32xf32>
    %42 = vector.broadcast %11 : vector<1x32xf32> to vector<16x32xf32>
    %43 = arith.addf %42, %41 : vector<16x32xf32>
    %44 = vector.extract_strided_slice %20 {offsets = [0, 8], sizes = [16, 8], strides = [1, 1]} : vector<16x96xf32> to vector<16x8xf32>
    %45 = vector.shape_cast %44 : vector<16x8xf32> to vector<2x8x8xf32>
    %46 = vector.extract_strided_slice %20 {offsets = [0, 40], sizes = [16, 8], strides = [1, 1]} : vector<16x96xf32> to vector<16x8xf32>
    %47 = vector.shape_cast %46 : vector<16x8xf32> to vector<2x8x8xf32>
    %48 = vector.extract_strided_slice %20 {offsets = [0, 72], sizes = [16, 8], strides = [1, 1]} : vector<16x96xf32> to vector<16x8xf32>
    %49 = vector.shape_cast %48 : vector<16x8xf32> to vector<2x8x8xf32>
    "tpu.trace_start"() <{level = 10 : i32, message = "bsd,btd->bst"}> : () -> ()
    %cst_15 = arith.constant dense<0.000000e+00> : vector<2x8x8xf32>
    %50 = tpu.matmul %45, %47, %cst_15 {dimension_numbers = #tpu.dot_dimension_numbers<[2], [2], [1], [1], [0, 0, 0, 1, 1, 1], [0], [0]>} : vector<2x8x8xf32>, vector<2x8x8xf32>, vector<2x8x8xf32> -> vector<2x8x8xf32>
    "tpu.trace_stop"() : () -> ()
    %cst_16 = arith.constant dense<0xFF800000> : vector<2x8xf32>
    %51 = vector.multi_reduction <maximumf>, %50, %cst_16 [2] : vector<2x8x8xf32> to vector<2x8xf32>
    %52 = vector.shape_cast %51 : vector<2x8xf32> to vector<2x8x1xf32>
    %53 = vector.broadcast %52 : vector<2x8x1xf32> to vector<2x8x8xf32>
    %54 = arith.subf %50, %53 : vector<2x8x8xf32>
    %55 = math.exp %54 : vector<2x8x8xf32>
    %cst_17 = arith.constant dense<0.000000e+00> : vector<2x8xf32>
    %56 = vector.multi_reduction <add>, %55, %cst_17 [2] : vector<2x8x8xf32> to vector<2x8xf32>
    %57 = vector.shape_cast %56 : vector<2x8xf32> to vector<2x8x1xf32>
    %58 = tpu.reciprocal %57 {approx = true} : vector<2x8x1xf32> -> vector<2x8x1xf32>
    %59 = vector.broadcast %58 : vector<2x8x1xf32> to vector<2x8x8xf32>
    %60 = arith.mulf %55, %59 : vector<2x8x8xf32>
    "tpu.trace_start"() <{level = 10 : i32, message = "bst,btd->bsd"}> : () -> ()
    %cst_18 = arith.constant dense<0.000000e+00> : vector<2x8x8xf32>
    %61 = tpu.matmul %60, %49, %cst_18 {dimension_numbers = #tpu.dot_dimension_numbers<[2], [1], [1], [2], [0, 0, 0, 1, 1, 2], [0], [0]>} : vector<2x8x8xf32>, vector<2x8x8xf32>, vector<2x8x8xf32> -> vector<2x8x8xf32>
    "tpu.trace_stop"() : () -> ()
    %62 = vector.shape_cast %61 : vector<2x8x8xf32> to vector<16x8xf32>
    %63 = vector.extract_strided_slice %6 {offsets = [8, 0], sizes = [8, 32], strides = [1, 1]} : vector<32x32xf32> to vector<8x32xf32>
    %cst_19 = arith.constant dense<0.000000e+00> : vector<16x32xf32>
    %64 = tpu.matmul %62, %63, %cst_19 {dimension_numbers = #tpu.dot_dimension_numbers<[1], [0], [0], [1], [0, 0, 1, 1], [], []>} : vector<16x8xf32>, vector<8x32xf32>, vector<16x32xf32> -> vector<16x32xf32>
    %65 = arith.addf %43, %64 : vector<16x32xf32>
    %66 = vector.extract_strided_slice %20 {offsets = [0, 16], sizes = [16, 8], strides = [1, 1]} : vector<16x96xf32> to vector<16x8xf32>
    %67 = vector.shape_cast %66 : vector<16x8xf32> to vector<2x8x8xf32>
    %68 = vector.extract_strided_slice %20 {offsets = [0, 48], sizes = [16, 8], strides = [1, 1]} : vector<16x96xf32> to vector<16x8xf32>
    %69 = vector.shape_cast %68 : vector<16x8xf32> to vector<2x8x8xf32>
    %70 = vector.extract_strided_slice %20 {offsets = [0, 80], sizes = [16, 8], strides = [1, 1]} : vector<16x96xf32> to vector<16x8xf32>
    %71 = vector.shape_cast %70 : vector<16x8xf32> to vector<2x8x8xf32>
    "tpu.trace_start"() <{level = 10 : i32, message = "bsd,btd->bst"}> : () -> ()
    %cst_20 = arith.constant dense<0.000000e+00> : vector<2x8x8xf32>
    %72 = tpu.matmul %67, %69, %cst_20 {dimension_numbers = #tpu.dot_dimension_numbers<[2], [2], [1], [1], [0, 0, 0, 1, 1, 1], [0], [0]>} : vector<2x8x8xf32>, vector<2x8x8xf32>, vector<2x8x8xf32> -> vector<2x8x8xf32>
    "tpu.trace_stop"() : () -> ()
    %cst_21 = arith.constant dense<0xFF800000> : vector<2x8xf32>
    %73 = vector.multi_reduction <maximumf>, %72, %cst_21 [2] : vector<2x8x8xf32> to vector<2x8xf32>
    %74 = vector.shape_cast %73 : vector<2x8xf32> to vector<2x8x1xf32>
    %75 = vector.broadcast %74 : vector<2x8x1xf32> to vector<2x8x8xf32>
    %76 = arith.subf %72, %75 : vector<2x8x8xf32>
    %77 = math.exp %76 : vector<2x8x8xf32>
    %cst_22 = arith.constant dense<0.000000e+00> : vector<2x8xf32>
    %78 = vector.multi_reduction <add>, %77, %cst_22 [2] : vector<2x8x8xf32> to vector<2x8xf32>
    %79 = vector.shape_cast %78 : vector<2x8xf32> to vector<2x8x1xf32>
    %80 = tpu.reciprocal %79 {approx = true} : vector<2x8x1xf32> -> vector<2x8x1xf32>
    %81 = vector.broadcast %80 : vector<2x8x1xf32> to vector<2x8x8xf32>
    %82 = arith.mulf %77, %81 : vector<2x8x8xf32>
    "tpu.trace_start"() <{level = 10 : i32, message = "bst,btd->bsd"}> : () -> ()
    %cst_23 = arith.constant dense<0.000000e+00> : vector<2x8x8xf32>
    %83 = tpu.matmul %82, %71, %cst_23 {dimension_numbers = #tpu.dot_dimension_numbers<[2], [1], [1], [2], [0, 0, 0, 1, 1, 2], [0], [0]>} : vector<2x8x8xf32>, vector<2x8x8xf32>, vector<2x8x8xf32> -> vector<2x8x8xf32>
    "tpu.trace_stop"() : () -> ()
    %84 = vector.shape_cast %83 : vector<2x8x8xf32> to vector<16x8xf32>
    %85 = vector.extract_strided_slice %6 {offsets = [16, 0], sizes = [8, 32], strides = [1, 1]} : vector<32x32xf32> to vector<8x32xf32>
    %cst_24 = arith.constant dense<0.000000e+00> : vector<16x32xf32>
    %86 = tpu.matmul %84, %85, %cst_24 {dimension_numbers = #tpu.dot_dimension_numbers<[1], [0], [0], [1], [0, 0, 1, 1], [], []>} : vector<16x8xf32>, vector<8x32xf32>, vector<16x32xf32> -> vector<16x32xf32>
    %87 = arith.addf %65, %86 : vector<16x32xf32>
    %88 = vector.extract_strided_slice %20 {offsets = [0, 24], sizes = [16, 8], strides = [1, 1]} : vector<16x96xf32> to vector<16x8xf32>
    %89 = vector.shape_cast %88 : vector<16x8xf32> to vector<2x8x8xf32>
    %90 = vector.extract_strided_slice %20 {offsets = [0, 56], sizes = [16, 8], strides = [1, 1]} : vector<16x96xf32> to vector<16x8xf32>
    %91 = vector.shape_cast %90 : vector<16x8xf32> to vector<2x8x8xf32>
    %92 = vector.extract_strided_slice %20 {offsets = [0, 88], sizes = [16, 8], strides = [1, 1]} : vector<16x96xf32> to vector<16x8xf32>
    %93 = vector.shape_cast %92 : vector<16x8xf32> to vector<2x8x8xf32>
    "tpu.trace_start"() <{level = 10 : i32, message = "bsd,btd->bst"}> : () -> ()
    %cst_25 = arith.constant dense<0.000000e+00> : vector<2x8x8xf32>
    %94 = tpu.matmul %89, %91, %cst_25 {dimension_numbers = #tpu.dot_dimension_numbers<[2], [2], [1], [1], [0, 0, 0, 1, 1, 1], [0], [0]>} : vector<2x8x8xf32>, vector<2x8x8xf32>, vector<2x8x8xf32> -> vector<2x8x8xf32>
    "tpu.trace_stop"() : () -> ()
    %cst_26 = arith.constant dense<0xFF800000> : vector<2x8xf32>
    %95 = vector.multi_reduction <maximumf>, %94, %cst_26 [2] : vector<2x8x8xf32> to vector<2x8xf32>
    %96 = vector.shape_cast %95 : vector<2x8xf32> to vector<2x8x1xf32>
    %97 = vector.broadcast %96 : vector<2x8x1xf32> to vector<2x8x8xf32>
    %98 = arith.subf %94, %97 : vector<2x8x8xf32>
    %99 = math.exp %98 : vector<2x8x8xf32>
    %cst_27 = arith.constant dense<0.000000e+00> : vector<2x8xf32>
    %100 = vector.multi_reduction <add>, %99, %cst_27 [2] : vector<2x8x8xf32> to vector<2x8xf32>
    %101 = vector.shape_cast %100 : vector<2x8xf32> to vector<2x8x1xf32>
    %102 = tpu.reciprocal %101 {approx = true} : vector<2x8x1xf32> -> vector<2x8x1xf32>
    %103 = vector.broadcast %102 : vector<2x8x1xf32> to vector<2x8x8xf32>
    %104 = arith.mulf %99, %103 : vector<2x8x8xf32>
    "tpu.trace_start"() <{level = 10 : i32, message = "bst,btd->bsd"}> : () -> ()
    %cst_28 = arith.constant dense<0.000000e+00> : vector<2x8x8xf32>
    %105 = tpu.matmul %104, %93, %cst_28 {dimension_numbers = #tpu.dot_dimension_numbers<[2], [1], [1], [2], [0, 0, 0, 1, 1, 2], [0], [0]>} : vector<2x8x8xf32>, vector<2x8x8xf32>, vector<2x8x8xf32> -> vector<2x8x8xf32>
    "tpu.trace_stop"() : () -> ()
    %106 = vector.shape_cast %105 : vector<2x8x8xf32> to vector<16x8xf32>
    %107 = vector.extract_strided_slice %6 {offsets = [24, 0], sizes = [8, 32], strides = [1, 1]} : vector<32x32xf32> to vector<8x32xf32>
    %cst_29 = arith.constant dense<0.000000e+00> : vector<16x32xf32>
    %108 = tpu.matmul %106, %107, %cst_29 {dimension_numbers = #tpu.dot_dimension_numbers<[1], [0], [0], [1], [0, 0, 1, 1], [], []>} : vector<16x8xf32>, vector<8x32xf32>, vector<16x32xf32> -> vector<16x32xf32>
    %109 = arith.addf %87, %108 : vector<16x32xf32>
    %110 = arith.addf %4, %109 : vector<16x32xf32>
    %cst_30 = arith.constant dense<0.000000e+00> : vector<16xf32>
    %111 = vector.multi_reduction <add>, %110, %cst_30 [1] : vector<16x32xf32> to vector<16xf32>
    %112 = vector.shape_cast %111 : vector<16xf32> to vector<16x1xf32>
    %cst_31 = arith.constant 3.200000e+01 : f32
    %113 = vector.broadcast %cst_31 : f32 to vector<16x1xf32>
    %114 = arith.divf %112, %113 : vector<16x1xf32>
    %115 = vector.broadcast %114 : vector<16x1xf32> to vector<16x32xf32>
    %116 = arith.subf %110, %115 : vector<16x32xf32>
    %117 = arith.mulf %116, %116 : vector<16x32xf32>
    %cst_32 = arith.constant dense<0.000000e+00> : vector<16xf32>
    %118 = vector.multi_reduction <add>, %117, %cst_32 [1] : vector<16x32xf32> to vector<16xf32>
    %119 = vector.shape_cast %118 : vector<16xf32> to vector<16x1xf32>
    %cst_33 = arith.constant 3.200000e+01 : f32
    %120 = vector.broadcast %cst_33 : f32 to vector<16x1xf32>
    %121 = arith.divf %119, %120 : vector<16x1xf32>
    %122 = vector.broadcast %114 : vector<16x1xf32> to vector<16x32xf32>
    %123 = arith.subf %110, %122 : vector<16x32xf32>
    %cst_34 = arith.constant 9.99999974E-6 : f32
    %124 = vector.broadcast %cst_34 : f32 to vector<16x1xf32>
    %125 = arith.addf %121, %124 : vector<16x1xf32>
    %126 = math.rsqrt %125 : vector<16x1xf32>
    %127 = vector.broadcast %126 : vector<16x1xf32> to vector<16x32xf32>
    %128 = arith.mulf %123, %127 : vector<16x32xf32>
    %129 = vector.broadcast %12 : vector<1x32xf32> to vector<16x32xf32>
    %130 = arith.mulf %128, %129 : vector<16x32xf32>
    %131 = vector.broadcast %13 : vector<1x32xf32> to vector<16x32xf32>
    %132 = arith.addf %130, %131 : vector<16x32xf32>
    %cst_35 = arith.constant dense<0.000000e+00> : vector<16x64xf32>
    %133 = tpu.matmul %132, %7, %cst_35 {dimension_numbers = #tpu.dot_dimension_numbers<[1], [0], [0], [1], [0, 0, 1, 1], [], []>} : vector<16x32xf32>, vector<32x64xf32>, vector<16x64xf32> -> vector<16x64xf32>
    %134 = vector.broadcast %16 : vector<1x64xf32> to vector<16x64xf32>
    %135 = arith.addf %133, %134 : vector<16x64xf32>
    %cst_36 = arith.constant 0.000000e+00 : f32
    %136 = vector.broadcast %cst_36 : f32 to vector<16x64xf32>
    %137 = arith.maximumf %135, %136 : vector<16x64xf32>
    %cst_37 = arith.constant dense<0.000000e+00> : vector<16x32xf32>
    %138 = tpu.matmul %137, %8, %cst_37 {dimension_numbers = #tpu.dot_dimension_numbers<[1], [0], [0], [1], [0, 0, 1, 1], [], []>} : vector<16x64xf32>, vector<64x32xf32>, vector<16x32xf32> -> vector<16x32xf32>
    %139 = vector.broadcast %17 : vector<1x32xf32> to vector<16x32xf32>
    %140 = arith.addf %138, %139 : vector<16x32xf32>
    %141 = arith.addf %132, %140 : vector<16x32xf32>
    %cst_38 = arith.constant dense<0.000000e+00> : vector<16xf32>
    %142 = vector.multi_reduction <add>, %141, %cst_38 [1] : vector<16x32xf32> to vector<16xf32>
    %143 = vector.shape_cast %142 : vector<16xf32> to vector<16x1xf32>
    %cst_39 = arith.constant 3.200000e+01 : f32
    %144 = vector.broadcast %cst_39 : f32 to vector<16x1xf32>
    %145 = arith.divf %143, %144 : vector<16x1xf32>
    %146 = vector.broadcast %145 : vector<16x1xf32> to vector<16x32xf32>
    %147 = arith.subf %141, %146 : vector<16x32xf32>
    %148 = arith.mulf %147, %147 : vector<16x32xf32>
    %cst_40 = arith.constant dense<0.000000e+00> : vector<16xf32>
    %149 = vector.multi_reduction <add>, %148, %cst_40 [1] : vector<16x32xf32> to vector<16xf32>
    %150 = vector.shape_cast %149 : vector<16xf32> to vector<16x1xf32>
    %cst_41 = arith.constant 3.200000e+01 : f32
    %151 = vector.broadcast %cst_41 : f32 to vector<16x1xf32>
    %152 = arith.divf %150, %151 : vector<16x1xf32>
    %153 = vector.broadcast %145 : vector<16x1xf32> to vector<16x32xf32>
    %154 = arith.subf %141, %153 : vector<16x32xf32>
    %cst_42 = arith.constant 9.99999974E-6 : f32
    %155 = vector.broadcast %cst_42 : f32 to vector<16x1xf32>
    %156 = arith.addf %152, %155 : vector<16x1xf32>
    %157 = math.rsqrt %156 : vector<16x1xf32>
    %158 = vector.broadcast %157 : vector<16x1xf32> to vector<16x32xf32>
    %159 = arith.mulf %154, %158 : vector<16x32xf32>
    %160 = vector.broadcast %14 : vector<1x32xf32> to vector<16x32xf32>
    %161 = arith.mulf %159, %160 : vector<16x32xf32>
    %162 = vector.broadcast %15 : vector<1x32xf32> to vector<16x32xf32>
    %163 = arith.addf %161, %162 : vector<16x32xf32>
    %c256 = arith.constant 256 : index
    %c0_43 = arith.constant 0 : index
    %164 = vector.load %arg1[%c256, %c0_43] : memref<392x128xf32, #tpu.memory_space<vmem>>, vector<32x96xf32>
    %c256_44 = arith.constant 256 : index
    %c96_45 = arith.constant 96 : index
    %165 = vector.load %arg1[%c256_44, %c96_45] : memref<392x128xf32, #tpu.memory_space<vmem>>, vector<32x32xf32>
    %c288 = arith.constant 288 : index
    %c0_46 = arith.constant 0 : index
    %166 = vector.load %arg1[%c288, %c0_46] : memref<392x128xf32, #tpu.memory_space<vmem>>, vector<32x64xf32>
    %c320 = arith.constant 320 : index
    %c0_47 = arith.constant 0 : index
    %167 = vector.load %arg1[%c320, %c0_47] : memref<392x128xf32, #tpu.memory_space<vmem>>, vector<64x32xf32>
    %c384 = arith.constant 384 : index
    %c0_48 = arith.constant 0 : index
    %168 = vector.load %arg1[%c384, %c0_48] : memref<392x128xf32, #tpu.memory_space<vmem>>, vector<8x128xf32>
    %169 = vector.extract_strided_slice %168 {offsets = [0, 0], sizes = [1, 96], strides = [1, 1]} : vector<8x128xf32> to vector<1x96xf32>
    %170 = vector.extract_strided_slice %168 {offsets = [1, 0], sizes = [1, 32], strides = [1, 1]} : vector<8x128xf32> to vector<1x32xf32>
    %171 = vector.extract_strided_slice %168 {offsets = [2, 0], sizes = [1, 32], strides = [1, 1]} : vector<8x128xf32> to vector<1x32xf32>
    %172 = vector.extract_strided_slice %168 {offsets = [3, 0], sizes = [1, 32], strides = [1, 1]} : vector<8x128xf32> to vector<1x32xf32>
    %173 = vector.extract_strided_slice %168 {offsets = [4, 0], sizes = [1, 32], strides = [1, 1]} : vector<8x128xf32> to vector<1x32xf32>
    %174 = vector.extract_strided_slice %168 {offsets = [5, 0], sizes = [1, 32], strides = [1, 1]} : vector<8x128xf32> to vector<1x32xf32>
    %175 = vector.extract_strided_slice %168 {offsets = [6, 0], sizes = [1, 64], strides = [1, 1]} : vector<8x128xf32> to vector<1x64xf32>
    %176 = vector.extract_strided_slice %168 {offsets = [7, 0], sizes = [1, 32], strides = [1, 1]} : vector<8x128xf32> to vector<1x32xf32>
    %cst_49 = arith.constant dense<0.000000e+00> : vector<16x96xf32>
    %177 = tpu.matmul %163, %164, %cst_49 {dimension_numbers = #tpu.dot_dimension_numbers<[1], [0], [0], [1], [0, 0, 1, 1], [], []>} : vector<16x32xf32>, vector<32x96xf32>, vector<16x96xf32> -> vector<16x96xf32>
    %178 = vector.broadcast %169 : vector<1x96xf32> to vector<16x96xf32>
    %179 = arith.addf %177, %178 : vector<16x96xf32>
    %180 = vector.extract_strided_slice %179 {offsets = [0, 0], sizes = [16, 8], strides = [1, 1]} : vector<16x96xf32> to vector<16x8xf32>
    %181 = vector.shape_cast %180 : vector<16x8xf32> to vector<2x8x8xf32>
    %182 = vector.extract_strided_slice %179 {offsets = [0, 32], sizes = [16, 8], strides = [1, 1]} : vector<16x96xf32> to vector<16x8xf32>
    %183 = vector.shape_cast %182 : vector<16x8xf32> to vector<2x8x8xf32>
    %184 = vector.extract_strided_slice %179 {offsets = [0, 64], sizes = [16, 8], strides = [1, 1]} : vector<16x96xf32> to vector<16x8xf32>
    %185 = vector.shape_cast %184 : vector<16x8xf32> to vector<2x8x8xf32>
    "tpu.trace_start"() <{level = 10 : i32, message = "bsd,btd->bst"}> : () -> ()
    %cst_50 = arith.constant dense<0.000000e+00> : vector<2x8x8xf32>
    %186 = tpu.matmul %181, %183, %cst_50 {dimension_numbers = #tpu.dot_dimension_numbers<[2], [2], [1], [1], [0, 0, 0, 1, 1, 1], [0], [0]>} : vector<2x8x8xf32>, vector<2x8x8xf32>, vector<2x8x8xf32> -> vector<2x8x8xf32>
    "tpu.trace_stop"() : () -> ()
    %cst_51 = arith.constant dense<0xFF800000> : vector<2x8xf32>
    %187 = vector.multi_reduction <maximumf>, %186, %cst_51 [2] : vector<2x8x8xf32> to vector<2x8xf32>
    %188 = vector.shape_cast %187 : vector<2x8xf32> to vector<2x8x1xf32>
    %189 = vector.broadcast %188 : vector<2x8x1xf32> to vector<2x8x8xf32>
    %190 = arith.subf %186, %189 : vector<2x8x8xf32>
    %191 = math.exp %190 : vector<2x8x8xf32>
    %cst_52 = arith.constant dense<0.000000e+00> : vector<2x8xf32>
    %192 = vector.multi_reduction <add>, %191, %cst_52 [2] : vector<2x8x8xf32> to vector<2x8xf32>
    %193 = vector.shape_cast %192 : vector<2x8xf32> to vector<2x8x1xf32>
    %194 = tpu.reciprocal %193 {approx = true} : vector<2x8x1xf32> -> vector<2x8x1xf32>
    %195 = vector.broadcast %194 : vector<2x8x1xf32> to vector<2x8x8xf32>
    %196 = arith.mulf %191, %195 : vector<2x8x8xf32>
    "tpu.trace_start"() <{level = 10 : i32, message = "bst,btd->bsd"}> : () -> ()
    %cst_53 = arith.constant dense<0.000000e+00> : vector<2x8x8xf32>
    %197 = tpu.matmul %196, %185, %cst_53 {dimension_numbers = #tpu.dot_dimension_numbers<[2], [1], [1], [2], [0, 0, 0, 1, 1, 2], [0], [0]>} : vector<2x8x8xf32>, vector<2x8x8xf32>, vector<2x8x8xf32> -> vector<2x8x8xf32>
    "tpu.trace_stop"() : () -> ()
    %198 = vector.shape_cast %197 : vector<2x8x8xf32> to vector<16x8xf32>
    %199 = vector.extract_strided_slice %165 {offsets = [0, 0], sizes = [8, 32], strides = [1, 1]} : vector<32x32xf32> to vector<8x32xf32>
    %cst_54 = arith.constant dense<0.000000e+00> : vector<16x32xf32>
    %200 = tpu.matmul %198, %199, %cst_54 {dimension_numbers = #tpu.dot_dimension_numbers<[1], [0], [0], [1], [0, 0, 1, 1], [], []>} : vector<16x8xf32>, vector<8x32xf32>, vector<16x32xf32> -> vector<16x32xf32>
    %201 = vector.broadcast %170 : vector<1x32xf32> to vector<16x32xf32>
    %202 = arith.addf %201, %200 : vector<16x32xf32>
    %203 = vector.extract_strided_slice %179 {offsets = [0, 8], sizes = [16, 8], strides = [1, 1]} : vector<16x96xf32> to vector<16x8xf32>
    %204 = vector.shape_cast %203 : vector<16x8xf32> to vector<2x8x8xf32>
    %205 = vector.extract_strided_slice %179 {offsets = [0, 40], sizes = [16, 8], strides = [1, 1]} : vector<16x96xf32> to vector<16x8xf32>
    %206 = vector.shape_cast %205 : vector<16x8xf32> to vector<2x8x8xf32>
    %207 = vector.extract_strided_slice %179 {offsets = [0, 72], sizes = [16, 8], strides = [1, 1]} : vector<16x96xf32> to vector<16x8xf32>
    %208 = vector.shape_cast %207 : vector<16x8xf32> to vector<2x8x8xf32>
    "tpu.trace_start"() <{level = 10 : i32, message = "bsd,btd->bst"}> : () -> ()
    %cst_55 = arith.constant dense<0.000000e+00> : vector<2x8x8xf32>
    %209 = tpu.matmul %204, %206, %cst_55 {dimension_numbers = #tpu.dot_dimension_numbers<[2], [2], [1], [1], [0, 0, 0, 1, 1, 1], [0], [0]>} : vector<2x8x8xf32>, vector<2x8x8xf32>, vector<2x8x8xf32> -> vector<2x8x8xf32>
    "tpu.trace_stop"() : () -> ()
    %cst_56 = arith.constant dense<0xFF800000> : vector<2x8xf32>
    %210 = vector.multi_reduction <maximumf>, %209, %cst_56 [2] : vector<2x8x8xf32> to vector<2x8xf32>
    %211 = vector.shape_cast %210 : vector<2x8xf32> to vector<2x8x1xf32>
    %212 = vector.broadcast %211 : vector<2x8x1xf32> to vector<2x8x8xf32>
    %213 = arith.subf %209, %212 : vector<2x8x8xf32>
    %214 = math.exp %213 : vector<2x8x8xf32>
    %cst_57 = arith.constant dense<0.000000e+00> : vector<2x8xf32>
    %215 = vector.multi_reduction <add>, %214, %cst_57 [2] : vector<2x8x8xf32> to vector<2x8xf32>
    %216 = vector.shape_cast %215 : vector<2x8xf32> to vector<2x8x1xf32>
    %217 = tpu.reciprocal %216 {approx = true} : vector<2x8x1xf32> -> vector<2x8x1xf32>
    %218 = vector.broadcast %217 : vector<2x8x1xf32> to vector<2x8x8xf32>
    %219 = arith.mulf %214, %218 : vector<2x8x8xf32>
    "tpu.trace_start"() <{level = 10 : i32, message = "bst,btd->bsd"}> : () -> ()
    %cst_58 = arith.constant dense<0.000000e+00> : vector<2x8x8xf32>
    %220 = tpu.matmul %219, %208, %cst_58 {dimension_numbers = #tpu.dot_dimension_numbers<[2], [1], [1], [2], [0, 0, 0, 1, 1, 2], [0], [0]>} : vector<2x8x8xf32>, vector<2x8x8xf32>, vector<2x8x8xf32> -> vector<2x8x8xf32>
    "tpu.trace_stop"() : () -> ()
    %221 = vector.shape_cast %220 : vector<2x8x8xf32> to vector<16x8xf32>
    %222 = vector.extract_strided_slice %165 {offsets = [8, 0], sizes = [8, 32], strides = [1, 1]} : vector<32x32xf32> to vector<8x32xf32>
    %cst_59 = arith.constant dense<0.000000e+00> : vector<16x32xf32>
    %223 = tpu.matmul %221, %222, %cst_59 {dimension_numbers = #tpu.dot_dimension_numbers<[1], [0], [0], [1], [0, 0, 1, 1], [], []>} : vector<16x8xf32>, vector<8x32xf32>, vector<16x32xf32> -> vector<16x32xf32>
    %224 = arith.addf %202, %223 : vector<16x32xf32>
    %225 = vector.extract_strided_slice %179 {offsets = [0, 16], sizes = [16, 8], strides = [1, 1]} : vector<16x96xf32> to vector<16x8xf32>
    %226 = vector.shape_cast %225 : vector<16x8xf32> to vector<2x8x8xf32>
    %227 = vector.extract_strided_slice %179 {offsets = [0, 48], sizes = [16, 8], strides = [1, 1]} : vector<16x96xf32> to vector<16x8xf32>
    %228 = vector.shape_cast %227 : vector<16x8xf32> to vector<2x8x8xf32>
    %229 = vector.extract_strided_slice %179 {offsets = [0, 80], sizes = [16, 8], strides = [1, 1]} : vector<16x96xf32> to vector<16x8xf32>
    %230 = vector.shape_cast %229 : vector<16x8xf32> to vector<2x8x8xf32>
    "tpu.trace_start"() <{level = 10 : i32, message = "bsd,btd->bst"}> : () -> ()
    %cst_60 = arith.constant dense<0.000000e+00> : vector<2x8x8xf32>
    %231 = tpu.matmul %226, %228, %cst_60 {dimension_numbers = #tpu.dot_dimension_numbers<[2], [2], [1], [1], [0, 0, 0, 1, 1, 1], [0], [0]>} : vector<2x8x8xf32>, vector<2x8x8xf32>, vector<2x8x8xf32> -> vector<2x8x8xf32>
    "tpu.trace_stop"() : () -> ()
    %cst_61 = arith.constant dense<0xFF800000> : vector<2x8xf32>
    %232 = vector.multi_reduction <maximumf>, %231, %cst_61 [2] : vector<2x8x8xf32> to vector<2x8xf32>
    %233 = vector.shape_cast %232 : vector<2x8xf32> to vector<2x8x1xf32>
    %234 = vector.broadcast %233 : vector<2x8x1xf32> to vector<2x8x8xf32>
    %235 = arith.subf %231, %234 : vector<2x8x8xf32>
    %236 = math.exp %235 : vector<2x8x8xf32>
    %cst_62 = arith.constant dense<0.000000e+00> : vector<2x8xf32>
    %237 = vector.multi_reduction <add>, %236, %cst_62 [2] : vector<2x8x8xf32> to vector<2x8xf32>
    %238 = vector.shape_cast %237 : vector<2x8xf32> to vector<2x8x1xf32>
    %239 = tpu.reciprocal %238 {approx = true} : vector<2x8x1xf32> -> vector<2x8x1xf32>
    %240 = vector.broadcast %239 : vector<2x8x1xf32> to vector<2x8x8xf32>
    %241 = arith.mulf %236, %240 : vector<2x8x8xf32>
    "tpu.trace_start"() <{level = 10 : i32, message = "bst,btd->bsd"}> : () -> ()
    %cst_63 = arith.constant dense<0.000000e+00> : vector<2x8x8xf32>
    %242 = tpu.matmul %241, %230, %cst_63 {dimension_numbers = #tpu.dot_dimension_numbers<[2], [1], [1], [2], [0, 0, 0, 1, 1, 2], [0], [0]>} : vector<2x8x8xf32>, vector<2x8x8xf32>, vector<2x8x8xf32> -> vector<2x8x8xf32>
    "tpu.trace_stop"() : () -> ()
    %243 = vector.shape_cast %242 : vector<2x8x8xf32> to vector<16x8xf32>
    %244 = vector.extract_strided_slice %165 {offsets = [16, 0], sizes = [8, 32], strides = [1, 1]} : vector<32x32xf32> to vector<8x32xf32>
    %cst_64 = arith.constant dense<0.000000e+00> : vector<16x32xf32>
    %245 = tpu.matmul %243, %244, %cst_64 {dimension_numbers = #tpu.dot_dimension_numbers<[1], [0], [0], [1], [0, 0, 1, 1], [], []>} : vector<16x8xf32>, vector<8x32xf32>, vector<16x32xf32> -> vector<16x32xf32>
    %246 = arith.addf %224, %245 : vector<16x32xf32>
    %247 = vector.extract_strided_slice %179 {offsets = [0, 24], sizes = [16, 8], strides = [1, 1]} : vector<16x96xf32> to vector<16x8xf32>
    %248 = vector.shape_cast %247 : vector<16x8xf32> to vector<2x8x8xf32>
    %249 = vector.extract_strided_slice %179 {offsets = [0, 56], sizes = [16, 8], strides = [1, 1]} : vector<16x96xf32> to vector<16x8xf32>
    %250 = vector.shape_cast %249 : vector<16x8xf32> to vector<2x8x8xf32>
    %251 = vector.extract_strided_slice %179 {offsets = [0, 88], sizes = [16, 8], strides = [1, 1]} : vector<16x96xf32> to vector<16x8xf32>
    %252 = vector.shape_cast %251 : vector<16x8xf32> to vector<2x8x8xf32>
    "tpu.trace_start"() <{level = 10 : i32, message = "bsd,btd->bst"}> : () -> ()
    %cst_65 = arith.constant dense<0.000000e+00> : vector<2x8x8xf32>
    %253 = tpu.matmul %248, %250, %cst_65 {dimension_numbers = #tpu.dot_dimension_numbers<[2], [2], [1], [1], [0, 0, 0, 1, 1, 1], [0], [0]>} : vector<2x8x8xf32>, vector<2x8x8xf32>, vector<2x8x8xf32> -> vector<2x8x8xf32>
    "tpu.trace_stop"() : () -> ()
    %cst_66 = arith.constant dense<0xFF800000> : vector<2x8xf32>
    %254 = vector.multi_reduction <maximumf>, %253, %cst_66 [2] : vector<2x8x8xf32> to vector<2x8xf32>
    %255 = vector.shape_cast %254 : vector<2x8xf32> to vector<2x8x1xf32>
    %256 = vector.broadcast %255 : vector<2x8x1xf32> to vector<2x8x8xf32>
    %257 = arith.subf %253, %256 : vector<2x8x8xf32>
    %258 = math.exp %257 : vector<2x8x8xf32>
    %cst_67 = arith.constant dense<0.000000e+00> : vector<2x8xf32>
    %259 = vector.multi_reduction <add>, %258, %cst_67 [2] : vector<2x8x8xf32> to vector<2x8xf32>
    %260 = vector.shape_cast %259 : vector<2x8xf32> to vector<2x8x1xf32>
    %261 = tpu.reciprocal %260 {approx = true} : vector<2x8x1xf32> -> vector<2x8x1xf32>
    %262 = vector.broadcast %261 : vector<2x8x1xf32> to vector<2x8x8xf32>
    %263 = arith.mulf %258, %262 : vector<2x8x8xf32>
    "tpu.trace_start"() <{level = 10 : i32, message = "bst,btd->bsd"}> : () -> ()
    %cst_68 = arith.constant dense<0.000000e+00> : vector<2x8x8xf32>
    %264 = tpu.matmul %263, %252, %cst_68 {dimension_numbers = #tpu.dot_dimension_numbers<[2], [1], [1], [2], [0, 0, 0, 1, 1, 2], [0], [0]>} : vector<2x8x8xf32>, vector<2x8x8xf32>, vector<2x8x8xf32> -> vector<2x8x8xf32>
    "tpu.trace_stop"() : () -> ()
    %265 = vector.shape_cast %264 : vector<2x8x8xf32> to vector<16x8xf32>
    %266 = vector.extract_strided_slice %165 {offsets = [24, 0], sizes = [8, 32], strides = [1, 1]} : vector<32x32xf32> to vector<8x32xf32>
    %cst_69 = arith.constant dense<0.000000e+00> : vector<16x32xf32>
    %267 = tpu.matmul %265, %266, %cst_69 {dimension_numbers = #tpu.dot_dimension_numbers<[1], [0], [0], [1], [0, 0, 1, 1], [], []>} : vector<16x8xf32>, vector<8x32xf32>, vector<16x32xf32> -> vector<16x32xf32>
    %268 = arith.addf %246, %267 : vector<16x32xf32>
    %269 = arith.addf %163, %268 : vector<16x32xf32>
    %cst_70 = arith.constant dense<0.000000e+00> : vector<16xf32>
    %270 = vector.multi_reduction <add>, %269, %cst_70 [1] : vector<16x32xf32> to vector<16xf32>
    %271 = vector.shape_cast %270 : vector<16xf32> to vector<16x1xf32>
    %cst_71 = arith.constant 3.200000e+01 : f32
    %272 = vector.broadcast %cst_71 : f32 to vector<16x1xf32>
    %273 = arith.divf %271, %272 : vector<16x1xf32>
    %274 = vector.broadcast %273 : vector<16x1xf32> to vector<16x32xf32>
    %275 = arith.subf %269, %274 : vector<16x32xf32>
    %276 = arith.mulf %275, %275 : vector<16x32xf32>
    %cst_72 = arith.constant dense<0.000000e+00> : vector<16xf32>
    %277 = vector.multi_reduction <add>, %276, %cst_72 [1] : vector<16x32xf32> to vector<16xf32>
    %278 = vector.shape_cast %277 : vector<16xf32> to vector<16x1xf32>
    %cst_73 = arith.constant 3.200000e+01 : f32
    %279 = vector.broadcast %cst_73 : f32 to vector<16x1xf32>
    %280 = arith.divf %278, %279 : vector<16x1xf32>
    %281 = vector.broadcast %273 : vector<16x1xf32> to vector<16x32xf32>
    %282 = arith.subf %269, %281 : vector<16x32xf32>
    %cst_74 = arith.constant 9.99999974E-6 : f32
    %283 = vector.broadcast %cst_74 : f32 to vector<16x1xf32>
    %284 = arith.addf %280, %283 : vector<16x1xf32>
    %285 = math.rsqrt %284 : vector<16x1xf32>
    %286 = vector.broadcast %285 : vector<16x1xf32> to vector<16x32xf32>
    %287 = arith.mulf %282, %286 : vector<16x32xf32>
    %288 = vector.broadcast %171 : vector<1x32xf32> to vector<16x32xf32>
    %289 = arith.mulf %287, %288 : vector<16x32xf32>
    %290 = vector.broadcast %172 : vector<1x32xf32> to vector<16x32xf32>
    %291 = arith.addf %289, %290 : vector<16x32xf32>
    %cst_75 = arith.constant dense<0.000000e+00> : vector<16x64xf32>
    %292 = tpu.matmul %291, %166, %cst_75 {dimension_numbers = #tpu.dot_dimension_numbers<[1], [0], [0], [1], [0, 0, 1, 1], [], []>} : vector<16x32xf32>, vector<32x64xf32>, vector<16x64xf32> -> vector<16x64xf32>
    %293 = vector.broadcast %175 : vector<1x64xf32> to vector<16x64xf32>
    %294 = arith.addf %292, %293 : vector<16x64xf32>
    %cst_76 = arith.constant 0.000000e+00 : f32
    %295 = vector.broadcast %cst_76 : f32 to vector<16x64xf32>
    %296 = arith.maximumf %294, %295 : vector<16x64xf32>
    %cst_77 = arith.constant dense<0.000000e+00> : vector<16x32xf32>
    %297 = tpu.matmul %296, %167, %cst_77 {dimension_numbers = #tpu.dot_dimension_numbers<[1], [0], [0], [1], [0, 0, 1, 1], [], []>} : vector<16x64xf32>, vector<64x32xf32>, vector<16x32xf32> -> vector<16x32xf32>
    %298 = vector.broadcast %176 : vector<1x32xf32> to vector<16x32xf32>
    %299 = arith.addf %297, %298 : vector<16x32xf32>
    %300 = arith.addf %291, %299 : vector<16x32xf32>
    %cst_78 = arith.constant dense<0.000000e+00> : vector<16xf32>
    %301 = vector.multi_reduction <add>, %300, %cst_78 [1] : vector<16x32xf32> to vector<16xf32>
    %302 = vector.shape_cast %301 : vector<16xf32> to vector<16x1xf32>
    %cst_79 = arith.constant 3.200000e+01 : f32
    %303 = vector.broadcast %cst_79 : f32 to vector<16x1xf32>
    %304 = arith.divf %302, %303 : vector<16x1xf32>
    %305 = vector.broadcast %304 : vector<16x1xf32> to vector<16x32xf32>
    %306 = arith.subf %300, %305 : vector<16x32xf32>
    %307 = arith.mulf %306, %306 : vector<16x32xf32>
    %cst_80 = arith.constant dense<0.000000e+00> : vector<16xf32>
    %308 = vector.multi_reduction <add>, %307, %cst_80 [1] : vector<16x32xf32> to vector<16xf32>
    %309 = vector.shape_cast %308 : vector<16xf32> to vector<16x1xf32>
    %cst_81 = arith.constant 3.200000e+01 : f32
    %310 = vector.broadcast %cst_81 : f32 to vector<16x1xf32>
    %311 = arith.divf %309, %310 : vector<16x1xf32>
    %312 = vector.broadcast %304 : vector<16x1xf32> to vector<16x32xf32>
    %313 = arith.subf %300, %312 : vector<16x32xf32>
    %cst_82 = arith.constant 9.99999974E-6 : f32
    %314 = vector.broadcast %cst_82 : f32 to vector<16x1xf32>
    %315 = arith.addf %311, %314 : vector<16x1xf32>
    %316 = math.rsqrt %315 : vector<16x1xf32>
    %317 = vector.broadcast %316 : vector<16x1xf32> to vector<16x32xf32>
    %318 = arith.mulf %313, %317 : vector<16x32xf32>
    %319 = vector.broadcast %173 : vector<1x32xf32> to vector<16x32xf32>
    %320 = arith.mulf %318, %319 : vector<16x32xf32>
    %321 = vector.broadcast %174 : vector<1x32xf32> to vector<16x32xf32>
    %322 = arith.addf %320, %321 : vector<16x32xf32>
    %c0_83 = arith.constant 0 : index
    %c0_84 = arith.constant 0 : index
    %323 = vector.load %arg2[%c0_83, %c0_84] : memref<24x32xf32, #tpu.memory_space<vmem>>, vector<16x32xf32>
    tpu.vector_store %arg2[%c0_83, %c0_84], %322 {strides = array<i32>} : memref<24x32xf32, #tpu.memory_space<vmem>>, vector<16x32xf32>,
    %324 = vector.extract_strided_slice %322 {offsets = [0, 0], sizes = [8, 32], strides = [1, 1]} : vector<16x32xf32> to vector<8x32xf32>
    %325 = vector.extract_strided_slice %322 {offsets = [8, 0], sizes = [8, 32], strides = [1, 1]} : vector<16x32xf32> to vector<8x32xf32>
    %326 = arith.addf %324, %325 : vector<8x32xf32>
    %cst_85 = arith.constant 5.000000e-01 : f32
    %327 = vector.broadcast %cst_85 : f32 to vector<8x32xf32>
    %328 = arith.mulf %326, %327 : vector<8x32xf32>
    %c80 = arith.constant 80 : index
    %c0_86 = arith.constant 0 : index
    %329 = vector.load %arg1[%c80, %c0_86] : memref<392x128xf32, #tpu.memory_space<vmem>>, vector<32x32xf32>
    %c112 = arith.constant 112 : index
    %c0_87 = arith.constant 0 : index
    %330 = vector.load %arg1[%c112, %c0_87] : memref<392x128xf32, #tpu.memory_space<vmem>>, vector<1x32xf32>
    %cst_88 = arith.constant dense<0.000000e+00> : vector<8x32xf32>
    %331 = tpu.matmul %328, %329, %cst_88 {dimension_numbers = #tpu.dot_dimension_numbers<[1], [0], [0], [1], [0, 0, 1, 1], [], []>} : vector<8x32xf32>, vector<32x32xf32>, vector<8x32xf32> -> vector<8x32xf32>
    %332 = vector.broadcast %330 : vector<1x32xf32> to vector<8x32xf32>
    %333 = arith.addf %331, %332 : vector<8x32xf32>
    %c16 = arith.constant 16 : index
    %c0_89 = arith.constant 0 : index
    %334 = vector.load %arg2[%c16, %c0_89] : memref<24x32xf32, #tpu.memory_space<vmem>>, vector<8x32xf32>
    tpu.vector_store %arg2[%c16, %c0_89], %333 {strides = array<i32>} : memref<24x32xf32, #tpu.memory_space<vmem>>, vector<8x32xf32>,
    return
  }
}

</mosaic_0001>

<llo_original>
// kernel: eq.8
$region0: #{eq.8}
  %s0 = inlined_call_operand.vmem [shape: s32[2,8], index: 0, kind: input, shape index: {}]
  %s1 = inlined_call_operand.vmem [shape: s32[16], index: 1, kind: output, shape index: {}]
  $region1: #{eq.8} parent=0
    #allocation0 [shape = 'u8[4096]{0}', space=vmem, size = 0x1000, scoped, tag = 'scoped mem for output reshape']
    #allocation1 [shape = 'u8[4096]{0}', space=vmem, size = 0x1000, scoped, tag = 'scoped mem for input reshape']
    %s3 = sshllo.u32 0, 2
    %v4 = vld [vmem:[%s0] sm:%s3]
    %5 = vst [vmem:[#allocation1] sm:%s3] %v4
    %v6 = vld [vmem:[#allocation1] sm:$0x1]
    %vm7 = vcmask 64512
    %8 = vst.msk [vmem:[#allocation0] sm:$0x1] %vm7, %v6
    %s9 = scalar_lea.vmem [#allocation1], 1
    %v10 = vld [vmem:[%s9] sm:$0x1]
    %11 = vrot.lane.b32.xlu0 %v10, 8
    %v12 = vpop.permute.xlu0 %11
    %vm13 = vcmask 130112
    %14 = vst.msk [vmem:[#allocation0] sm:$0x1] %vm13, %v12
    %s16 = sshllo.u32 0, 1
    %v18 = vld [vmem:[#allocation0] sm:%s16]
    %s19 = sshllo.u32 0, 1
    %20 = vst [vmem:[%s1] sm:%s19] %v18

// kernel: _lambda_.1
$region0: #{_lambda_.1}
  #allocation0 [shape = 'u32[]', space=smem, size = 0x4, offset = 0x4, fixed_abs, tag = 'smem constant byte address 0x4 - core index']
  #allocation1 [shape = 'u32[144,128]{1,0:T(1,128)}', space=vmem, size = 0x12000, scoped, tag = 'internal scratch']
  %s0 = inlined_call_operand.vmem [shape: f32[16,64], index: 0, kind: input, shape index: {}]
  %s1 = inlined_call_operand.hbm [shape: f32[392,128], index: 1, kind: input, shape index: {}]
  %s2 = inlined_call_operand.vmem [shape: f32[24,32], index: 2, kind: output, shape index: {}]
  %s3 = sld [smem:[#allocation0]]
  $region22: #{_lambda_.1} parent=0
    _
  %s5 = ssub.s32 1, %s3
  %s6 = scalar_select 0, %s5, %s3
  $region1: #{_lambda_.1} parent=0
    #allocation2 [shape = 'u8[200704]{0}', space=vmem, size = 0x31000, scoped, tag = 'input window, operand 1, single buffered']
    #allocation3 [shape = 's32[1]{0}', space=sflag, size = 0x4, scoped, tag = 'scoped memory for _lambda_.1']
    %7 = vsyncpa [#allocation3], 0
    // Predicated region
    $region2: #{_lambda_.1} parent=1 // pred_check
      _
    $region3: #{_lambda_.1} parent=1 // pred_check_branch
      %9 = sbr.rel (0) target = $region5
    $region4: #{_lambda_.1} parent=1 // pred_region
      _
    $region5: #{_lambda_.1} parent=1 // pred_fallthru
      _
    // Predicated region
    $region6: #{_lambda_.1} parent=1 // pred_check
      _
    $region7: #{_lambda_.1} parent=1 // pred_check_branch
      %11 = sbr.rel (0) target = $region9
    $region8: #{_lambda_.1} parent=1 // pred_region
      %s13 = ssub.s32 6272, 6272
      %14 = vsyncadd [#allocation3], %s13
      %s15 = sshll.u32 [#allocation2], 4
      %s16 = int_to_ptr.vmem [resolvable:$true] %s15
      %21 = dma.hbm_to_vmem [thread:$0]  %s1, 6272, %s16, [#allocation3], 128, 128, 8
    $region9: #{_lambda_.1} parent=1 // pred_fallthru
      _
    // Predicated region
    $region10: #{_lambda_.1} parent=1 // pred_check
      _
    $region11: #{_lambda_.1} parent=1 // pred_check_branch
      %23 = sbr.rel (0) target = $region13
    $region12: #{_lambda_.1} parent=1 // pred_region
      %24 = dma.done [#allocation3], 6272
    $region13: #{_lambda_.1} parent=1 // pred_fallthru
      _
    %v25 = vld [vmem:[%s0] sm:$0xff]
    %v26 = vld [vmem:[%s0 + $0x8] sm:$0xff]
    %v27 = vld [vmem:[#allocation2] sm:$0xff]
    %v28 = vld [vmem:[#allocation2 + $0x8] sm:$0xff]
    %v29 = vld [vmem:[#allocation2 + $0x10] sm:$0xff]
    %v30 = vld [vmem:[#allocation2 + $0x18] sm:$0xff]
    %v31 = vld [vmem:[#allocation2 + $0x20] sm:$0xff]
    %v32 = vld [vmem:[#allocation2 + $0x28] sm:$0xff]
    %v33 = vld [vmem:[#allocation2 + $0x30] sm:$0xff]
    %v34 = vld [vmem:[#allocation2 + $0x38] sm:$0xff]
    %v35 = vld [vmem:[#allocation2 + $0x40] sm:$0xff]
    %v36 = vld [vmem:[#allocation2 + $0x48] sm:$0xff]
    %vm37 = vcmask 523264
    %v39 = vsel %vm37, %v25, 0
    %v42 = vsel %vm37, %v26, 0
    %44 = vmatprep.subr.mxu0 0.0
    %45 = vmatpush1.msra.mxu0 %v27
    %46 = vmatprep.subr.mxu0 0.0
    %47 = vmatpush1.msra.mxu0 %v28
    %48 = vmatprep.subr.mxu0 0.0
    %49 = vmatpush1.msra.mxu0 %v29
    %50 = vmatprep.subr.mxu0 0.0
    %51 = vmatpush1.msra.mxu0 %v30
    %52 = vmatprep.subr.mxu0 0.0
    %53 = vmatpush1.msra.mxu0 %v31
    %54 = vmatprep.subr.mxu0 0.0
    %55 = vmatpush1.msra.mxu0 %v32
    %56 = vmatprep.subr.mxu0 0.0
    %57 = vmatpush1.msra.mxu0 %v33
    %58 = vmatprep.subr.mxu0 0.0
    %59 = vmatpush1.msra.mxu0 %v34
    %60 = vmatprep.subr.mxu0 0.0
    %61 = vmatpush1.msra.mxu0 0.0
    %62 = vmatprep.subr.mxu0 0.0
    %63 = vmatpush1.msra.mxu0 0.0
    %64 = vmatprep.subr.mxu0 0.0
    %65 = vmatpush1.msra.mxu0 0.0
    %66 = vmatprep.subr.mxu0 0.0
    %67 = vmatpush1.msra.mxu0 0.0
    %68 = vmatprep.subr.mxu0 0.0
    %69 = vmatpush1.msra.mxu0 0.0
    %70 = vmatprep.subr.mxu0 0.0
    %71 = vmatpush1.msra.mxu0 0.0
    %72 = vmatprep.subr.mxu0 0.0
    %73 = vmatpush1.msra.mxu0 0.0
    %74 = vmatprep.subr.mxu0 0.0
    %75 = vmatpush1.msra.mxu0 0.0
    %76 = vmatprep.subr.mxu0 0.0
    %77 = vmatpush1.msra.mxu0 0.0
    %78 = vmatprep.subr.mxu0 0.0
    %79 = vmatpush1.msra.mxu0 0.0
    %80 = vmatprep.subr.mxu0 0.0
    %81 = vmatpush1.msra.mxu0 0.0
    %82 = vmatprep.subr.mxu0 0.0
    %83 = vmatpush1.msra.mxu0 0.0
    %84 = vmatprep.subr.mxu0 0.0
    %85 = vmatpush1.msra.mxu0 0.0
    %86 = vmatprep.subr.mxu0 0.0
    %87 = vmatpush1.msra.mxu0 0.0
    %88 = vmatprep.subr.mxu0 0.0
    %89 = vmatpush1.msra.mxu0 0.0
    %90 = vmatprep.subr.mxu0 0.0
    %91 = vmatpush1.msra.mxu0 0.0
    %92 = vmatprep.subr.mxu0 0.0
    %93 = vmatpush1.msra.mxu0 0.0
    %94 = vmatprep.subr.mxu0 0.0
    %95 = vmatpush1.msra.mxu0 0.0
    %96 = vmatprep.subr.mxu0 0.0
    %97 = vmatpush1.msra.mxu0 0.0
    %98 = vmatprep.subr.mxu0 0.0
    %99 = vmatpush1.msra.mxu0 0.0
    %100 = vmatprep.subr.mxu0 0.0
    %101 = vmatpush1.msra.mxu0 0.0
    %102 = vmatprep.subr.mxu0 0.0
    %103 = vmatpush1.msra.mxu0 0.0
    %104 = vmatprep.subr.mxu0 0.0
    %105 = vmatpush1.msra.mxu0 0.0
    %106 = vmatprep.subr.mxu0 0.0
    %107 = vmatpush1.msra.mxu0 0.0
    %108 = vmatprep.mubr.f32.mxu0 0.0
    %109 = vmatmul.mubr.f32.gmra.mrb[0].mxu0 %v39
    %v110 = vpop.f32.mrb[0].mxu0
    %v111 = vadd.f32 %v35, %v110
    %v112 = vpop.f32.mrb[0].mxu0
    %113 = vmatprep.mubr.f32.mxu0 0.0
    %114 = vmatmul.mubr.f32.gmra.mrb[0].mxu0 %v42
    %v115 = vpop.f32.mrb[0].mxu0
    %v116 = vadd.f32 %v36, %v115
    %v117 = vpop.f32.mrb[0].mxu0
    %118 = vdwg.mxu0
    %v119 = vld [vmem:[#allocation2 + $0x78] sm:$0xff]
    %v120 = vld [vmem:[#allocation2 + $0x80] sm:$0xff]
    %v121 = vld [vmem:[#allocation2 + $0x88] sm:$0xff]
    %v122 = vld [vmem:[#allocation2 + $0x90] sm:$0xff]
    %v123 = vld [vmem:[#allocation2 + $0x98] sm:$0xff]
    %v124 = vld [vmem:[#allocation2 + $0xa0] sm:$0xff]
    %v125 = vld [vmem:[#allocation2 + $0xa8] sm:$0xff]
    %v126 = vld [vmem:[#allocation2 + $0xb0] sm:$0xff]
    %v127 = vld [vmem:[#allocation2 + $0xb8] sm:$0xff]
    %v128 = vld [vmem:[#allocation2 + $0xc0] sm:$0xff]
    %v129 = vld [vmem:[#allocation2 + $0xc8] sm:$0xff]
    %v130 = vld [vmem:[#allocation2 + $0xd0] sm:$0xff]
    %v131 = vld [vmem:[#allocation2 + $0xd8] sm:$0xff]
    %v132 = vld [vmem:[#allocation2 + $0xe0] sm:$0xff]
    %v133 = vld [vmem:[#allocation2 + $0xe8] sm:$0xff]
    %v134 = vld [vmem:[#allocation2 + $0xf0] sm:$0xff]
    %v135 = vld [vmem:[#allocation2 + $0xf8] sm:$0xff]
    %v136 = vlaneseq
    %v137 = vshrl.u32 %v136, 7
    %v138 = vsub.s32 0, %v137
    %v139 = vrot.slane %v135, %v138
    %vm140 = vcmask 261120
    %v142 = vsel %vm140, %v111, 0
    %v145 = vsel %vm140, %v116, 0
    %147 = vmatprep.subr.mxu0 0.0
    %148 = vmatpush1.msra.mxu0 %v119
    %149 = vmatprep.subr.mxu0 0.0
    %150 = vmatpush1.msra.mxu0 %v120
    %151 = vmatprep.subr.mxu0 0.0
    %152 = vmatpush1.msra.mxu0 %v121
    %153 = vmatprep.subr.mxu0 0.0
    %154 = vmatpush1.msra.mxu0 %v122
    %155 = vmatprep.subr.mxu0 0.0
    %156 = vmatpush1.msra.mxu0 0.0
    %157 = vmatprep.subr.mxu0 0.0
    %158 = vmatpush1.msra.mxu0 0.0
    %159 = vmatprep.subr.mxu0 0.0
    %160 = vmatpush1.msra.mxu0 0.0
    %161 = vmatprep.subr.mxu0 0.0
    %162 = vmatpush1.msra.mxu0 0.0
    %163 = vmatprep.subr.mxu0 0.0
    %164 = vmatpush1.msra.mxu0 0.0
    %165 = vmatprep.subr.mxu0 0.0
    %166 = vmatpush1.msra.mxu0 0.0
    %167 = vmatprep.subr.mxu0 0.0
    %168 = vmatpush1.msra.mxu0 0.0
    %169 = vmatprep.subr.mxu0 0.0
    %170 = vmatpush1.msra.mxu0 0.0
    %171 = vmatprep.subr.mxu0 0.0
    %172 = vmatpush1.msra.mxu0 0.0
    %173 = vmatprep.subr.mxu0 0.0
    %174 = vmatpush1.msra.mxu0 0.0
    %175 = vmatprep.subr.mxu0 0.0
    %176 = vmatpush1.msra.mxu0 0.0
    %177 = vmatprep.subr.mxu0 0.0
    %178 = vmatpush1.msra.mxu0 0.0
    %179 = vmatprep.subr.mxu0 0.0
    %180 = vmatpush1.msra.mxu0 0.0
    %181 = vmatprep.subr.mxu0 0.0
    %182 = vmatpush1.msra.mxu0 0.0
    %183 = vmatprep.subr.mxu0 0.0
    %184 = vmatpush1.msra.mxu0 0.0
    %185 = vmatprep.subr.mxu0 0.0
    %186 = vmatpush1.msra.mxu0 0.0
    %187 = vmatprep.subr.mxu0 0.0
    %188 = vmatpush1.msra.mxu0 0.0
    %189 = vmatprep.subr.mxu0 0.0
    %190 = vmatpush1.msra.mxu0 0.0
    %191 = vmatprep.subr.mxu0 0.0
    %192 = vmatpush1.msra.mxu0 0.0
    %193 = vmatprep.subr.mxu0 0.0
    %194 = vmatpush1.msra.mxu0 0.0
    %195 = vmatprep.subr.mxu0 0.0
    %196 = vmatpush1.msra.mxu0 0.0
    %197 = vmatprep.subr.mxu0 0.0
    %198 = vmatpush1.msra.mxu0 0.0
    %199 = vmatprep.subr.mxu0 0.0
    %200 = vmatpush1.msra.mxu0 0.0
    %201 = vmatprep.subr.mxu0 0.0
    %202 = vmatpush1.msra.mxu0 0.0
    %203 = vmatprep.subr.mxu0 0.0
    %204 = vmatpush1.msra.mxu0 0.0
    %205 = vmatprep.subr.mxu0 0.0
    %206 = vmatpush1.msra.mxu0 0.0
    %207 = vmatprep.subr.mxu0 0.0
    %208 = vmatpush1.msra.mxu0 0.0
    %209 = vmatprep.subr.mxu0 0.0
    %210 = vmatpush1.msra.mxu0 0.0
    %211 = vmatprep.mubr.f32.mxu0 0.0
    %212 = vmatmul.mubr.f32.gmra.mrb[0].mxu0 %v142
    %v213 = vpop.f32.mrb[0].mxu0
    %v214 = vadd.f32 %v139, %v213
    %v215 = vpop.f32.mrb[0].mxu0
    %216 = vmatprep.mubr.f32.mxu0 0.0
    %217 = vmatmul.mubr.f32.gmra.mrb[0].mxu0 %v145
    %v218 = vpop.f32.mrb[0].mxu0
    %v219 = vadd.f32 %v139, %v218
    %v220 = vpop.f32.mrb[0].mxu0
    %221 = vdwg.mxu0
    %223 = vrot.lane.b32.xlu0 %v214, 96
    %v224 = vpop.permute.xlu0 %223
    %vm225 = vcmask 64512
    %v226 = vsel %vm225, %v214, 0
    %v228 = vsel %vm225, %v224, 0
    %230 = vmatprep.subr.mxu0 0.0
    %231 = vmatpush1.xpose.msra.mxu0 %v228
    %232 = vmatprep.subr.mxu0 0.0
    %233 = vmatpush1.xpose.msra.mxu0 0.0
    %234 = vmatprep.subr.mxu0 0.0
    %235 = vmatpush1.xpose.msra.mxu0 0.0
    %236 = vmatprep.subr.mxu0 0.0
    %237 = vmatpush1.xpose.msra.mxu0 0.0
    %238 = vmatprep.subr.mxu0 0.0
    %239 = vmatpush1.xpose.msra.mxu0 0.0
    %240 = vmatprep.subr.mxu0 0.0
    %241 = vmatpush1.xpose.msra.mxu0 0.0
    %242 = vmatprep.subr.mxu0 0.0
    %243 = vmatpush1.xpose.msra.mxu0 0.0
    %244 = vmatprep.subr.mxu0 0.0
    %245 = vmatpush1.xpose.msra.mxu0 0.0
    %246 = vmatprep.subr.mxu0 0.0
    %247 = vmatpush1.xpose.msra.mxu0 0.0
    %248 = vmatprep.subr.mxu0 0.0
    %249 = vmatpush1.xpose.msra.mxu0 0.0
    %250 = vmatprep.subr.mxu0 0.0
    %251 = vmatpush1.xpose.msra.mxu0 0.0
    %252 = vmatprep.subr.mxu0 0.0
    %253 = vmatpush1.xpose.msra.mxu0 0.0
    %254 = vmatprep.subr.mxu0 0.0
    %255 = vmatpush1.xpose.msra.mxu0 0.0
    %256 = vmatprep.subr.mxu0 0.0
    %257 = vmatpush1.xpose.msra.mxu0 0.0
    %258 = vmatprep.subr.mxu0 0.0
    %259 = vmatpush1.xpose.msra.mxu0 0.0
    %260 = vmatprep.subr.mxu0 0.0
    %261 = vmatpush1.xpose.msra.mxu0 0.0
    %262 = vmatprep.subr.mxu0 0.0
    %263 = vmatpush1.xpose.msra.mxu0 0.0
    %264 = vmatprep.subr.mxu0 0.0
    %265 = vmatpush1.xpose.msra.mxu0 0.0
    %266 = vmatprep.subr.mxu0 0.0
    %267 = vmatpush1.xpose.msra.mxu0 0.0
    %268 = vmatprep.subr.mxu0 0.0
    %269 = vmatpush1.xpose.msra.mxu0 0.0
    %270 = vmatprep.subr.mxu0 0.0
    %271 = vmatpush1.xpose.msra.mxu0 0.0
    %272 = vmatprep.subr.mxu0 0.0
    %273 = vmatpush1.xpose.msra.mxu0 0.0
    %274 = vmatprep.subr.mxu0 0.0
    %275 = vmatpush1.xpose.msra.mxu0 0.0
    %276 = vmatprep.subr.mxu0 0.0
    %277 = vmatpush1.xpose.msra.mxu0 0.0
    %278 = vmatprep.subr.mxu0 0.0
    %279 = vmatpush1.xpose.msra.mxu0 0.0
    %280 = vmatprep.subr.mxu0 0.0
    %281 = vmatpush1.xpose.msra.mxu0 0.0
    %282 = vmatprep.subr.mxu0 0.0
    %283 = vmatpush1.xpose.msra.mxu0 0.0
    %284 = vmatprep.subr.mxu0 0.0
    %285 = vmatpush1.xpose.msra.mxu0 0.0
    %286 = vmatprep.subr.mxu0 0.0
    %287 = vmatpush1.xpose.msra.mxu0 0.0
    %288 = vmatprep.subr.mxu0 0.0
    %289 = vmatpush1.xpose.msra.mxu0 0.0
    %290 = vmatprep.subr.mxu0 0.0
    %291 = vmatpush1.xpose.msra.mxu0 0.0
    %292 = vmatprep.subr.mxu0 0.0
    %293 = vmatpush1.xpose.msra.mxu0 0.0
    %294 = vmatprep.mubr.f32.mxu0 0.0
    %295 = vmatmul.mubr.f32.gmra.mrb[0].mxu0 %v226
    %v296 = vpop.f32.mrb[0].mxu0
    %v297 = vadd.f32 0.0, %v296
    %v298 = vpop.f32.mrb[0].mxu0
    %299 = vdwg.mxu0
    %301 = vrot.lane.b32.xlu0 %v219, 96
    %v302 = vpop.permute.xlu0 %301
    %v303 = vsel %vm225, %v219, 0
    %v305 = vsel %vm225, %v302, 0
    %307 = vmatprep.subr.mxu0 0.0
    %308 = vmatpush1.xpose.msra.mxu0 %v305
    %309 = vmatprep.subr.mxu0 0.0
    %310 = vmatpush1.xpose.msra.mxu0 0.0
    %311 = vmatprep.subr.mxu0 0.0
    %312 = vmatpush1.xpose.msra.mxu0 0.0
    %313 = vmatprep.subr.mxu0 0.0
    %314 = vmatpush1.xpose.msra.mxu0 0.0
    %315 = vmatprep.subr.mxu0 0.0
    %316 = vmatpush1.xpose.msra.mxu0 0.0
    %317 = vmatprep.subr.mxu0 0.0
    %318 = vmatpush1.xpose.msra.mxu0 0.0
    %319 = vmatprep.subr.mxu0 0.0
    %320 = vmatpush1.xpose.msra.mxu0 0.0
    %321 = vmatprep.subr.mxu0 0.0
    %322 = vmatpush1.xpose.msra.mxu0 0.0
    %323 = vmatprep.subr.mxu0 0.0
    %324 = vmatpush1.xpose.msra.mxu0 0.0
    %325 = vmatprep.subr.mxu0 0.0
    %326 = vmatpush1.xpose.msra.mxu0 0.0
    %327 = vmatprep.subr.mxu0 0.0
    %328 = vmatpush1.xpose.msra.mxu0 0.0
    %329 = vmatprep.subr.mxu0 0.0
    %330 = vmatpush1.xpose.msra.mxu0 0.0
    %331 = vmatprep.subr.mxu0 0.0
    %332 = vmatpush1.xpose.msra.mxu0 0.0
    %333 = vmatprep.subr.mxu0 0.0
    %334 = vmatpush1.xpose.msra.mxu0 0.0
    %335 = vmatprep.subr.mxu0 0.0
    %336 = vmatpush1.xpose.msra.mxu0 0.0
    %337 = vmatprep.subr.mxu0 0.0
    %338 = vmatpush1.xpose.msra.mxu0 0.0
    %339 = vmatprep.subr.mxu0 0.0
    %340 = vmatpush1.xpose.msra.mxu0 0.0
    %341 = vmatprep.subr.mxu0 0.0
    %342 = vmatpush1.xpose.msra.mxu0 0.0
    %343 = vmatprep.subr.mxu0 0.0
    %344 = vmatpush1.xpose.msra.mxu0 0.0
    %345 = vmatprep.subr.mxu0 0.0
    %346 = vmatpush1.xpose.msra.mxu0 0.0
    %347 = vmatprep.subr.mxu0 0.0
    %348 = vmatpush1.xpose.msra.mxu0 0.0
    %349 = vmatprep.subr.mxu0 0.0
    %350 = vmatpush1.xpose.msra.mxu0 0.0
    %351 = vmatprep.subr.mxu0 0.0
    %352 = vmatpush1.xpose.msra.mxu0 0.0
    %353 = vmatprep.subr.mxu0 0.0
    %354 = vmatpush1.xpose.msra.mxu0 0.0
    %355 = vmatprep.subr.mxu0 0.0
    %356 = vmatpush1.xpose.msra.mxu0 0.0
    %357 = vmatprep.subr.mxu0 0.0
    %358 = vmatpush1.xpose.msra.mxu0 0.0
    %359 = vmatprep.subr.mxu0 0.0
    %360 = vmatpush1.xpose.msra.mxu0 0.0
    %361 = vmatprep.subr.mxu0 0.0
    %362 = vmatpush1.xpose.msra.mxu0 0.0
    %363 = vmatprep.subr.mxu0 0.0
    %364 = vmatpush1.xpose.msra.mxu0 0.0
    %365 = vmatprep.subr.mxu0 0.0
    %366 = vmatpush1.xpose.msra.mxu0 0.0
    %367 = vmatprep.subr.mxu0 0.0
    %368 = vmatpush1.xpose.msra.mxu0 0.0
    %369 = vmatprep.subr.mxu0 0.0
    %370 = vmatpush1.xpose.msra.mxu0 0.0
    %371 = vmatprep.mubr.f32.mxu0 0.0
    %372 = vmatmul.mubr.f32.gmra.mrb[0].mxu0 %v303
    %v373 = vpop.f32.mrb[0].mxu0
    %v374 = vadd.f32 0.0, %v373
    %v375 = vpop.f32.mrb[0].mxu0
    %376 = vdwg.mxu0
    %v377 = vsel %vm225, %v297, -inf
    %378 = vmax.xlane.f32.xlu0 %v377
    %v379 = vpop.xlane.xlu0 %378
    %v380 = vsel %vm225, %v374, -inf
    %381 = vmax.xlane.f32.xlu0 %v380
    %v382 = vpop.xlane.xlu0 %381
    %v383 = vsub.f32 %v297, %v379
    %v384 = vsub.f32 %v374, %v382
    %v385 = vmul.f32 %v383, 1.442695
    %v386 = vpow.pop %v385
    %v387 = vmul.f32 %v384, 1.442695
    %v388 = vpow.pop %v387
    %v389 = vsel %vm225, %v386, 0.0
    %390 = vadd.xlane.f32.xlu0 %v389
    %v391 = vpop.xlane.xlu0 %390
    %v392 = vsel %vm225, %v388, 0.0
    %393 = vadd.xlane.f32.xlu0 %v392
    %v394 = vpop.xlane.xlu0 %393
    %v395 = vrcp.pop %v391
    %v396 = vrcp.pop %v394
    %v397 = vmul.f32 %v386, %v395
    %v398 = vmul.f32 %v388, %v396
    %399 = vrot.lane.b32.xlu0 %v214, 64
    %v400 = vpop.permute.xlu0 %399
    %v403 = vsel %vm225, %v397, 0
    %405 = vmatprep.subr.mxu0 0.0
    %406 = vmatpush1.msra.mxu0 %v400
    %407 = vmatprep.subr.mxu0 0.0
    %408 = vmatpush1.msra.mxu0 0.0
    %409 = vmatprep.subr.mxu0 0.0
    %410 = vmatpush1.msra.mxu0 0.0
    %411 = vmatprep.subr.mxu0 0.0
    %412 = vmatpush1.msra.mxu0 0.0
    %413 = vmatprep.subr.mxu0 0.0
    %414 = vmatpush1.msra.mxu0 0.0
    %415 = vmatprep.subr.mxu0 0.0
    %416 = vmatpush1.msra.mxu0 0.0
    %417 = vmatprep.subr.mxu0 0.0
    %418 = vmatpush1.msra.mxu0 0.0
    %419 = vmatprep.subr.mxu0 0.0
    %420 = vmatpush1.msra.mxu0 0.0
    %421 = vmatprep.subr.mxu0 0.0
    %422 = vmatpush1.msra.mxu0 0.0
    %423 = vmatprep.subr.mxu0 0.0
    %424 = vmatpush1.msra.mxu0 0.0
    %425 = vmatprep.subr.mxu0 0.0
    %426 = vmatpush1.msra.mxu0 0.0
    %427 = vmatprep.subr.mxu0 0.0
    %428 = vmatpush1.msra.mxu0 0.0
    %429 = vmatprep.subr.mxu0 0.0
    %430 = vmatpush1.msra.mxu0 0.0
    %431 = vmatprep.subr.mxu0 0.0
    %432 = vmatpush1.msra.mxu0 0.0
    %433 = vmatprep.subr.mxu0 0.0
    %434 = vmatpush1.msra.mxu0 0.0
    %435 = vmatprep.subr.mxu0 0.0
    %436 = vmatpush1.msra.mxu0 0.0
    %437 = vmatprep.subr.mxu0 0.0
    %438 = vmatpush1.msra.mxu0 0.0
    %439 = vmatprep.subr.mxu0 0.0
    %440 = vmatpush1.msra.mxu0 0.0
    %441 = vmatprep.subr.mxu0 0.0
    %442 = vmatpush1.msra.mxu0 0.0
    %443 = vmatprep.subr.mxu0 0.0
    %444 = vmatpush1.msra.mxu0 0.0
    %445 = vmatprep.subr.mxu0 0.0
    %446 = vmatpush1.msra.mxu0 0.0
    %447 = vmatprep.subr.mxu0 0.0
    %448 = vmatpush1.msra.mxu0 0.0
    %449 = vmatprep.subr.mxu0 0.0
    %450 = vmatpush1.msra.mxu0 0.0
    %451 = vmatprep.subr.mxu0 0.0
    %452 = vmatpush1.msra.mxu0 0.0
    %453 = vmatprep.subr.mxu0 0.0
    %454 = vmatpush1.msra.mxu0 0.0
    %455 = vmatprep.subr.mxu0 0.0
    %456 = vmatpush1.msra.mxu0 0.0
    %457 = vmatprep.subr.mxu0 0.0
    %458 = vmatpush1.msra.mxu0 0.0
    %459 = vmatprep.subr.mxu0 0.0
    %460 = vmatpush1.msra.mxu0 0.0
    %461 = vmatprep.subr.mxu0 0.0
    %462 = vmatpush1.msra.mxu0 0.0
    %463 = vmatprep.subr.mxu0 0.0
    %464 = vmatpush1.msra.mxu0 0.0
    %465 = vmatprep.subr.mxu0 0.0
    %466 = vmatpush1.msra.mxu0 0.0
    %467 = vmatprep.subr.mxu0 0.0
    %468 = vmatpush1.msra.mxu0 0.0
    %469 = vmatprep.mubr.f32.mxu0 0.0
    %470 = vmatmul.mubr.f32.gmra.mrb[0].mxu0 %v403
    %v471 = vpop.f32.mrb[0].mxu0
    %v472 = vadd.f32 0.0, %v471
    %v473 = vpop.f32.mrb[0].mxu0
    %474 = vdwg.mxu0
    %475 = vrot.lane.b32.xlu0 %v219, 64
    %v476 = vpop.permute.xlu0 %475
    %v479 = vsel %vm225, %v398, 0
    %481 = vmatprep.subr.mxu0 0.0
    %482 = vmatpush1.msra.mxu0 %v476
    %483 = vmatprep.subr.mxu0 0.0
    %484 = vmatpush1.msra.mxu0 0.0
    %485 = vmatprep.subr.mxu0 0.0
    %486 = vmatpush1.msra.mxu0 0.0
    %487 = vmatprep.subr.mxu0 0.0
    %488 = vmatpush1.msra.mxu0 0.0
    %489 = vmatprep.subr.mxu0 0.0
    %490 = vmatpush1.msra.mxu0 0.0
    %491 = vmatprep.subr.mxu0 0.0
    %492 = vmatpush1.msra.mxu0 0.0
    %493 = vmatprep.subr.mxu0 0.0
    %494 = vmatpush1.msra.mxu0 0.0
    %495 = vmatprep.subr.mxu0 0.0
    %496 = vmatpush1.msra.mxu0 0.0
    %497 = vmatprep.subr.mxu0 0.0
    %498 = vmatpush1.msra.mxu0 0.0
    %499 = vmatprep.subr.mxu0 0.0
    %500 = vmatpush1.msra.mxu0 0.0
    %501 = vmatprep.subr.mxu0 0.0
    %502 = vmatpush1.msra.mxu0 0.0
    %503 = vmatprep.subr.mxu0 0.0
    %504 = vmatpush1.msra.mxu0 0.0
    %505 = vmatprep.subr.mxu0 0.0
    %506 = vmatpush1.msra.mxu0 0.0
    %507 = vmatprep.subr.mxu0 0.0
    %508 = vmatpush1.msra.mxu0 0.0
    %509 = vmatprep.subr.mxu0 0.0
    %510 = vmatpush1.msra.mxu0 0.0
    %511 = vmatprep.subr.mxu0 0.0
    %512 = vmatpush1.msra.mxu0 0.0
    %513 = vmatprep.subr.mxu0 0.0
    %514 = vmatpush1.msra.mxu0 0.0
    %515 = vmatprep.subr.mxu0 0.0
    %516 = vmatpush1.msra.mxu0 0.0
    %517 = vmatprep.subr.mxu0 0.0
    %518 = vmatpush1.msra.mxu0 0.0
    %519 = vmatprep.subr.mxu0 0.0
    %520 = vmatpush1.msra.mxu0 0.0
    %521 = vmatprep.subr.mxu0 0.0
    %522 = vmatpush1.msra.mxu0 0.0
    %523 = vmatprep.subr.mxu0 0.0
    %524 = vmatpush1.msra.mxu0 0.0
    %525 = vmatprep.subr.mxu0 0.0
    %526 = vmatpush1.msra.mxu0 0.0
    %527 = vmatprep.subr.mxu0 0.0
    %528 = vmatpush1.msra.mxu0 0.0
    %529 = vmatprep.subr.mxu0 0.0
    %530 = vmatpush1.msra.mxu0 0.0
    %531 = vmatprep.subr.mxu0 0.0
    %532 = vmatpush1.msra.mxu0 0.0
    %533 = vmatprep.subr.mxu0 0.0
    %534 = vmatpush1.msra.mxu0 0.0
    %535 = vmatprep.subr.mxu0 0.0
    %536 = vmatpush1.msra.mxu0 0.0
    %537 = vmatprep.subr.mxu0 0.0
    %538 = vmatpush1.msra.mxu0 0.0
    %539 = vmatprep.subr.mxu0 0.0
    %540 = vmatpush1.msra.mxu0 0.0
    %541 = vmatprep.subr.mxu0 0.0
    %542 = vmatpush1.msra.mxu0 0.0
    %543 = vmatprep.subr.mxu0 0.0
    %544 = vmatpush1.msra.mxu0 0.0
    %545 = vmatprep.mubr.f32.mxu0 0.0
    %546 = vmatmul.mubr.f32.gmra.mrb[0].mxu0 %v479
    %v547 = vpop.f32.mrb[0].mxu0
    %v548 = vadd.f32 0.0, %v547
    %v549 = vpop.f32.mrb[0].mxu0
    %550 = vdwg.mxu0
    %552 = vrot.lane.b32.xlu0 %v119, 32
    %v553 = vpop.permute.xlu0 %552
    %v556 = vsel %vm225, %v472, 0
    %v559 = vsel %vm225, %v548, 0
    %561 = vmatprep.subr.mxu0 0.0
    %562 = vmatpush1.msra.mxu0 %v553
    %563 = vmatprep.subr.mxu0 0.0
    %564 = vmatpush1.msra.mxu0 0.0
    %565 = vmatprep.subr.mxu0 0.0
    %566 = vmatpush1.msra.mxu0 0.0
    %567 = vmatprep.subr.mxu0 0.0
    %568 = vmatpush1.msra.mxu0 0.0
    %569 = vmatprep.subr.mxu0 0.0
    %570 = vmatpush1.msra.mxu0 0.0
    %571 = vmatprep.subr.mxu0 0.0
    %572 = vmatpush1.msra.mxu0 0.0
    %573 = vmatprep.subr.mxu0 0.0
    %574 = vmatpush1.msra.mxu0 0.0
    %575 = vmatprep.subr.mxu0 0.0
    %576 = vmatpush1.msra.mxu0 0.0
    %577 = vmatprep.subr.mxu0 0.0
    %578 = vmatpush1.msra.mxu0 0.0
    %579 = vmatprep.subr.mxu0 0.0
    %580 = vmatpush1.msra.mxu0 0.0
    %581 = vmatprep.subr.mxu0 0.0
    %582 = vmatpush1.msra.mxu0 0.0
    %583 = vmatprep.subr.mxu0 0.0
    %584 = vmatpush1.msra.mxu0 0.0
    %585 = vmatprep.subr.mxu0 0.0
    %586 = vmatpush1.msra.mxu0 0.0
    %587 = vmatprep.subr.mxu0 0.0
    %588 = vmatpush1.msra.mxu0 0.0
    %589 = vmatprep.subr.mxu0 0.0
    %590 = vmatpush1.msra.mxu0 0.0
    %591 = vmatprep.subr.mxu0 0.0
    %592 = vmatpush1.msra.mxu0 0.0
    %593 = vmatprep.subr.mxu0 0.0
    %594 = vmatpush1.msra.mxu0 0.0
    %595 = vmatprep.subr.mxu0 0.0
    %596 = vmatpush1.msra.mxu0 0.0
    %597 = vmatprep.subr.mxu0 0.0
    %598 = vmatpush1.msra.mxu0 0.0
    %599 = vmatprep.subr.mxu0 0.0
    %600 = vmatpush1.msra.mxu0 0.0
    %601 = vmatprep.subr.mxu0 0.0
    %602 = vmatpush1.msra.mxu0 0.0
    %603 = vmatprep.subr.mxu0 0.0
    %604 = vmatpush1.msra.mxu0 0.0
    %605 = vmatprep.subr.mxu0 0.0
    %606 = vmatpush1.msra.mxu0 0.0
    %607 = vmatprep.subr.mxu0 0.0
    %608 = vmatpush1.msra.mxu0 0.0
    %609 = vmatprep.subr.mxu0 0.0
    %610 = vmatpush1.msra.mxu0 0.0
    %611 = vmatprep.subr.mxu0 0.0
    %612 = vmatpush1.msra.mxu0 0.0
    %613 = vmatprep.subr.mxu0 0.0
    %614 = vmatpush1.msra.mxu0 0.0
    %615 = vmatprep.subr.mxu0 0.0
    %616 = vmatpush1.msra.mxu0 0.0
    %617 = vmatprep.subr.mxu0 0.0
    %618 = vmatpush1.msra.mxu0 0.0
    %619 = vmatprep.subr.mxu0 0.0
    %620 = vmatpush1.msra.mxu0 0.0
    %621 = vmatprep.subr.mxu0 0.0
    %622 = vmatpush1.msra.mxu0 0.0
    %623 = vmatprep.subr.mxu0 0.0
    %624 = vmatpush1.msra.mxu0 0.0
    %625 = vmatprep.mubr.f32.mxu0 0.0
    %626 = vmatmul.mubr.f32.gmra.mrb[0].mxu0 %v556
    %v627 = vpop.f32.mrb[0].mxu0
    %v628 = vadd.f32 0.0, %v627
    %v629 = vpop.f32.mrb[0].mxu0
    %630 = vmatprep.mubr.f32.mxu0 0.0
    %631 = vmatmul.mubr.f32.gmra.mrb[0].mxu0 %v559
    %v632 = vpop.f32.mrb[0].mxu0
    %v633 = vadd.f32 0.0, %v632
    %v634 = vpop.f32.mrb[0].mxu0
    %635 = vdwg.mxu0
    %v636 = vlaneseq
    %v637 = vshrl.u32 %v636, 7
    %v638 = vsub.s32 1, %v637
    %v639 = vrot.slane %v135, %v638
    %v640 = vadd.f32 %v639, %v628
    %v641 = vadd.f32 %v639, %v633
    %642 = vrot.lane.b32.xlu0 %v214, 120
    %v643 = vpop.permute.xlu0 %642
    %644 = vrot.lane.b32.xlu0 %v214, 88
    %v645 = vpop.permute.xlu0 %644
    %v646 = vsel %vm225, %v643, 0
    %v648 = vsel %vm225, %v645, 0
    %650 = vmatprep.subr.mxu0 0.0
    %651 = vmatpush1.xpose.msra.mxu0 %v648
    %652 = vmatprep.subr.mxu0 0.0
    %653 = vmatpush1.xpose.msra.mxu0 0.0
    %654 = vmatprep.subr.mxu0 0.0
    %655 = vmatpush1.xpose.msra.mxu0 0.0
    %656 = vmatprep.subr.mxu0 0.0
    %657 = vmatpush1.xpose.msra.mxu0 0.0
    %658 = vmatprep.subr.mxu0 0.0
    %659 = vmatpush1.xpose.msra.mxu0 0.0
    %660 = vmatprep.subr.mxu0 0.0
    %661 = vmatpush1.xpose.msra.mxu0 0.0
    %662 = vmatprep.subr.mxu0 0.0
    %663 = vmatpush1.xpose.msra.mxu0 0.0
    %664 = vmatprep.subr.mxu0 0.0
    %665 = vmatpush1.xpose.msra.mxu0 0.0
    %666 = vmatprep.subr.mxu0 0.0
    %667 = vmatpush1.xpose.msra.mxu0 0.0
    %668 = vmatprep.subr.mxu0 0.0
    %669 = vmatpush1.xpose.msra.mxu0 0.0
    %670 = vmatprep.subr.mxu0 0.0
    %671 = vmatpush1.xpose.msra.mxu0 0.0
    %672 = vmatprep.subr.mxu0 0.0
    %673 = vmatpush1.xpose.msra.mxu0 0.0
    %674 = vmatprep.subr.mxu0 0.0
    %675 = vmatpush1.xpose.msra.mxu0 0.0
    %676 = vmatprep.subr.mxu0 0.0
    %677 = vmatpush1.xpose.msra.mxu0 0.0
    %678 = vmatprep.subr.mxu0 0.0
    %679 = vmatpush1.xpose.msra.mxu0 0.0
    %680 = vmatprep.subr.mxu0 0.0
    %681 = vmatpush1.xpose.msra.mxu0 0.0
    %682 = vmatprep.subr.mxu0 0.0
    %683 = vmatpush1.xpose.msra.mxu0 0.0
    %684 = vmatprep.subr.mxu0 0.0
    %685 = vmatpush1.xpose.msra.mxu0 0.0
    %686 = vmatprep.subr.mxu0 0.0
    %687 = vmatpush1.xpose.msra.mxu0 0.0
    %688 = vmatprep.subr.mxu0 0.0
    %689 = vmatpush1.xpose.msra.mxu0 0.0
    %690 = vmatprep.subr.mxu0 0.0
    %691 = vmatpush1.xpose.msra.mxu0 0.0
    %692 = vmatprep.subr.mxu0 0.0
    %693 = vmatpush1.xpose.msra.mxu0 0.0
    %694 = vmatprep.subr.mxu0 0.0
    %695 = vmatpush1.xpose.msra.mxu0 0.0
    %696 = vmatprep.subr.mxu0 0.0
    %697 = vmatpush1.xpose.msra.mxu0 0.0
    %698 = vmatprep.subr.mxu0 0.0
    %699 = vmatpush1.xpose.msra.mxu0 0.0
    %700 = vmatprep.subr.mxu0 0.0
    %701 = vmatpush1.xpose.msra.mxu0 0.0
    %702 = vmatprep.subr.mxu0 0.0
    %703 = vmatpush1.xpose.msra.mxu0 0.0
    %704 = vmatprep.subr.mxu0 0.0
    %705 = vmatpush1.xpose.msra.mxu0 0.0
    %706 = vmatprep.subr.mxu0 0.0
    %707 = vmatpush1.xpose.msra.mxu0 0.0
    %708 = vmatprep.subr.mxu0 0.0
    %709 = vmatpush1.xpose.msra.mxu0 0.0
    %710 = vmatprep.subr.mxu0 0.0
    %711 = vmatpush1.xpose.msra.mxu0 0.0
    %712 = vmatprep.subr.mxu0 0.0
    %713 = vmatpush1.xpose.msra.mxu0 0.0
    %714 = vmatprep.mubr.f32.mxu0 0.0
    %715 = vmatmul.mubr.f32.gmra.mrb[0].mxu0 %v646
    %v716 = vpop.f32.mrb[0].mxu0
    %v717 = vadd.f32 0.0, %v716
    %v718 = vpop.f32.mrb[0].mxu0
    %719 = vdwg.mxu0
    %720 = vrot.lane.b32.xlu0 %v219, 120
    %v721 = vpop.permute.xlu0 %720
    %722 = vrot.lane.b32.xlu0 %v219, 88
    %v723 = vpop.permute.xlu0 %722
    %v724 = vsel %vm225, %v721, 0
    %v726 = vsel %vm225, %v723, 0
    %728 = vmatprep.subr.mxu0 0.0
    %729 = vmatpush1.xpose.msra.mxu0 %v726
    %730 = vmatprep.subr.mxu0 0.0
    %731 = vmatpush1.xpose.msra.mxu0 0.0
    %732 = vmatprep.subr.mxu0 0.0
    %733 = vmatpush1.xpose.msra.mxu0 0.0
    %734 = vmatprep.subr.mxu0 0.0
    %735 = vmatpush1.xpose.msra.mxu0 0.0
    %736 = vmatprep.subr.mxu0 0.0
    %737 = vmatpush1.xpose.msra.mxu0 0.0
    %738 = vmatprep.subr.mxu0 0.0
    %739 = vmatpush1.xpose.msra.mxu0 0.0
    %740 = vmatprep.subr.mxu0 0.0
    %741 = vmatpush1.xpose.msra.mxu0 0.0
    %742 = vmatprep.subr.mxu0 0.0
    %743 = vmatpush1.xpose.msra.mxu0 0.0
    %744 = vmatprep.subr.mxu0 0.0
    %745 = vmatpush1.xpose.msra.mxu0 0.0
    %746 = vmatprep.subr.mxu0 0.0
    %747 = vmatpush1.xpose.msra.mxu0 0.0
    %748 = vmatprep.subr.mxu0 0.0
    %749 = vmatpush1.xpose.msra.mxu0 0.0
    %750 = vmatprep.subr.mxu0 0.0
    %751 = vmatpush1.xpose.msra.mxu0 0.0
    %752 = vmatprep.subr.mxu0 0.0
    %753 = vmatpush1.xpose.msra.mxu0 0.0
    %754 = vmatprep.subr.mxu0 0.0
    %755 = vmatpush1.xpose.msra.mxu0 0.0
    %756 = vmatprep.subr.mxu0 0.0
    %757 = vmatpush1.xpose.msra.mxu0 0.0
    %758 = vmatprep.subr.mxu0 0.0
    %759 = vmatpush1.xpose.msra.mxu0 0.0
    %760 = vmatprep.subr.mxu0 0.0
    %761 = vmatpush1.xpose.msra.mxu0 0.0
    %762 = vmatprep.subr.mxu0 0.0
    %763 = vmatpush1.xpose.msra.mxu0 0.0
    %764 = vmatprep.subr.mxu0 0.0
    %765 = vmatpush1.xpose.msra.mxu0 0.0
    %766 = vmatprep.subr.mxu0 0.0
    %767 = vmatpush1.xpose.msra.mxu0 0.0
    %768 = vmatprep.subr.mxu0 0.0
    %769 = vmatpush1.xpose.msra.mxu0 0.0
    %770 = vmatprep.subr.mxu0 0.0
    %771 = vmatpush1.xpose.msra.mxu0 0.0
    %772 = vmatprep.subr.mxu0 0.0
    %773 = vmatpush1.xpose.msra.mxu0 0.0
    %774 = vmatprep.subr.mxu0 0.0
    %775 = vmatpush1.xpose.msra.mxu0 0.0
    %776 = vmatprep.subr.mxu0 0.0
    %777 = vmatpush1.xpose.msra.mxu0 0.0
    %778 = vmatprep.subr.mxu0 0.0
    %779 = vmatpush1.xpose.msra.mxu0 0.0
    %780 = vmatprep.subr.mxu0 0.0
    %781 = vmatpush1.xpose.msra.mxu0 0.0
    %782 = vmatprep.subr.mxu0 0.0
    %783 = vmatpush1.xpose.msra.mxu0 0.0
    %784 = vmatprep.subr.mxu0 0.0
    %785 = vmatpush1.xpose.msra.mxu0 0.0
    %786 = vmatprep.subr.mxu0 0.0
    %787 = vmatpush1.xpose.msra.mxu0 0.0
    %788 = vmatprep.subr.mxu0 0.0
    %789 = vmatpush1.xpose.msra.mxu0 0.0
    %790 = vmatprep.subr.mxu0 0.0
    %791 = vmatpush1.xpose.msra.mxu0 0.0
    %792 = vmatprep.mubr.f32.mxu0 0.0
    %793 = vmatmul.mubr.f32.gmra.mrb[0].mxu0 %v724
    %v794 = vpop.f32.mrb[0].mxu0
    %v795 = vadd.f32 0.0, %v794
    %v796 = vpop.f32.mrb[0].mxu0
    %797 = vdwg.mxu0
    %v798 = vsel %vm225, %v717, -inf
    %799 = vmax.xlane.f32.xlu0 %v798
    %v800 = vpop.xlane.xlu0 %799
    %v801 = vsel %vm225, %v795, -inf
    %802 = vmax.xlane.f32.xlu0 %v801
    %v803 = vpop.xlane.xlu0 %802
    %v804 = vsub.f32 %v717, %v800
    %v805 = vsub.f32 %v795, %v803
    %v806 = vmul.f32 %v804, 1.442695
    %v807 = vpow.pop %v806
    %v808 = vmul.f32 %v805, 1.442695
    %v809 = vpow.pop %v808
    %v810 = vsel %vm225, %v807, 0.0
    %811 = vadd.xlane.f32.xlu0 %v810
    %v812 = vpop.xlane.xlu0 %811
    %v813 = vsel %vm225, %v809, 0.0
    %814 = vadd.xlane.f32.xlu0 %v813
    %v815 = vpop.xlane.xlu0 %814
    %v816 = vrcp.pop %v812
    %v817 = vrcp.pop %v815
    %v818 = vmul.f32 %v807, %v816
    %v819 = vmul.f32 %v809, %v817
    %820 = vrot.lane.b32.xlu0 %v214, 56
    %v821 = vpop.permute.xlu0 %820
    %v824 = vsel %vm225, %v818, 0
    %826 = vmatprep.subr.mxu0 0.0
    %827 = vmatpush1.msra.mxu0 %v821
    %828 = vmatprep.subr.mxu0 0.0
    %829 = vmatpush1.msra.mxu0 0.0
    %830 = vmatprep.subr.mxu0 0.0
    %831 = vmatpush1.msra.mxu0 0.0
    %832 = vmatprep.subr.mxu0 0.0
    %833 = vmatpush1.msra.mxu0 0.0
    %834 = vmatprep.subr.mxu0 0.0
    %835 = vmatpush1.msra.mxu0 0.0
    %836 = vmatprep.subr.mxu0 0.0
    %837 = vmatpush1.msra.mxu0 0.0
    %838 = vmatprep.subr.mxu0 0.0
    %839 = vmatpush1.msra.mxu0 0.0
    %840 = vmatprep.subr.mxu0 0.0
    %841 = vmatpush1.msra.mxu0 0.0
    %842 = vmatprep.subr.mxu0 0.0
    %843 = vmatpush1.msra.mxu0 0.0
    %844 = vmatprep.subr.mxu0 0.0
    %845 = vmatpush1.msra.mxu0 0.0
    %846 = vmatprep.subr.mxu0 0.0
    %847 = vmatpush1.msra.mxu0 0.0
    %848 = vmatprep.subr.mxu0 0.0
    %849 = vmatpush1.msra.mxu0 0.0
    %850 = vmatprep.subr.mxu0 0.0
    %851 = vmatpush1.msra.mxu0 0.0
    %852 = vmatprep.subr.mxu0 0.0
    %853 = vmatpush1.msra.mxu0 0.0
    %854 = vmatprep.subr.mxu0 0.0
    %855 = vmatpush1.msra.mxu0 0.0
    %856 = vmatprep.subr.mxu0 0.0
    %857 = vmatpush1.msra.mxu0 0.0
    %858 = vmatprep.subr.mxu0 0.0
    %859 = vmatpush1.msra.mxu0 0.0
    %860 = vmatprep.subr.mxu0 0.0
    %861 = vmatpush1.msra.mxu0 0.0
    %862 = vmatprep.subr.mxu0 0.0
    %863 = vmatpush1.msra.mxu0 0.0
    %864 = vmatprep.subr.mxu0 0.0
    %865 = vmatpush1.msra.mxu0 0.0
    %866 = vmatprep.subr.mxu0 0.0
    %867 = vmatpush1.msra.mxu0 0.0
    %868 = vmatprep.subr.mxu0 0.0
    %869 = vmatpush1.msra.mxu0 0.0
    %870 = vmatprep.subr.mxu0 0.0
    %871 = vmatpush1.msra.mxu0 0.0
    %872 = vmatprep.subr.mxu0 0.0
    %873 = vmatpush1.msra.mxu0 0.0
    %874 = vmatprep.subr.mxu0 0.0
    %875 = vmatpush1.msra.mxu0 0.0
    %876 = vmatprep.subr.mxu0 0.0
    %877 = vmatpush1.msra.mxu0 0.0
    %878 = vmatprep.subr.mxu0 0.0
    %879 = vmatpush1.msra.mxu0 0.0
    %880 = vmatprep.subr.mxu0 0.0
    %881 = vmatpush1.msra.mxu0 0.0
    %882 = vmatprep.subr.mxu0 0.0
    %883 = vmatpush1.msra.mxu0 0.0
    %884 = vmatprep.subr.mxu0 0.0
    %885 = vmatpush1.msra.mxu0 0.0
    %886 = vmatprep.subr.mxu0 0.0
    %887 = vmatpush1.msra.mxu0 0.0
    %888 = vmatprep.subr.mxu0 0.0
    %889 = vmatpush1.msra.mxu0 0.0
    %890 = vmatprep.mubr.f32.mxu0 0.0
    %891 = vmatmul.mubr.f32.gmra.mrb[0].mxu0 %v824
    %v892 = vpop.f32.mrb[0].mxu0
    %v893 = vadd.f32 0.0, %v892
    %v894 = vpop.f32.mrb[0].mxu0
    %895 = vdwg.mxu0
    %896 = vrot.lane.b32.xlu0 %v219, 56
    %v897 = vpop.permute.xlu0 %896
    %v900 = vsel %vm225, %v819, 0
    %902 = vmatprep.subr.mxu0 0.0
    %903 = vmatpush1.msra.mxu0 %v897
    %904 = vmatprep.subr.mxu0 0.0
    %905 = vmatpush1.msra.mxu0 0.0
    %906 = vmatprep.subr.mxu0 0.0
    %907 = vmatpush1.msra.mxu0 0.0
    %908 = vmatprep.subr.mxu0 0.0
    %909 = vmatpush1.msra.mxu0 0.0
    %910 = vmatprep.subr.mxu0 0.0
    %911 = vmatpush1.msra.mxu0 0.0
    %912 = vmatprep.subr.mxu0 0.0
    %913 = vmatpush1.msra.mxu0 0.0
    %914 = vmatprep.subr.mxu0 0.0
    %915 = vmatpush1.msra.mxu0 0.0
    %916 = vmatprep.subr.mxu0 0.0
    %917 = vmatpush1.msra.mxu0 0.0
    %918 = vmatprep.subr.mxu0 0.0
    %919 = vmatpush1.msra.mxu0 0.0
    %920 = vmatprep.subr.mxu0 0.0
    %921 = vmatpush1.msra.mxu0 0.0
    %922 = vmatprep.subr.mxu0 0.0
    %923 = vmatpush1.msra.mxu0 0.0
    %924 = vmatprep.subr.mxu0 0.0
    %925 = vmatpush1.msra.mxu0 0.0
    %926 = vmatprep.subr.mxu0 0.0
    %927 = vmatpush1.msra.mxu0 0.0
    %928 = vmatprep.subr.mxu0 0.0
    %929 = vmatpush1.msra.mxu0 0.0
    %930 = vmatprep.subr.mxu0 0.0
    %931 = vmatpush1.msra.mxu0 0.0
    %932 = vmatprep.subr.mxu0 0.0
    %933 = vmatpush1.msra.mxu0 0.0
    %934 = vmatprep.subr.mxu0 0.0
    %935 = vmatpush1.msra.mxu0 0.0
    %936 = vmatprep.subr.mxu0 0.0
    %937 = vmatpush1.msra.mxu0 0.0
    %938 = vmatprep.subr.mxu0 0.0
    %939 = vmatpush1.msra.mxu0 0.0
    %940 = vmatprep.subr.mxu0 0.0
    %941 = vmatpush1.msra.mxu0 0.0
    %942 = vmatprep.subr.mxu0 0.0
    %943 = vmatpush1.msra.mxu0 0.0
    %944 = vmatprep.subr.mxu0 0.0
    %945 = vmatpush1.msra.mxu0 0.0
    %946 = vmatprep.subr.mxu0 0.0
    %947 = vmatpush1.msra.mxu0 0.0
    %948 = vmatprep.subr.mxu0 0.0
    %949 = vmatpush1.msra.mxu0 0.0
    %950 = vmatprep.subr.mxu0 0.0
    %951 = vmatpush1.msra.mxu0 0.0
    %952 = vmatprep.subr.mxu0 0.0
    %953 = vmatpush1.msra.mxu0 0.0
    %954 = vmatprep.subr.mxu0 0.0
    %955 = vmatpush1.msra.mxu0 0.0
    %956 = vmatprep.subr.mxu0 0.0
    %957 = vmatpush1.msra.mxu0 0.0
    %958 = vmatprep.subr.mxu0 0.0
    %959 = vmatpush1.msra.mxu0 0.0
    %960 = vmatprep.subr.mxu0 0.0
    %961 = vmatpush1.msra.mxu0 0.0
    %962 = vmatprep.subr.mxu0 0.0
    %963 = vmatpush1.msra.mxu0 0.0
    %964 = vmatprep.subr.mxu0 0.0
    %965 = vmatpush1.msra.mxu0 0.0
    %966 = vmatprep.mubr.f32.mxu0 0.0
    %967 = vmatmul.mubr.f32.gmra.mrb[0].mxu0 %v900
    %v968 = vpop.f32.mrb[0].mxu0
    %v969 = vadd.f32 0.0, %v968
    %v970 = vpop.f32.mrb[0].mxu0
    %971 = vdwg.mxu0
    %973 = vrot.lane.b32.xlu0 %v120, 32
    %v974 = vpop.permute.xlu0 %973
    %v977 = vsel %vm225, %v893, 0
    %v980 = vsel %vm225, %v969, 0
    %982 = vmatprep.subr.mxu0 0.0
    %983 = vmatpush1.msra.mxu0 %v974
    %984 = vmatprep.subr.mxu0 0.0
    %985 = vmatpush1.msra.mxu0 0.0
    %986 = vmatprep.subr.mxu0 0.0
    %987 = vmatpush1.msra.mxu0 0.0
    %988 = vmatprep.subr.mxu0 0.0
    %989 = vmatpush1.msra.mxu0 0.0
    %990 = vmatprep.subr.mxu0 0.0
    %991 = vmatpush1.msra.mxu0 0.0
    %992 = vmatprep.subr.mxu0 0.0
    %993 = vmatpush1.msra.mxu0 0.0
    %994 = vmatprep.subr.mxu0 0.0
    %995 = vmatpush1.msra.mxu0 0.0
    %996 = vmatprep.subr.mxu0 0.0
    %997 = vmatpush1.msra.mxu0 0.0
    %998 = vmatprep.subr.mxu0 0.0
    %999 = vmatpush1.msra.mxu0 0.0
    %1000 = vmatprep.subr.mxu0 0.0
    %1001 = vmatpush1.msra.mxu0 0.0
    %1002 = vmatprep.subr.mxu0 0.0
    %1003 = vmatpush1.msra.mxu0 0.0
    %1004 = vmatprep.subr.mxu0 0.0
    %1005 = vmatpush1.msra.mxu0 0.0
    %1006 = vmatprep.subr.mxu0 0.0
    %1007 = vmatpush1.msra.mxu0 0.0
    %1008 = vmatprep.subr.mxu0 0.0
    %1009 = vmatpush1.msra.mxu0 0.0
    %1010 = vmatprep.subr.mxu0 0.0
    %1011 = vmatpush1.msra.mxu0 0.0
    %1012 = vmatprep.subr.mxu0 0.0
    %1013 = vmatpush1.msra.mxu0 0.0
    %1014 = vmatprep.subr.mxu0 0.0
    %1015 = vmatpush1.msra.mxu0 0.0
    %1016 = vmatprep.subr.mxu0 0.0
    %1017 = vmatpush1.msra.mxu0 0.0
    %1018 = vmatprep.subr.mxu0 0.0
    %1019 = vmatpush1.msra.mxu0 0.0
    %1020 = vmatprep.subr.mxu0 0.0
    %1021 = vmatpush1.msra.mxu0 0.0
    %1022 = vmatprep.subr.mxu0 0.0
    %1023 = vmatpush1.msra.mxu0 0.0
    %1024 = vmatprep.subr.mxu0 0.0
    %1025 = vmatpush1.msra.mxu0 0.0
    %1026 = vmatprep.subr.mxu0 0.0
    %1027 = vmatpush1.msra.mxu0 0.0
    %1028 = vmatprep.subr.mxu0 0.0
    %1029 = vmatpush1.msra.mxu0 0.0
    %1030 = vmatprep.subr.mxu0 0.0
    %1031 = vmatpush1.msra.mxu0 0.0
    %1032 = vmatprep.subr.mxu0 0.0
    %1033 = vmatpush1.msra.mxu0 0.0
    %1034 = vmatprep.subr.mxu0 0.0
    %1035 = vmatpush1.msra.mxu0 0.0
    %1036 = vmatprep.subr.mxu0 0.0
    %1037 = vmatpush1.msra.mxu0 0.0
    %1038 = vmatprep.subr.mxu0 0.0
    %1039 = vmatpush1.msra.mxu0 0.0
    %1040 = vmatprep.subr.mxu0 0.0
    %1041 = vmatpush1.msra.mxu0 0.0
    %1042 = vmatprep.subr.mxu0 0.0
    %1043 = vmatpush1.msra.mxu0 0.0
    %1044 = vmatprep.subr.mxu0 0.0
    %1045 = vmatpush1.msra.mxu0 0.0
    %1046 = vmatprep.mubr.f32.mxu0 0.0
    %1047 = vmatmul.mubr.f32.gmra.mrb[0].mxu0 %v977
    %v1048 = vpop.f32.mrb[0].mxu0
    %v1049 = vadd.f32 0.0, %v1048
    %v1050 = vpop.f32.mrb[0].mxu0
    %1051 = vmatprep.mubr.f32.mxu0 0.0
    %1052 = vmatmul.mubr.f32.gmra.mrb[0].mxu0 %v980
    %v1053 = vpop.f32.mrb[0].mxu0
    %v1054 = vadd.f32 0.0, %v1053
    %v1055 = vpop.f32.mrb[0].mxu0
    %1056 = vdwg.mxu0
    %v1057 = vadd.f32 %v640, %v1049
    %v1058 = vadd.f32 %v641, %v1054
    %1059 = vrot.lane.b32.xlu0 %v214, 112
    %v1060 = vpop.permute.xlu0 %1059
    %1061 = vrot.lane.b32.xlu0 %v214, 80
    %v1062 = vpop.permute.xlu0 %1061
    %v1063 = vsel %vm225, %v1060, 0
    %v1065 = vsel %vm225, %v1062, 0
    %1067 = vmatprep.subr.mxu0 0.0
    %1068 = vmatpush1.xpose.msra.mxu0 %v1065
    %1069 = vmatprep.subr.mxu0 0.0
    %1070 = vmatpush1.xpose.msra.mxu0 0.0
    %1071 = vmatprep.subr.mxu0 0.0
    %1072 = vmatpush1.xpose.msra.mxu0 0.0
    %1073 = vmatprep.subr.mxu0 0.0
    %1074 = vmatpush1.xpose.msra.mxu0 0.0
    %1075 = vmatprep.subr.mxu0 0.0
    %1076 = vmatpush1.xpose.msra.mxu0 0.0
    %1077 = vmatprep.subr.mxu0 0.0
    %1078 = vmatpush1.xpose.msra.mxu0 0.0
    %1079 = vmatprep.subr.mxu0 0.0
    %1080 = vmatpush1.xpose.msra.mxu0 0.0
    %1081 = vmatprep.subr.mxu0 0.0
    %1082 = vmatpush1.xpose.msra.mxu0 0.0
    %1083 = vmatprep.subr.mxu0 0.0
    %1084 = vmatpush1.xpose.msra.mxu0 0.0
    %1085 = vmatprep.subr.mxu0 0.0
    %1086 = vmatpush1.xpose.msra.mxu0 0.0
    %1087 = vmatprep.subr.mxu0 0.0
    %1088 = vmatpush1.xpose.msra.mxu0 0.0
    %1089 = vmatprep.subr.mxu0 0.0
    %1090 = vmatpush1.xpose.msra.mxu0 0.0
    %1091 = vmatprep.subr.mxu0 0.0
    %1092 = vmatpush1.xpose.msra.mxu0 0.0
    %1093 = vmatprep.subr.mxu0 0.0
    %1094 = vmatpush1.xpose.msra.mxu0 0.0
    %1095 = vmatprep.subr.mxu0 0.0
    %1096 = vmatpush1.xpose.msra.mxu0 0.0
    %1097 = vmatprep.subr.mxu0 0.0
    %1098 = vmatpush1.xpose.msra.mxu0 0.0
    %1099 = vmatprep.subr.mxu0 0.0
    %1100 = vmatpush1.xpose.msra.mxu0 0.0
    %1101 = vmatprep.subr.mxu0 0.0
    %1102 = vmatpush1.xpose.msra.mxu0 0.0
    %1103 = vmatprep.subr.mxu0 0.0
    %1104 = vmatpush1.xpose.msra.mxu0 0.0
    %1105 = vmatprep.subr.mxu0 0.0
    %1106 = vmatpush1.xpose.msra.mxu0 0.0
    %1107 = vmatprep.subr.mxu0 0.0
    %1108 = vmatpush1.xpose.msra.mxu0 0.0
    %1109 = vmatprep.subr.mxu0 0.0
    %1110 = vmatpush1.xpose.msra.mxu0 0.0
    %1111 = vmatprep.subr.mxu0 0.0
    %1112 = vmatpush1.xpose.msra.mxu0 0.0
    %1113 = vmatprep.subr.mxu0 0.0
    %1114 = vmatpush1.xpose.msra.mxu0 0.0
    %1115 = vmatprep.subr.mxu0 0.0
    %1116 = vmatpush1.xpose.msra.mxu0 0.0
    %1117 = vmatprep.subr.mxu0 0.0
    %1118 = vmatpush1.xpose.msra.mxu0 0.0
    %1119 = vmatprep.subr.mxu0 0.0
    %1120 = vmatpush1.xpose.msra.mxu0 0.0
    %1121 = vmatprep.subr.mxu0 0.0
    %1122 = vmatpush1.xpose.msra.mxu0 0.0
    %1123 = vmatprep.subr.mxu0 0.0
    %1124 = vmatpush1.xpose.msra.mxu0 0.0
    %1125 = vmatprep.subr.mxu0 0.0
    %1126 = vmatpush1.xpose.msra.mxu0 0.0
    %1127 = vmatprep.subr.mxu0 0.0
    %1128 = vmatpush1.xpose.msra.mxu0 0.0
    %1129 = vmatprep.subr.mxu0 0.0
    %1130 = vmatpush1.xpose.msra.mxu0 0.0
    %1131 = vmatprep.mubr.f32.mxu0 0.0
    %1132 = vmatmul.mubr.f32.gmra.mrb[0].mxu0 %v1063
    %v1133 = vpop.f32.mrb[0].mxu0
    %v1134 = vadd.f32 0.0, %v1133
    %v1135 = vpop.f32.mrb[0].mxu0
    %1136 = vdwg.mxu0
    %1137 = vrot.lane.b32.xlu0 %v219, 112
    %v1138 = vpop.permute.xlu0 %1137
    %1139 = vrot.lane.b32.xlu0 %v219, 80
    %v1140 = vpop.permute.xlu0 %1139
    %v1141 = vsel %vm225, %v1138, 0
    %v1143 = vsel %vm225, %v1140, 0
    %1145 = vmatprep.subr.mxu0 0.0
    %1146 = vmatpush1.xpose.msra.mxu0 %v1143
    %1147 = vmatprep.subr.mxu0 0.0
    %1148 = vmatpush1.xpose.msra.mxu0 0.0
    %1149 = vmatprep.subr.mxu0 0.0
    %1150 = vmatpush1.xpose.msra.mxu0 0.0
    %1151 = vmatprep.subr.mxu0 0.0
    %1152 = vmatpush1.xpose.msra.mxu0 0.0
    %1153 = vmatprep.subr.mxu0 0.0
    %1154 = vmatpush1.xpose.msra.mxu0 0.0
    %1155 = vmatprep.subr.mxu0 0.0
    %1156 = vmatpush1.xpose.msra.mxu0 0.0
    %1157 = vmatprep.subr.mxu0 0.0
    %1158 = vmatpush1.xpose.msra.mxu0 0.0
    %1159 = vmatprep.subr.mxu0 0.0
    %1160 = vmatpush1.xpose.msra.mxu0 0.0
    %1161 = vmatprep.subr.mxu0 0.0
    %1162 = vmatpush1.xpose.msra.mxu0 0.0
    %1163 = vmatprep.subr.mxu0 0.0
    %1164 = vmatpush1.xpose.msra.mxu0 0.0
    %1165 = vmatprep.subr.mxu0 0.0
    %1166 = vmatpush1.xpose.msra.mxu0 0.0
    %1167 = vmatprep.subr.mxu0 0.0
    %1168 = vmatpush1.xpose.msra.mxu0 0.0
    %1169 = vmatprep.subr.mxu0 0.0
    %1170 = vmatpush1.xpose.msra.mxu0 0.0
    %1171 = vmatprep.subr.mxu0 0.0
    %1172 = vmatpush1.xpose.msra.mxu0 0.0
    %1173 = vmatprep.subr.mxu0 0.0
    %1174 = vmatpush1.xpose.msra.mxu0 0.0
    %1175 = vmatprep.subr.mxu0 0.0
    %1176 = vmatpush1.xpose.msra.mxu0 0.0
    %1177 = vmatprep.subr.mxu0 0.0
    %1178 = vmatpush1.xpose.msra.mxu0 0.0
    %1179 = vmatprep.subr.mxu0 0.0
    %1180 = vmatpush1.xpose.msra.mxu0 0.0
    %1181 = vmatprep.subr.mxu0 0.0
    %1182 = vmatpush1.xpose.msra.mxu0 0.0
    %1183 = vmatprep.subr.mxu0 0.0
    %1184 = vmatpush1.xpose.msra.mxu0 0.0
    %1185 = vmatprep.subr.mxu0 0.0
    %1186 = vmatpush1.xpose.msra.mxu0 0.0
    %1187 = vmatprep.subr.mxu0 0.0
    %1188 = vmatpush1.xpose.msra.mxu0 0.0
    %1189 = vmatprep.subr.mxu0 0.0
    %1190 = vmatpush1.xpose.msra.mxu0 0.0
    %1191 = vmatprep.subr.mxu0 0.0
    %1192 = vmatpush1.xpose.msra.mxu0 0.0
    %1193 = vmatprep.subr.mxu0 0.0
    %1194 = vmatpush1.xpose.msra.mxu0 0.0
    %1195 = vmatprep.subr.mxu0 0.0
    %1196 = vmatpush1.xpose.msra.mxu0 0.0
    %1197 = vmatprep.subr.mxu0 0.0
    %1198 = vmatpush1.xpose.msra.mxu0 0.0
    %1199 = vmatprep.subr.mxu0 0.0
    %1200 = vmatpush1.xpose.msra.mxu0 0.0
    %1201 = vmatprep.subr.mxu0 0.0
    %1202 = vmatpush1.xpose.msra.mxu0 0.0
    %1203 = vmatprep.subr.mxu0 0.0
    %1204 = vmatpush1.xpose.msra.mxu0 0.0
    %1205 = vmatprep.subr.mxu0 0.0
    %1206 = vmatpush1.xpose.msra.mxu0 0.0
    %1207 = vmatprep.subr.mxu0 0.0
    %1208 = vmatpush1.xpose.msra.mxu0 0.0
    %1209 = vmatprep.mubr.f32.mxu0 0.0
    %1210 = vmatmul.mubr.f32.gmra.mrb[0].mxu0 %v1141
    %v1211 = vpop.f32.mrb[0].mxu0
    %v1212 = vadd.f32 0.0, %v1211
    %v1213 = vpop.f32.mrb[0].mxu0
    %1214 = vdwg.mxu0
    %v1215 = vsel %vm225, %v1134, -inf
    %1216 = vmax.xlane.f32.xlu0 %v1215
    %v1217 = vpop.xlane.xlu0 %1216
    %v1218 = vsel %vm225, %v1212, -inf
    %1219 = vmax.xlane.f32.xlu0 %v1218
    %v1220 = vpop.xlane.xlu0 %1219
    %v1221 = vsub.f32 %v1134, %v1217
    %v1222 = vsub.f32 %v1212, %v1220
    %v1223 = vmul.f32 %v1221, 1.442695
    %v1224 = vpow.pop %v1223
    %v1225 = vmul.f32 %v1222, 1.442695
    %v1226 = vpow.pop %v1225
    %v1227 = vsel %vm225, %v1224, 0.0
    %1228 = vadd.xlane.f32.xlu0 %v1227
    %v1229 = vpop.xlane.xlu0 %1228
    %v1230 = vsel %vm225, %v1226, 0.0
    %1231 = vadd.xlane.f32.xlu0 %v1230
    %v1232 = vpop.xlane.xlu0 %1231
    %v1233 = vrcp.pop %v1229
    %v1234 = vrcp.pop %v1232
    %v1235 = vmul.f32 %v1224, %v1233
    %v1236 = vmul.f32 %v1226, %v1234
    %1237 = vrot.lane.b32.xlu0 %v214, 48
    %v1238 = vpop.permute.xlu0 %1237
    %v1241 = vsel %vm225, %v1235, 0
    %1243 = vmatprep.subr.mxu0 0.0
    %1244 = vmatpush1.msra.mxu0 %v1238
    %1245 = vmatprep.subr.mxu0 0.0
    %1246 = vmatpush1.msra.mxu0 0.0
    %1247 = vmatprep.subr.mxu0 0.0
    %1248 = vmatpush1.msra.mxu0 0.0
    %1249 = vmatprep.subr.mxu0 0.0
    %1250 = vmatpush1.msra.mxu0 0.0
    %1251 = vmatprep.subr.mxu0 0.0
    %1252 = vmatpush1.msra.mxu0 0.0
    %1253 = vmatprep.subr.mxu0 0.0
    %1254 = vmatpush1.msra.mxu0 0.0
    %1255 = vmatprep.subr.mxu0 0.0
    %1256 = vmatpush1.msra.mxu0 0.0
    %1257 = vmatprep.subr.mxu0 0.0
    %1258 = vmatpush1.msra.mxu0 0.0
    %1259 = vmatprep.subr.mxu0 0.0
    %1260 = vmatpush1.msra.mxu0 0.0
    %1261 = vmatprep.subr.mxu0 0.0
    %1262 = vmatpush1.msra.mxu0 0.0
    %1263 = vmatprep.subr.mxu0 0.0
    %1264 = vmatpush1.msra.mxu0 0.0
    %1265 = vmatprep.subr.mxu0 0.0
    %1266 = vmatpush1.msra.mxu0 0.0
    %1267 = vmatprep.subr.mxu0 0.0
    %1268 = vmatpush1.msra.mxu0 0.0
    %1269 = vmatprep.subr.mxu0 0.0
    %1270 = vmatpush1.msra.mxu0 0.0
    %1271 = vmatprep.subr.mxu0 0.0
    %1272 = vmatpush1.msra.mxu0 0.0
    %1273 = vmatprep.subr.mxu0 0.0
    %1274 = vmatpush1.msra.mxu0 0.0
    %1275 = vmatprep.subr.mxu0 0.0
    %1276 = vmatpush1.msra.mxu0 0.0
    %1277 = vmatprep.subr.mxu0 0.0
    %1278 = vmatpush1.msra.mxu0 0.0
    %1279 = vmatprep.subr.mxu0 0.0
    %1280 = vmatpush1.msra.mxu0 0.0
    %1281 = vmatprep.subr.mxu0 0.0
    %1282 = vmatpush1.msra.mxu0 0.0
    %1283 = vmatprep.subr.mxu0 0.0
    %1284 = vmatpush1.msra.mxu0 0.0
    %1285 = vmatprep.subr.mxu0 0.0
    %1286 = vmatpush1.msra.mxu0 0.0
    %1287 = vmatprep.subr.mxu0 0.0
    %1288 = vmatpush1.msra.mxu0 0.0
    %1289 = vmatprep.subr.mxu0 0.0
    %1290 = vmatpush1.msra.mxu0 0.0
    %1291 = vmatprep.subr.mxu0 0.0
    %1292 = vmatpush1.msra.mxu0 0.0
    %1293 = vmatprep.subr.mxu0 0.0
    %1294 = vmatpush1.msra.mxu0 0.0
    %1295 = vmatprep.subr.mxu0 0.0
    %1296 = vmatpush1.msra.mxu0 0.0
    %1297 = vmatprep.subr.mxu0 0.0
    %1298 = vmatpush1.msra.mxu0 0.0
    %1299 = vmatprep.subr.mxu0 0.0
    %1300 = vmatpush1.msra.mxu0 0.0
    %1301 = vmatprep.subr.mxu0 0.0
    %1302 = vmatpush1.msra.mxu0 0.0
    %1303 = vmatprep.subr.mxu0 0.0
    %1304 = vmatpush1.msra.mxu0 0.0
    %1305 = vmatprep.subr.mxu0 0.0
    %1306 = vmatpush1.msra.mxu0 0.0
    %1307 = vmatprep.mubr.f32.mxu0 0.0
    %1308 = vmatmul.mubr.f32.gmra.mrb[0].mxu0 %v1241
    %v1309 = vpop.f32.mrb[0].mxu0
    %v1310 = vadd.f32 0.0, %v1309
    %v1311 = vpop.f32.mrb[0].mxu0
    %1312 = vdwg.mxu0
    %1313 = vrot.lane.b32.xlu0 %v219, 48
    %v1314 = vpop.permute.xlu0 %1313
    %v1317 = vsel %vm225, %v1236, 0
    %1319 = vmatprep.subr.mxu0 0.0
    %1320 = vmatpush1.msra.mxu0 %v1314
    %1321 = vmatprep.subr.mxu0 0.0
    %1322 = vmatpush1.msra.mxu0 0.0
    %1323 = vmatprep.subr.mxu0 0.0
    %1324 = vmatpush1.msra.mxu0 0.0
    %1325 = vmatprep.subr.mxu0 0.0
    %1326 = vmatpush1.msra.mxu0 0.0
    %1327 = vmatprep.subr.mxu0 0.0
    %1328 = vmatpush1.msra.mxu0 0.0
    %1329 = vmatprep.subr.mxu0 0.0
    %1330 = vmatpush1.msra.mxu0 0.0
    %1331 = vmatprep.subr.mxu0 0.0
    %1332 = vmatpush1.msra.mxu0 0.0
    %1333 = vmatprep.subr.mxu0 0.0
    %1334 = vmatpush1.msra.mxu0 0.0
    %1335 = vmatprep.subr.mxu0 0.0
    %1336 = vmatpush1.msra.mxu0 0.0
    %1337 = vmatprep.subr.mxu0 0.0
    %1338 = vmatpush1.msra.mxu0 0.0
    %1339 = vmatprep.subr.mxu0 0.0
    %1340 = vmatpush1.msra.mxu0 0.0
    %1341 = vmatprep.subr.mxu0 0.0
    %1342 = vmatpush1.msra.mxu0 0.0
    %1343 = vmatprep.subr.mxu0 0.0
    %1344 = vmatpush1.msra.mxu0 0.0
    %1345 = vmatprep.subr.mxu0 0.0
    %1346 = vmatpush1.msra.mxu0 0.0
    %1347 = vmatprep.subr.mxu0 0.0
    %1348 = vmatpush1.msra.mxu0 0.0
    %1349 = vmatprep.subr.mxu0 0.0
    %1350 = vmatpush1.msra.mxu0 0.0
    %1351 = vmatprep.subr.mxu0 0.0
    %1352 = vmatpush1.msra.mxu0 0.0
    %1353 = vmatprep.subr.mxu0 0.0
    %1354 = vmatpush1.msra.mxu0 0.0
    %1355 = vmatprep.subr.mxu0 0.0
    %1356 = vmatpush1.msra.mxu0 0.0
    %1357 = vmatprep.subr.mxu0 0.0
    %1358 = vmatpush1.msra.mxu0 0.0
    %1359 = vmatprep.subr.mxu0 0.0
    %1360 = vmatpush1.msra.mxu0 0.0
    %1361 = vmatprep.subr.mxu0 0.0
    %1362 = vmatpush1.msra.mxu0 0.0
    %1363 = vmatprep.subr.mxu0 0.0
    %1364 = vmatpush1.msra.mxu0 0.0
    %1365 = vmatprep.subr.mxu0 0.0
    %1366 = vmatpush1.msra.mxu0 0.0
    %1367 = vmatprep.subr.mxu0 0.0
    %1368 = vmatpush1.msra.mxu0 0.0
    %1369 = vmatprep.subr.mxu0 0.0
    %1370 = vmatpush1.msra.mxu0 0.0
    %1371 = vmatprep.subr.mxu0 0.0
    %1372 = vmatpush1.msra.mxu0 0.0
    %1373 = vmatprep.subr.mxu0 0.0
    %1374 = vmatpush1.msra.mxu0 0.0
    %1375 = vmatprep.subr.mxu0 0.0
    %1376 = vmatpush1.msra.mxu0 0.0
    %1377 = vmatprep.subr.mxu0 0.0
    %1378 = vmatpush1.msra.mxu0 0.0
    %1379 = vmatprep.subr.mxu0 0.0
    %1380 = vmatpush1.msra.mxu0 0.0
    %1381 = vmatprep.subr.mxu0 0.0
    %1382 = vmatpush1.msra.mxu0 0.0
    %1383 = vmatprep.mubr.f32.mxu0 0.0
    %1384 = vmatmul.mubr.f32.gmra.mrb[0].mxu0 %v1317
    %v1385 = vpop.f32.mrb[0].mxu0
    %v1386 = vadd.f32 0.0, %v1385
    %v1387 = vpop.f32.mrb[0].mxu0
    %1388 = vdwg.mxu0
    %1390 = vrot.lane.b32.xlu0 %v121, 32
    %v1391 = vpop.permute.xlu0 %1390
    %v1394 = vsel %vm225, %v1310, 0
    %v1397 = vsel %vm225, %v1386, 0
    %1399 = vmatprep.subr.mxu0 0.0
    %1400 = vmatpush1.msra.mxu0 %v1391
    %1401 = vmatprep.subr.mxu0 0.0
    %1402 = vmatpush1.msra.mxu0 0.0
    %1403 = vmatprep.subr.mxu0 0.0
    %1404 = vmatpush1.msra.mxu0 0.0
    %1405 = vmatprep.subr.mxu0 0.0
    %1406 = vmatpush1.msra.mxu0 0.0
    %1407 = vmatprep.subr.mxu0 0.0
    %1408 = vmatpush1.msra.mxu0 0.0
    %1409 = vmatprep.subr.mxu0 0.0
    %1410 = vmatpush1.msra.mxu0 0.0
    %1411 = vmatprep.subr.mxu0 0.0
    %1412 = vmatpush1.msra.mxu0 0.0
    %1413 = vmatprep.subr.mxu0 0.0
    %1414 = vmatpush1.msra.mxu0 0.0
    %1415 = vmatprep.subr.mxu0 0.0
    %1416 = vmatpush1.msra.mxu0 0.0
    %1417 = vmatprep.subr.mxu0 0.0
    %1418 = vmatpush1.msra.mxu0 0.0
    %1419 = vmatprep.subr.mxu0 0.0
    %1420 = vmatpush1.msra.mxu0 0.0
    %1421 = vmatprep.subr.mxu0 0.0
    %1422 = vmatpush1.msra.mxu0 0.0
    %1423 = vmatprep.subr.mxu0 0.0
    %1424 = vmatpush1.msra.mxu0 0.0
    %1425 = vmatprep.subr.mxu0 0.0
    %1426 = vmatpush1.msra.mxu0 0.0
    %1427 = vmatprep.subr.mxu0 0.0
    %1428 = vmatpush1.msra.mxu0 0.0
    %1429 = vmatprep.subr.mxu0 0.0
    %1430 = vmatpush1.msra.mxu0 0.0
    %1431 = vmatprep.subr.mxu0 0.0
    %1432 = vmatpush1.msra.mxu0 0.0
    %1433 = vmatprep.subr.mxu0 0.0
    %1434 = vmatpush1.msra.mxu0 0.0
    %1435 = vmatprep.subr.mxu0 0.0
    %1436 = vmatpush1.msra.mxu0 0.0
    %1437 = vmatprep.subr.mxu0 0.0
    %1438 = vmatpush1.msra.mxu0 0.0
    %1439 = vmatprep.subr.mxu0 0.0
    %1440 = vmatpush1.msra.mxu0 0.0
    %1441 = vmatprep.subr.mxu0 0.0
    %1442 = vmatpush1.msra.mxu0 0.0
    %1443 = vmatprep.subr.mxu0 0.0
    %1444 = vmatpush1.msra.mxu0 0.0
    %1445 = vmatprep.subr.mxu0 0.0
    %1446 = vmatpush1.msra.mxu0 0.0
    %1447 = vmatprep.subr.mxu0 0.0
    %1448 = vmatpush1.msra.mxu0 0.0
    %1449 = vmatprep.subr.mxu0 0.0
    %1450 = vmatpush1.msra.mxu0 0.0
    %1451 = vmatprep.subr.mxu0 0.0
    %1452 = vmatpush1.msra.mxu0 0.0
    %1453 = vmatprep.subr.mxu0 0.0
    %1454 = vmatpush1.msra.mxu0 0.0
    %1455 = vmatprep.subr.mxu0 0.0
    %1456 = vmatpush1.msra.mxu0 0.0
    %1457 = vmatprep.subr.mxu0 0.0
    %1458 = vmatpush1.msra.mxu0 0.0
    %1459 = vmatprep.subr.mxu0 0.0
    %1460 = vmatpush1.msra.mxu0 0.0
    %1461 = vmatprep.subr.mxu0 0.0
    %1462 = vmatpush1.msra.mxu0 0.0
    %1463 = vmatprep.mubr.f32.mxu0 0.0
    %1464 = vmatmul.mubr.f32.gmra.mrb[0].mxu0 %v1394
    %v1465 = vpop.f32.mrb[0].mxu0
    %v1466 = vadd.f32 0.0, %v1465
    %v1467 = vpop.f32.mrb[0].mxu0
    %1468 = vmatprep.mubr.f32.mxu0 0.0
    %1469 = vmatmul.mubr.f32.gmra.mrb[0].mxu0 %v1397
    %v1470 = vpop.f32.mrb[0].mxu0
    %v1471 = vadd.f32 0.0, %v1470
    %v1472 = vpop.f32.mrb[0].mxu0
    %1473 = vdwg.mxu0
    %v1474 = vadd.f32 %v1057, %v1466
    %v1475 = vadd.f32 %v1058, %v1471
    %1476 = vrot.lane.b32.xlu0 %v214, 104
    %v1477 = vpop.permute.xlu0 %1476
    %1478 = vrot.lane.b32.xlu0 %v214, 72
    %v1479 = vpop.permute.xlu0 %1478
    %v1480 = vsel %vm225, %v1477, 0
    %v1482 = vsel %vm225, %v1479, 0
    %1484 = vmatprep.subr.mxu0 0.0
    %1485 = vmatpush1.xpose.msra.mxu0 %v1482
    %1486 = vmatprep.subr.mxu0 0.0
    %1487 = vmatpush1.xpose.msra.mxu0 0.0
    %1488 = vmatprep.subr.mxu0 0.0
    %1489 = vmatpush1.xpose.msra.mxu0 0.0
    %1490 = vmatprep.subr.mxu0 0.0
    %1491 = vmatpush1.xpose.msra.mxu0 0.0
    %1492 = vmatprep.subr.mxu0 0.0
    %1493 = vmatpush1.xpose.msra.mxu0 0.0
    %1494 = vmatprep.subr.mxu0 0.0
    %1495 = vmatpush1.xpose.msra.mxu0 0.0
    %1496 = vmatprep.subr.mxu0 0.0
    %1497 = vmatpush1.xpose.msra.mxu0 0.0
    %1498 = vmatprep.subr.mxu0 0.0
    %1499 = vmatpush1.xpose.msra.mxu0 0.0
    %1500 = vmatprep.subr.mxu0 0.0
    %1501 = vmatpush1.xpose.msra.mxu0 0.0
    %1502 = vmatprep.subr.mxu0 0.0
    %1503 = vmatpush1.xpose.msra.mxu0 0.0
    %1504 = vmatprep.subr.mxu0 0.0
    %1505 = vmatpush1.xpose.msra.mxu0 0.0
    %1506 = vmatprep.subr.mxu0 0.0
    %1507 = vmatpush1.xpose.msra.mxu0 0.0
    %1508 = vmatprep.subr.mxu0 0.0
    %1509 = vmatpush1.xpose.msra.mxu0 0.0
    %1510 = vmatprep.subr.mxu0 0.0
    %1511 = vmatpush1.xpose.msra.mxu0 0.0
    %1512 = vmatprep.subr.mxu0 0.0
    %1513 = vmatpush1.xpose.msra.mxu0 0.0
    %1514 = vmatprep.subr.mxu0 0.0
    %1515 = vmatpush1.xpose.msra.mxu0 0.0
    %1516 = vmatprep.subr.mxu0 0.0
    %1517 = vmatpush1.xpose.msra.mxu0 0.0
    %1518 = vmatprep.subr.mxu0 0.0
    %1519 = vmatpush1.xpose.msra.mxu0 0.0
    %1520 = vmatprep.subr.mxu0 0.0
    %1521 = vmatpush1.xpose.msra.mxu0 0.0
    %1522 = vmatprep.subr.mxu0 0.0
    %1523 = vmatpush1.xpose.msra.mxu0 0.0
    %1524 = vmatprep.subr.mxu0 0.0
    %1525 = vmatpush1.xpose.msra.mxu0 0.0
    %1526 = vmatprep.subr.mxu0 0.0
    %1527 = vmatpush1.xpose.msra.mxu0 0.0
    %1528 = vmatprep.subr.mxu0 0.0
    %1529 = vmatpush1.xpose.msra.mxu0 0.0
    %1530 = vmatprep.subr.mxu0 0.0
    %1531 = vmatpush1.xpose.msra.mxu0 0.0
    %1532 = vmatprep.subr.mxu0 0.0
    %1533 = vmatpush1.xpose.msra.mxu0 0.0
    %1534 = vmatprep.subr.mxu0 0.0
    %1535 = vmatpush1.xpose.msra.mxu0 0.0
    %1536 = vmatprep.subr.mxu0 0.0
    %1537 = vmatpush1.xpose.msra.mxu0 0.0
    %1538 = vmatprep.subr.mxu0 0.0
    %1539 = vmatpush1.xpose.msra.mxu0 0.0
    %1540 = vmatprep.subr.mxu0 0.0
    %1541 = vmatpush1.xpose.msra.mxu0 0.0
    %1542 = vmatprep.subr.mxu0 0.0
    %1543 = vmatpush1.xpose.msra.mxu0 0.0
    %1544 = vmatprep.subr.mxu0 0.0
    %1545 = vmatpush1.xpose.msra.mxu0 0.0
    %1546 = vmatprep.subr.mxu0 0.0
    %1547 = vmatpush1.xpose.msra.mxu0 0.0
    %1548 = vmatprep.mubr.f32.mxu0 0.0
    %1549 = vmatmul.mubr.f32.gmra.mrb[0].mxu0 %v1480
    %v1550 = vpop.f32.mrb[0].mxu0
    %v1551 = vadd.f32 0.0, %v1550
    %v1552 = vpop.f32.mrb[0].mxu0
    %1553 = vdwg.mxu0
    %1554 = vrot.lane.b32.xlu0 %v219, 104
    %v1555 = vpop.permute.xlu0 %1554
    %1556 = vrot.lane.b32.xlu0 %v219, 72
    %v1557 = vpop.permute.xlu0 %1556
    %v1558 = vsel %vm225, %v1555, 0
    %v1560 = vsel %vm225, %v1557, 0
    %1562 = vmatprep.subr.mxu0 0.0
    %1563 = vmatpush1.xpose.msra.mxu0 %v1560
    %1564 = vmatprep.subr.mxu0 0.0
    %1565 = vmatpush1.xpose.msra.mxu0 0.0
    %1566 = vmatprep.subr.mxu0 0.0
    %1567 = vmatpush1.xpose.msra.mxu0 0.0
    %1568 = vmatprep.subr.mxu0 0.0
    %1569 = vmatpush1.xpose.msra.mxu0 0.0
    %1570 = vmatprep.subr.mxu0 0.0
    %1571 = vmatpush1.xpose.msra.mxu0 0.0
    %1572 = vmatprep.subr.mxu0 0.0
    %1573 = vmatpush1.xpose.msra.mxu0 0.0
    %1574 = vmatprep.subr.mxu0 0.0
    %1575 = vmatpush1.xpose.msra.mxu0 0.0
    %1576 = vmatprep.subr.mxu0 0.0
    %1577 = vmatpush1.xpose.msra.mxu0 0.0
    %1578 = vmatprep.subr.mxu0 0.0
    %1579 = vmatpush1.xpose.msra.mxu0 0.0
    %1580 = vmatprep.subr.mxu0 0.0
    %1581 = vmatpush1.xpose.msra.mxu0 0.0
    %1582 = vmatprep.subr.mxu0 0.0
    %1583 = vmatpush1.xpose.msra.mxu0 0.0
    %1584 = vmatprep.subr.mxu0 0.0
    %1585 = vmatpush1.xpose.msra.mxu0 0.0
    %1586 = vmatprep.subr.mxu0 0.0
    %1587 = vmatpush1.xpose.msra.mxu0 0.0
    %1588 = vmatprep.subr.mxu0 0.0
    %1589 = vmatpush1.xpose.msra.mxu0 0.0
    %1590 = vmatprep.subr.mxu0 0.0
    %1591 = vmatpush1.xpose.msra.mxu0 0.0
    %1592 = vmatprep.subr.mxu0 0.0
    %1593 = vmatpush1.xpose.msra.mxu0 0.0
    %1594 = vmatprep.subr.mxu0 0.0
    %1595 = vmatpush1.xpose.msra.mxu0 0.0
    %1596 = vmatprep.subr.mxu0 0.0
    %1597 = vmatpush1.xpose.msra.mxu0 0.0
    %1598 = vmatprep.subr.mxu0 0.0
    %1599 = vmatpush1.xpose.msra.mxu0 0.0
    %1600 = vmatprep.subr.mxu0 0.0
    %1601 = vmatpush1.xpose.msra.mxu0 0.0
    %1602 = vmatprep.subr.mxu0 0.0
    %1603 = vmatpush1.xpose.msra.mxu0 0.0
    %1604 = vmatprep.subr.mxu0 0.0
    %1605 = vmatpush1.xpose.msra.mxu0 0.0
    %1606 = vmatprep.subr.mxu0 0.0
    %1607 = vmatpush1.xpose.msra.mxu0 0.0
    %1608 = vmatprep.subr.mxu0 0.0
    %1609 = vmatpush1.xpose.msra.mxu0 0.0
    %1610 = vmatprep.subr.mxu0 0.0
    %1611 = vmatpush1.xpose.msra.mxu0 0.0
    %1612 = vmatprep.subr.mxu0 0.0
    %1613 = vmatpush1.xpose.msra.mxu0 0.0
    %1614 = vmatprep.subr.mxu0 0.0
    %1615 = vmatpush1.xpose.msra.mxu0 0.0
    %1616 = vmatprep.subr.mxu0 0.0
    %1617 = vmatpush1.xpose.msra.mxu0 0.0
    %1618 = vmatprep.subr.mxu0 0.0
    %1619 = vmatpush1.xpose.msra.mxu0 0.0
    %1620 = vmatprep.subr.mxu0 0.0
    %1621 = vmatpush1.xpose.msra.mxu0 0.0
    %1622 = vmatprep.subr.mxu0 0.0
    %1623 = vmatpush1.xpose.msra.mxu0 0.0
    %1624 = vmatprep.subr.mxu0 0.0
    %1625 = vmatpush1.xpose.msra.mxu0 0.0
    %1626 = vmatprep.mubr.f32.mxu0 0.0
    %1627 = vmatmul.mubr.f32.gmra.mrb[0].mxu0 %v1558
    %v1628 = vpop.f32.mrb[0].mxu0
    %v1629 = vadd.f32 0.0, %v1628
    %v1630 = vpop.f32.mrb[0].mxu0
    %1631 = vdwg.mxu0
    %v1632 = vsel %vm225, %v1551, -inf
    %1633 = vmax.xlane.f32.xlu0 %v1632
    %v1634 = vpop.xlane.xlu0 %1633
    %v1635 = vsel %vm225, %v1629, -inf
    %1636 = vmax.xlane.f32.xlu0 %v1635
    %v1637 = vpop.xlane.xlu0 %1636
    %v1638 = vsub.f32 %v1551, %v1634
    %v1639 = vsub.f32 %v1629, %v1637
    %v1640 = vmul.f32 %v1638, 1.442695
    %v1641 = vpow.pop %v1640
    %v1642 = vmul.f32 %v1639, 1.442695
    %v1643 = vpow.pop %v1642
    %v1644 = vsel %vm225, %v1641, 0.0
    %1645 = vadd.xlane.f32.xlu0 %v1644
    %v1646 = vpop.xlane.xlu0 %1645
    %v1647 = vsel %vm225, %v1643, 0.0
    %1648 = vadd.xlane.f32.xlu0 %v1647
    %v1649 = vpop.xlane.xlu0 %1648
    %v1650 = vrcp.pop %v1646
    %v1651 = vrcp.pop %v1649
    %v1652 = vmul.f32 %v1641, %v1650
    %v1653 = vmul.f32 %v1643, %v1651
    %1654 = vrot.lane.b32.xlu0 %v214, 40
    %v1655 = vpop.permute.xlu0 %1654
    %v1658 = vsel %vm225, %v1652, 0
    %1660 = vmatprep.subr.mxu0 0.0
    %1661 = vmatpush1.msra.mxu0 %v1655
    %1662 = vmatprep.subr.mxu0 0.0
    %1663 = vmatpush1.msra.mxu0 0.0
    %1664 = vmatprep.subr.mxu0 0.0
    %1665 = vmatpush1.msra.mxu0 0.0
    %1666 = vmatprep.subr.mxu0 0.0
    %1667 = vmatpush1.msra.mxu0 0.0
    %1668 = vmatprep.subr.mxu0 0.0
    %1669 = vmatpush1.msra.mxu0 0.0
    %1670 = vmatprep.subr.mxu0 0.0
    %1671 = vmatpush1.msra.mxu0 0.0
    %1672 = vmatprep.subr.mxu0 0.0
    %1673 = vmatpush1.msra.mxu0 0.0
    %1674 = vmatprep.subr.mxu0 0.0
    %1675 = vmatpush1.msra.mxu0 0.0
    %1676 = vmatprep.subr.mxu0 0.0
    %1677 = vmatpush1.msra.mxu0 0.0
    %1678 = vmatprep.subr.mxu0 0.0
    %1679 = vmatpush1.msra.mxu0 0.0
    %1680 = vmatprep.subr.mxu0 0.0
    %1681 = vmatpush1.msra.mxu0 0.0
    %1682 = vmatprep.subr.mxu0 0.0
    %1683 = vmatpush1.msra.mxu0 0.0
    %1684 = vmatprep.subr.mxu0 0.0
    %1685 = vmatpush1.msra.mxu0 0.0
    %1686 = vmatprep.subr.mxu0 0.0
    %1687 = vmatpush1.msra.mxu0 0.0
    %1688 = vmatprep.subr.mxu0 0.0
    %1689 = vmatpush1.msra.mxu0 0.0
    %1690 = vmatprep.subr.mxu0 0.0
    %1691 = vmatpush1.msra.mxu0 0.0
    %1692 = vmatprep.subr.mxu0 0.0
    %1693 = vmatpush1.msra.mxu0 0.0
    %1694 = vmatprep.subr.mxu0 0.0
    %1695 = vmatpush1.msra.mxu0 0.0
    %1696 = vmatprep.subr.mxu0 0.0
    %1697 = vmatpush1.msra.mxu0 0.0
    %1698 = vmatprep.subr.mxu0 0.0
    %1699 = vmatpush1.msra.mxu0 0.0
    %1700 = vmatprep.subr.mxu0 0.0
    %1701 = vmatpush1.msra.mxu0 0.0
    %1702 = vmatprep.subr.mxu0 0.0
    %1703 = vmatpush1.msra.mxu0 0.0
    %1704 = vmatprep.subr.mxu0 0.0
    %1705 = vmatpush1.msra.mxu0 0.0
    %1706 = vmatprep.subr.mxu0 0.0
    %1707 = vmatpush1.msra.mxu0 0.0
    %1708 = vmatprep.subr.mxu0 0.0
    %1709 = vmatpush1.msra.mxu0 0.0
    %1710 = vmatprep.subr.mxu0 0.0
    %1711 = vmatpush1.msra.mxu0 0.0
    %1712 = vmatprep.subr.mxu0 0.0
    %1713 = vmatpush1.msra.mxu0 0.0
    %1714 = vmatprep.subr.mxu0 0.0
    %1715 = vmatpush1.msra.mxu0 0.0
    %1716 = vmatprep.subr.mxu0 0.0
    %1717 = vmatpush1.msra.mxu0 0.0
    %1718 = vmatprep.subr.mxu0 0.0
    %1719 = vmatpush1.msra.mxu0 0.0
    %1720 = vmatprep.subr.mxu0 0.0
    %1721 = vmatpush1.msra.mxu0 0.0
    %1722 = vmatprep.subr.mxu0 0.0
    %1723 = vmatpush1.msra.mxu0 0.0
    %1724 = vmatprep.mubr.f32.mxu0 0.0
    %1725 = vmatmul.mubr.f32.gmra.mrb[0].mxu0 %v1658
    %v1726 = vpop.f32.mrb[0].mxu0
    %v1727 = vadd.f32 0.0, %v1726
    %v1728 = vpop.f32.mrb[0].mxu0
    %1729 = vdwg.mxu0
    %1730 = vrot.lane.b32.xlu0 %v219, 40
    %v1731 = vpop.permute.xlu0 %1730
    %v1734 = vsel %vm225, %v1653, 0
    %1736 = vmatprep.subr.mxu0 0.0
    %1737 = vmatpush1.msra.mxu0 %v1731
    %1738 = vmatprep.subr.mxu0 0.0
    %1739 = vmatpush1.msra.mxu0 0.0
    %1740 = vmatprep.subr.mxu0 0.0
    %1741 = vmatpush1.msra.mxu0 0.0
    %1742 = vmatprep.subr.mxu0 0.0
    %1743 = vmatpush1.msra.mxu0 0.0
    %1744 = vmatprep.subr.mxu0 0.0
    %1745 = vmatpush1.msra.mxu0 0.0
    %1746 = vmatprep.subr.mxu0 0.0
    %1747 = vmatpush1.msra.mxu0 0.0
    %1748 = vmatprep.subr.mxu0 0.0
    %1749 = vmatpush1.msra.mxu0 0.0
    %1750 = vmatprep.subr.mxu0 0.0
    %1751 = vmatpush1.msra.mxu0 0.0
    %1752 = vmatprep.subr.mxu0 0.0
    %1753 = vmatpush1.msra.mxu0 0.0
    %1754 = vmatprep.subr.mxu0 0.0
    %1755 = vmatpush1.msra.mxu0 0.0
    %1756 = vmatprep.subr.mxu0 0.0
    %1757 = vmatpush1.msra.mxu0 0.0
    %1758 = vmatprep.subr.mxu0 0.0
    %1759 = vmatpush1.msra.mxu0 0.0
    %1760 = vmatprep.subr.mxu0 0.0
    %1761 = vmatpush1.msra.mxu0 0.0
    %1762 = vmatprep.subr.mxu0 0.0
    %1763 = vmatpush1.msra.mxu0 0.0
    %1764 = vmatprep.subr.mxu0 0.0
    %1765 = vmatpush1.msra.mxu0 0.0
    %1766 = vmatprep.subr.mxu0 0.0
    %1767 = vmatpush1.msra.mxu0 0.0
    %1768 = vmatprep.subr.mxu0 0.0
    %1769 = vmatpush1.msra.mxu0 0.0
    %1770 = vmatprep.subr.mxu0 0.0
    %1771 = vmatpush1.msra.mxu0 0.0
    %1772 = vmatprep.subr.mxu0 0.0
    %1773 = vmatpush1.msra.mxu0 0.0
    %1774 = vmatprep.subr.mxu0 0.0
    %1775 = vmatpush1.msra.mxu0 0.0
    %1776 = vmatprep.subr.mxu0 0.0
    %1777 = vmatpush1.msra.mxu0 0.0
    %1778 = vmatprep.subr.mxu0 0.0
    %1779 = vmatpush1.msra.mxu0 0.0
    %1780 = vmatprep.subr.mxu0 0.0
    %1781 = vmatpush1.msra.mxu0 0.0
    %1782 = vmatprep.subr.mxu0 0.0
    %1783 = vmatpush1.msra.mxu0 0.0
    %1784 = vmatprep.subr.mxu0 0.0
    %1785 = vmatpush1.msra.mxu0 0.0
    %1786 = vmatprep.subr.mxu0 0.0
    %1787 = vmatpush1.msra.mxu0 0.0
    %1788 = vmatprep.subr.mxu0 0.0
    %1789 = vmatpush1.msra.mxu0 0.0
    %1790 = vmatprep.subr.mxu0 0.0
    %1791 = vmatpush1.msra.mxu0 0.0
    %1792 = vmatprep.subr.mxu0 0.0
    %1793 = vmatpush1.msra.mxu0 0.0
    %1794 = vmatprep.subr.mxu0 0.0
    %1795 = vmatpush1.msra.mxu0 0.0
    %1796 = vmatprep.subr.mxu0 0.0
    %1797 = vmatpush1.msra.mxu0 0.0
    %1798 = vmatprep.subr.mxu0 0.0
    %1799 = vmatpush1.msra.mxu0 0.0
    %1800 = vmatprep.mubr.f32.mxu0 0.0
    %1801 = vmatmul.mubr.f32.gmra.mrb[0].mxu0 %v1734
    %v1802 = vpop.f32.mrb[0].mxu0
    %v1803 = vadd.f32 0.0, %v1802
    %v1804 = vpop.f32.mrb[0].mxu0
    %1805 = vdwg.mxu0
    %1807 = vrot.lane.b32.xlu0 %v122, 32
    %v1808 = vpop.permute.xlu0 %1807
    %v1811 = vsel %vm225, %v1727, 0
    %v1814 = vsel %vm225, %v1803, 0
    %1816 = vmatprep.subr.mxu0 0.0
    %1817 = vmatpush1.msra.mxu0 %v1808
    %1818 = vmatprep.subr.mxu0 0.0
    %1819 = vmatpush1.msra.mxu0 0.0
    %1820 = vmatprep.subr.mxu0 0.0
    %1821 = vmatpush1.msra.mxu0 0.0
    %1822 = vmatprep.subr.mxu0 0.0
    %1823 = vmatpush1.msra.mxu0 0.0
    %1824 = vmatprep.subr.mxu0 0.0
    %1825 = vmatpush1.msra.mxu0 0.0
    %1826 = vmatprep.subr.mxu0 0.0
    %1827 = vmatpush1.msra.mxu0 0.0
    %1828 = vmatprep.subr.mxu0 0.0
    %1829 = vmatpush1.msra.mxu0 0.0
    %1830 = vmatprep.subr.mxu0 0.0
    %1831 = vmatpush1.msra.mxu0 0.0
    %1832 = vmatprep.subr.mxu0 0.0
    %1833 = vmatpush1.msra.mxu0 0.0
    %1834 = vmatprep.subr.mxu0 0.0
    %1835 = vmatpush1.msra.mxu0 0.0
    %1836 = vmatprep.subr.mxu0 0.0
    %1837 = vmatpush1.msra.mxu0 0.0
    %1838 = vmatprep.subr.mxu0 0.0
    %1839 = vmatpush1.msra.mxu0 0.0
    %1840 = vmatprep.subr.mxu0 0.0
    %1841 = vmatpush1.msra.mxu0 0.0
    %1842 = vmatprep.subr.mxu0 0.0
    %1843 = vmatpush1.msra.mxu0 0.0
    %1844 = vmatprep.subr.mxu0 0.0
    %1845 = vmatpush1.msra.mxu0 0.0
    %1846 = vmatprep.subr.mxu0 0.0
    %1847 = vmatpush1.msra.mxu0 0.0
    %1848 = vmatprep.subr.mxu0 0.0
    %1849 = vmatpush1.msra.mxu0 0.0
    %1850 = vmatprep.subr.mxu0 0.0
    %1851 = vmatpush1.msra.mxu0 0.0
    %1852 = vmatprep.subr.mxu0 0.0
    %1853 = vmatpush1.msra.mxu0 0.0
    %1854 = vmatprep.subr.mxu0 0.0
    %1855 = vmatpush1.msra.mxu0 0.0
    %1856 = vmatprep.subr.mxu0 0.0
    %1857 = vmatpush1.msra.mxu0 0.0
    %1858 = vmatprep.subr.mxu0 0.0
    %1859 = vmatpush1.msra.mxu0 0.0
    %1860 = vmatprep.subr.mxu0 0.0
    %1861 = vmatpush1.msra.mxu0 0.0
    %1862 = vmatprep.subr.mxu0 0.0
    %1863 = vmatpush1.msra.mxu0 0.0
    %1864 = vmatprep.subr.mxu0 0.0
    %1865 = vmatpush1.msra.mxu0 0.0
    %1866 = vmatprep.subr.mxu0 0.0
    %1867 = vmatpush1.msra.mxu0 0.0
    %1868 = vmatprep.subr.mxu0 0.0
    %1869 = vmatpush1.msra.mxu0 0.0
    %1870 = vmatprep.subr.mxu0 0.0
    %1871 = vmatpush1.msra.mxu0 0.0
    %1872 = vmatprep.subr.mxu0 0.0
    %1873 = vmatpush1.msra.mxu0 0.0
    %1874 = vmatprep.subr.mxu0 0.0
    %1875 = vmatpush1.msra.mxu0 0.0
    %1876 = vmatprep.subr.mxu0 0.0
    %1877 = vmatpush1.msra.mxu0 0.0
    %1878 = vmatprep.subr.mxu0 0.0
    %1879 = vmatpush1.msra.mxu0 0.0
    %1880 = vmatprep.mubr.f32.mxu0 0.0
    %1881 = vmatmul.mubr.f32.gmra.mrb[0].mxu0 %v1811
    %v1882 = vpop.f32.mrb[0].mxu0
    %v1883 = vadd.f32 0.0, %v1882
    %v1884 = vpop.f32.mrb[0].mxu0
    %1885 = vmatprep.mubr.f32.mxu0 0.0
    %1886 = vmatmul.mubr.f32.gmra.mrb[0].mxu0 %v1814
    %v1887 = vpop.f32.mrb[0].mxu0
    %v1888 = vadd.f32 0.0, %v1887
    %v1889 = vpop.f32.mrb[0].mxu0
    %1890 = vdwg.mxu0
    %v1891 = vadd.f32 %v1474, %v1883
    %v1892 = vadd.f32 %v1475, %v1888
    %v1893 = vadd.f32 %v111, %v1891
    %v1894 = vadd.f32 %v116, %v1892
    %v1895 = vsel %vm140, %v1893, 0.0
    %1896 = vadd.xlane.f32.xlu0 %v1895
    %v1897 = vpop.xlane.xlu0 %1896
    %v1898 = vsel %vm140, %v1894, 0.0
    %1899 = vadd.xlane.f32.xlu0 %v1898
    %v1900 = vpop.xlane.xlu0 %1899
    %v1901 = vrcp.pop 32.0
    %v1902 = vmul.f32 %v1897, %v1901
    %v1903 = vmul.f32 %v1900, %v1901
    %v1904 = vsub.f32 %v1893, %v1902
    %v1905 = vsub.f32 %v1894, %v1903
    %v1906 = vmul.f32 %v1904, %v1904
    %v1907 = vmul.f32 %v1905, %v1905
    %v1908 = vsel %vm140, %v1906, 0.0
    %1909 = vadd.xlane.f32.xlu0 %v1908
    %v1910 = vpop.xlane.xlu0 %1909
    %v1911 = vsel %vm140, %v1907, 0.0
    %1912 = vadd.xlane.f32.xlu0 %v1911
    %v1913 = vpop.xlane.xlu0 %1912
    %v1914 = vmul.f32 %v1910, %v1901
    %v1915 = vmul.f32 %v1913, %v1901
    %v1916 = vadd.f32 %v1914, 1e-05
    %v1917 = vadd.f32 %v1915, 1e-05
    %v1918 = vrsqrt.pop %v1916
    %v1919 = vrsqrt.pop %v1917
    %v1920 = vmul.f32 %v1904, %v1918
    %v1921 = vmul.f32 %v1905, %v1919
    %v1922 = vlaneseq
    %v1923 = vshrl.u32 %v1922, 7
    %v1924 = vsub.s32 2, %v1923
    %v1925 = vrot.slane %v135, %v1924
    %v1926 = vmul.f32 %v1920, %v1925
    %v1927 = vmul.f32 %v1921, %v1925
    %v1928 = vlaneseq
    %v1929 = vshrl.u32 %v1928, 7
    %v1930 = vsub.s32 3, %v1929
    %v1931 = vrot.slane %v135, %v1930
    %v1932 = vadd.f32 %v1926, %v1931
    %v1933 = vadd.f32 %v1927, %v1931
    %v1934 = vlaneseq
    %v1935 = vshrl.u32 %v1934, 7
    %v1936 = vsub.s32 6, %v1935
    %v1937 = vrot.slane %v135, %v1936
    %v1939 = vsel %vm140, %v1932, 0
    %v1942 = vsel %vm140, %v1933, 0
    %1944 = vmatprep.subr.mxu0 0.0
    %1945 = vmatpush1.msra.mxu0 %v123
    %1946 = vmatprep.subr.mxu0 0.0
    %1947 = vmatpush1.msra.mxu0 %v124
    %1948 = vmatprep.subr.mxu0 0.0
    %1949 = vmatpush1.msra.mxu0 %v125
    %1950 = vmatprep.subr.mxu0 0.0
    %1951 = vmatpush1.msra.mxu0 %v126
    %1952 = vmatprep.subr.mxu0 0.0
    %1953 = vmatpush1.msra.mxu0 0.0
    %1954 = vmatprep.subr.mxu0 0.0
    %1955 = vmatpush1.msra.mxu0 0.0
    %1956 = vmatprep.subr.mxu0 0.0
    %1957 = vmatpush1.msra.mxu0 0.0
    %1958 = vmatprep.subr.mxu0 0.0
    %1959 = vmatpush1.msra.mxu0 0.0
    %1960 = vmatprep.subr.mxu0 0.0
    %1961 = vmatpush1.msra.mxu0 0.0
    %1962 = vmatprep.subr.mxu0 0.0
    %1963 = vmatpush1.msra.mxu0 0.0
    %1964 = vmatprep.subr.mxu0 0.0
    %1965 = vmatpush1.msra.mxu0 0.0
    %1966 = vmatprep.subr.mxu0 0.0
    %1967 = vmatpush1.msra.mxu0 0.0
    %1968 = vmatprep.subr.mxu0 0.0
    %1969 = vmatpush1.msra.mxu0 0.0
    %1970 = vmatprep.subr.mxu0 0.0
    %1971 = vmatpush1.msra.mxu0 0.0
    %1972 = vmatprep.subr.mxu0 0.0
    %1973 = vmatpush1.msra.mxu0 0.0
    %1974 = vmatprep.subr.mxu0 0.0
    %1975 = vmatpush1.msra.mxu0 0.0
    %1976 = vmatprep.subr.mxu0 0.0
    %1977 = vmatpush1.msra.mxu0 0.0
    %1978 = vmatprep.subr.mxu0 0.0
    %1979 = vmatpush1.msra.mxu0 0.0
    %1980 = vmatprep.subr.mxu0 0.0
    %1981 = vmatpush1.msra.mxu0 0.0
    %1982 = vmatprep.subr.mxu0 0.0
    %1983 = vmatpush1.msra.mxu0 0.0
    %1984 = vmatprep.subr.mxu0 0.0
    %1985 = vmatpush1.msra.mxu0 0.0
    %1986 = vmatprep.subr.mxu0 0.0
    %1987 = vmatpush1.msra.mxu0 0.0
    %1988 = vmatprep.subr.mxu0 0.0
    %1989 = vmatpush1.msra.mxu0 0.0
    %1990 = vmatprep.subr.mxu0 0.0
    %1991 = vmatpush1.msra.mxu0 0.0
    %1992 = vmatprep.subr.mxu0 0.0
    %1993 = vmatpush1.msra.mxu0 0.0
    %1994 = vmatprep.subr.mxu0 0.0
    %1995 = vmatpush1.msra.mxu0 0.0
    %1996 = vmatprep.subr.mxu0 0.0
    %1997 = vmatpush1.msra.mxu0 0.0
    %1998 = vmatprep.subr.mxu0 0.0
    %1999 = vmatpush1.msra.mxu0 0.0
    %2000 = vmatprep.subr.mxu0 0.0
    %2001 = vmatpush1.msra.mxu0 0.0
    %2002 = vmatprep.subr.mxu0 0.0
    %2003 = vmatpush1.msra.mxu0 0.0
    %2004 = vmatprep.subr.mxu0 0.0
    %2005 = vmatpush1.msra.mxu0 0.0
    %2006 = vmatprep.subr.mxu0 0.0
    %2007 = vmatpush1.msra.mxu0 0.0
    %2008 = vmatprep.mubr.f32.mxu0 0.0
    %2009 = vmatmul.mubr.f32.gmra.mrb[0].mxu0 %v1939
    %v2010 = vpop.f32.mrb[0].mxu0
    %v2011 = vadd.f32 %v1937, %v2010
    %v2012 = vpop.f32.mrb[0].mxu0
    %2013 = vmatprep.mubr.f32.mxu0 0.0
    %2014 = vmatmul.mubr.f32.gmra.mrb[0].mxu0 %v1942
    %v2015 = vpop.f32.mrb[0].mxu0
    %v2016 = vadd.f32 %v1937, %v2015
    %v2017 = vpop.f32.mrb[0].mxu0
    %2018 = vdwg.mxu0
    %v2019 = vmax.f32 %v2011, 0.0
    %v2020 = vmax.f32 %v2016, 0.0
    %v2021 = vlaneseq
    %v2022 = vshrl.u32 %v2021, 7
    %v2023 = vsub.s32 7, %v2022
    %v2024 = vrot.slane %v135, %v2023
    %v2026 = vsel %vm37, %v2019, 0
    %v2029 = vsel %vm37, %v2020, 0
    %2031 = vmatprep.subr.mxu0 0.0
    %2032 = vmatpush1.msra.mxu0 %v127
    %2033 = vmatprep.subr.mxu0 0.0
    %2034 = vmatpush1.msra.mxu0 %v128
    %2035 = vmatprep.subr.mxu0 0.0
    %2036 = vmatpush1.msra.mxu0 %v129
    %2037 = vmatprep.subr.mxu0 0.0
    %2038 = vmatpush1.msra.mxu0 %v130
    %2039 = vmatprep.subr.mxu0 0.0
    %2040 = vmatpush1.msra.mxu0 %v131
    %2041 = vmatprep.subr.mxu0 0.0
    %2042 = vmatpush1.msra.mxu0 %v132
    %2043 = vmatprep.subr.mxu0 0.0
    %2044 = vmatpush1.msra.mxu0 %v133
    %2045 = vmatprep.subr.mxu0 0.0
    %2046 = vmatpush1.msra.mxu0 %v134
    %2047 = vmatprep.subr.mxu0 0.0
    %2048 = vmatpush1.msra.mxu0 0.0
    %2049 = vmatprep.subr.mxu0 0.0
    %2050 = vmatpush1.msra.mxu0 0.0
    %2051 = vmatprep.subr.mxu0 0.0
    %2052 = vmatpush1.msra.mxu0 0.0
    %2053 = vmatprep.subr.mxu0 0.0
    %2054 = vmatpush1.msra.mxu0 0.0
    %2055 = vmatprep.subr.mxu0 0.0
    %2056 = vmatpush1.msra.mxu0 0.0
    %2057 = vmatprep.subr.mxu0 0.0
    %2058 = vmatpush1.msra.mxu0 0.0
    %2059 = vmatprep.subr.mxu0 0.0
    %2060 = vmatpush1.msra.mxu0 0.0
    %2061 = vmatprep.subr.mxu0 0.0
    %2062 = vmatpush1.msra.mxu0 0.0
    %2063 = vmatprep.subr.mxu0 0.0
    %2064 = vmatpush1.msra.mxu0 0.0
    %2065 = vmatprep.subr.mxu0 0.0
    %2066 = vmatpush1.msra.mxu0 0.0
    %2067 = vmatprep.subr.mxu0 0.0
    %2068 = vmatpush1.msra.mxu0 0.0
    %2069 = vmatprep.subr.mxu0 0.0
    %2070 = vmatpush1.msra.mxu0 0.0
    %2071 = vmatprep.subr.mxu0 0.0
    %2072 = vmatpush1.msra.mxu0 0.0
    %2073 = vmatprep.subr.mxu0 0.0
    %2074 = vmatpush1.msra.mxu0 0.0
    %2075 = vmatprep.subr.mxu0 0.0
    %2076 = vmatpush1.msra.mxu0 0.0
    %2077 = vmatprep.subr.mxu0 0.0
    %2078 = vmatpush1.msra.mxu0 0.0
    %2079 = vmatprep.subr.mxu0 0.0
    %2080 = vmatpush1.msra.mxu0 0.0
    %2081 = vmatprep.subr.mxu0 0.0
    %2082 = vmatpush1.msra.mxu0 0.0
    %2083 = vmatprep.subr.mxu0 0.0
    %2084 = vmatpush1.msra.mxu0 0.0
    %2085 = vmatprep.subr.mxu0 0.0
    %2086 = vmatpush1.msra.mxu0 0.0
    %2087 = vmatprep.subr.mxu0 0.0
    %2088 = vmatpush1.msra.mxu0 0.0
    %2089 = vmatprep.subr.mxu0 0.0
    %2090 = vmatpush1.msra.mxu0 0.0
    %2091 = vmatprep.subr.mxu0 0.0
    %2092 = vmatpush1.msra.mxu0 0.0
    %2093 = vmatprep.subr.mxu0 0.0
    %2094 = vmatpush1.msra.mxu0 0.0
    %2095 = vmatprep.mubr.f32.mxu0 0.0
    %2096 = vmatmul.mubr.f32.gmra.mrb[0].mxu0 %v2026
    %v2097 = vpop.f32.mrb[0].mxu0
    %v2098 = vadd.f32 %v2024, %v2097
    %v2099 = vpop.f32.mrb[0].mxu0
    %2100 = vmatprep.mubr.f32.mxu0 0.0
    %2101 = vmatmul.mubr.f32.gmra.mrb[0].mxu0 %v2029
    %v2102 = vpop.f32.mrb[0].mxu0
    %v2103 = vadd.f32 %v2024, %v2102
    %v2104 = vpop.f32.mrb[0].mxu0
    %2105 = vdwg.mxu0
    %v2106 = vadd.f32 %v1932, %v2098
    %v2107 = vadd.f32 %v1933, %v2103
    %v2108 = vsel %vm140, %v2106, 0.0
    %2109 = vadd.xlane.f32.xlu0 %v2108
    %v2110 = vpop.xlane.xlu0 %2109
    %v2111 = vsel %vm140, %v2107, 0.0
    %2112 = vadd.xlane.f32.xlu0 %v2111
    %v2113 = vpop.xlane.xlu0 %2112
    %v2114 = vmul.f32 %v2110, %v1901
    %v2115 = vmul.f32 %v2113, %v1901
    %v2116 = vsub.f32 %v2106, %v2114
    %v2117 = vsub.f32 %v2107, %v2115
    %v2118 = vmul.f32 %v2116, %v2116
    %v2119 = vmul.f32 %v2117, %v2117
    %v2120 = vsel %vm140, %v2118, 0.0
    %2121 = vadd.xlane.f32.xlu0 %v2120
    %v2122 = vpop.xlane.xlu0 %2121
    %v2123 = vsel %vm140, %v2119, 0.0
    %2124 = vadd.xlane.f32.xlu0 %v2123
    %v2125 = vpop.xlane.xlu0 %2124
    %v2126 = vmul.f32 %v2122, %v1901
    %v2127 = vmul.f32 %v2125, %v1901
    %v2128 = vadd.f32 %v2126, 1e-05
    %v2129 = vadd.f32 %v2127, 1e-05
    %v2130 = vrsqrt.pop %v2128
    %v2131 = vrsqrt.pop %v2129
    %v2132 = vmul.f32 %v2116, %v2130
    %v2133 = vmul.f32 %v2117, %v2131
    %v2134 = vlaneseq
    %v2135 = vshrl.u32 %v2134, 7
    %v2136 = vsub.s32 4, %v2135
    %v2137 = vrot.slane %v135, %v2136
    %v2138 = vmul.f32 %v2132, %v2137
    %v2139 = vmul.f32 %v2133, %v2137
    %v2140 = vlaneseq
    %v2141 = vshrl.u32 %v2140, 7
    %v2142 = vsub.s32 5, %v2141
    %v2143 = vrot.slane %v135, %v2142
    %v2144 = vadd.f32 %v2138, %v2143
    %v2145 = vadd.f32 %v2139, %v2143
    %v2146 = vld [vmem:[#allocation2 + $0x100] sm:$0xff]
    %v2147 = vld [vmem:[#allocation2 + $0x108] sm:$0xff]
    %v2148 = vld [vmem:[#allocation2 + $0x110] sm:$0xff]
    %v2149 = vld [vmem:[#allocation2 + $0x118] sm:$0xff]
    %v2150 = vld [vmem:[#allocation2 + $0x120] sm:$0xff]
    %v2151 = vld [vmem:[#allocation2 + $0x128] sm:$0xff]
    %v2152 = vld [vmem:[#allocation2 + $0x130] sm:$0xff]
    %v2153 = vld [vmem:[#allocation2 + $0x138] sm:$0xff]
    %v2154 = vld [vmem:[#allocation2 + $0x140] sm:$0xff]
    %v2155 = vld [vmem:[#allocation2 + $0x148] sm:$0xff]
    %v2156 = vld [vmem:[#allocation2 + $0x150] sm:$0xff]
    %v2157 = vld [vmem:[#allocation2 + $0x158] sm:$0xff]
    %v2158 = vld [vmem:[#allocation2 + $0x160] sm:$0xff]
    %v2159 = vld [vmem:[#allocation2 + $0x168] sm:$0xff]
    %v2160 = vld [vmem:[#allocation2 + $0x170] sm:$0xff]
    %v2161 = vld [vmem:[#allocation2 + $0x178] sm:$0xff]
    %v2162 = vld [vmem:[#allocation2 + $0x180] sm:$0xff]
    %v2163 = vlaneseq
    %v2164 = vshrl.u32 %v2163, 7
    %v2165 = vsub.s32 0, %v2164
    %v2166 = vrot.slane %v2162, %v2165
    %v2168 = vsel %vm140, %v2144, 0
    %v2171 = vsel %vm140, %v2145, 0
    %2173 = vmatprep.subr.mxu0 0.0
    %2174 = vmatpush1.msra.mxu0 %v2146
    %2175 = vmatprep.subr.mxu0 0.0
    %2176 = vmatpush1.msra.mxu0 %v2147
    %2177 = vmatprep.subr.mxu0 0.0
    %2178 = vmatpush1.msra.mxu0 %v2148
    %2179 = vmatprep.subr.mxu0 0.0
    %2180 = vmatpush1.msra.mxu0 %v2149
    %2181 = vmatprep.subr.mxu0 0.0
    %2182 = vmatpush1.msra.mxu0 0.0
    %2183 = vmatprep.subr.mxu0 0.0
    %2184 = vmatpush1.msra.mxu0 0.0
    %2185 = vmatprep.subr.mxu0 0.0
    %2186 = vmatpush1.msra.mxu0 0.0
    %2187 = vmatprep.subr.mxu0 0.0
    %2188 = vmatpush1.msra.mxu0 0.0
    %2189 = vmatprep.subr.mxu0 0.0
    %2190 = vmatpush1.msra.mxu0 0.0
    %2191 = vmatprep.subr.mxu0 0.0
    %2192 = vmatpush1.msra.mxu0 0.0
    %2193 = vmatprep.subr.mxu0 0.0
    %2194 = vmatpush1.msra.mxu0 0.0
    %2195 = vmatprep.subr.mxu0 0.0
    %2196 = vmatpush1.msra.mxu0 0.0
    %2197 = vmatprep.subr.mxu0 0.0
    %2198 = vmatpush1.msra.mxu0 0.0
    %2199 = vmatprep.subr.mxu0 0.0
    %2200 = vmatpush1.msra.mxu0 0.0
    %2201 = vmatprep.subr.mxu0 0.0
    %2202 = vmatpush1.msra.mxu0 0.0
    %2203 = vmatprep.subr.mxu0 0.0
    %2204 = vmatpush1.msra.mxu0 0.0
    %2205 = vmatprep.subr.mxu0 0.0
    %2206 = vmatpush1.msra.mxu0 0.0
    %2207 = vmatprep.subr.mxu0 0.0
    %2208 = vmatpush1.msra.mxu0 0.0
    %2209 = vmatprep.subr.mxu0 0.0
    %2210 = vmatpush1.msra.mxu0 0.0
    %2211 = vmatprep.subr.mxu0 0.0
    %2212 = vmatpush1.msra.mxu0 0.0
    %2213 = vmatprep.subr.mxu0 0.0
    %2214 = vmatpush1.msra.mxu0 0.0
    %2215 = vmatprep.subr.mxu0 0.0
    %2216 = vmatpush1.msra.mxu0 0.0
    %2217 = vmatprep.subr.mxu0 0.0
    %2218 = vmatpush1.msra.mxu0 0.0
    %2219 = vmatprep.subr.mxu0 0.0
    %2220 = vmatpush1.msra.mxu0 0.0
    %2221 = vmatprep.subr.mxu0 0.0
    %2222 = vmatpush1.msra.mxu0 0.0
    %2223 = vmatprep.subr.mxu0 0.0
    %2224 = vmatpush1.msra.mxu0 0.0
    %2225 = vmatprep.subr.mxu0 0.0
    %2226 = vmatpush1.msra.mxu0 0.0
    %2227 = vmatprep.subr.mxu0 0.0
    %2228 = vmatpush1.msra.mxu0 0.0
    %2229 = vmatprep.subr.mxu0 0.0
    %2230 = vmatpush1.msra.mxu0 0.0
    %2231 = vmatprep.subr.mxu0 0.0
    %2232 = vmatpush1.msra.mxu0 0.0
    %2233 = vmatprep.subr.mxu0 0.0
    %2234 = vmatpush1.msra.mxu0 0.0
    %2235 = vmatprep.subr.mxu0 0.0
    %2236 = vmatpush1.msra.mxu0 0.0
    %2237 = vmatprep.mubr.f32.mxu0 0.0
    %2238 = vmatmul.mubr.f32.gmra.mrb[0].mxu0 %v2168
    %v2239 = vpop.f32.mrb[0].mxu0
    %v2240 = vadd.f32 %v2166, %v2239
    %v2241 = vpop.f32.mrb[0].mxu0
    %2242 = vmatprep.mubr.f32.mxu0 0.0
    %2243 = vmatmul.mubr.f32.gmra.mrb[0].mxu0 %v2171
    %v2244 = vpop.f32.mrb[0].mxu0
    %v2245 = vadd.f32 %v2166, %v2244
    %v2246 = vpop.f32.mrb[0].mxu0
    %2247 = vdwg.mxu0
    %2249 = vrot.lane.b32.xlu0 %v2240, 96
    %v2250 = vpop.permute.xlu0 %2249
    %v2251 = vsel %vm225, %v2240, 0
    %v2253 = vsel %vm225, %v2250, 0
    %2255 = vmatprep.subr.mxu0 0.0
    %2256 = vmatpush1.xpose.msra.mxu0 %v2253
    %2257 = vmatprep.subr.mxu0 0.0
    %2258 = vmatpush1.xpose.msra.mxu0 0.0
    %2259 = vmatprep.subr.mxu0 0.0
    %2260 = vmatpush1.xpose.msra.mxu0 0.0
    %2261 = vmatprep.subr.mxu0 0.0
    %2262 = vmatpush1.xpose.msra.mxu0 0.0
    %2263 = vmatprep.subr.mxu0 0.0
    %2264 = vmatpush1.xpose.msra.mxu0 0.0
    %2265 = vmatprep.subr.mxu0 0.0
    %2266 = vmatpush1.xpose.msra.mxu0 0.0
    %2267 = vmatprep.subr.mxu0 0.0
    %2268 = vmatpush1.xpose.msra.mxu0 0.0
    %2269 = vmatprep.subr.mxu0 0.0
    %2270 = vmatpush1.xpose.msra.mxu0 0.0
    %2271 = vmatprep.subr.mxu0 0.0
    %2272 = vmatpush1.xpose.msra.mxu0 0.0
    %2273 = vmatprep.subr.mxu0 0.0
    %2274 = vmatpush1.xpose.msra.mxu0 0.0
    %2275 = vmatprep.subr.mxu0 0.0
    %2276 = vmatpush1.xpose.msra.mxu0 0.0
    %2277 = vmatprep.subr.mxu0 0.0
    %2278 = vmatpush1.xpose.msra.mxu0 0.0
    %2279 = vmatprep.subr.mxu0 0.0
    %2280 = vmatpush1.xpose.msra.mxu0 0.0
    %2281 = vmatprep.subr.mxu0 0.0
    %2282 = vmatpush1.xpose.msra.mxu0 0.0
    %2283 = vmatprep.subr.mxu0 0.0
    %2284 = vmatpush1.xpose.msra.mxu0 0.0
    %2285 = vmatprep.subr.mxu0 0.0
    %2286 = vmatpush1.xpose.msra.mxu0 0.0
    %2287 = vmatprep.subr.mxu0 0.0
    %2288 = vmatpush1.xpose.msra.mxu0 0.0
    %2289 = vmatprep.subr.mxu0 0.0
    %2290 = vmatpush1.xpose.msra.mxu0 0.0
    %2291 = vmatprep.subr.mxu0 0.0
    %2292 = vmatpush1.xpose.msra.mxu0 0.0
    %2293 = vmatprep.subr.mxu0 0.0
    %2294 = vmatpush1.xpose.msra.mxu0 0.0
    %2295 = vmatprep.subr.mxu0 0.0
    %2296 = vmatpush1.xpose.msra.mxu0 0.0
    %2297 = vmatprep.subr.mxu0 0.0
    %2298 = vmatpush1.xpose.msra.mxu0 0.0
    %2299 = vmatprep.subr.mxu0 0.0
    %2300 = vmatpush1.xpose.msra.mxu0 0.0
    %2301 = vmatprep.subr.mxu0 0.0
    %2302 = vmatpush1.xpose.msra.mxu0 0.0
    %2303 = vmatprep.subr.mxu0 0.0
    %2304 = vmatpush1.xpose.msra.mxu0 0.0
    %2305 = vmatprep.subr.mxu0 0.0
    %2306 = vmatpush1.xpose.msra.mxu0 0.0
    %2307 = vmatprep.subr.mxu0 0.0
    %2308 = vmatpush1.xpose.msra.mxu0 0.0
    %2309 = vmatprep.subr.mxu0 0.0
    %2310 = vmatpush1.xpose.msra.mxu0 0.0
    %2311 = vmatprep.subr.mxu0 0.0
    %2312 = vmatpush1.xpose.msra.mxu0 0.0
    %2313 = vmatprep.subr.mxu0 0.0
    %2314 = vmatpush1.xpose.msra.mxu0 0.0
    %2315 = vmatprep.subr.mxu0 0.0
    %2316 = vmatpush1.xpose.msra.mxu0 0.0
    %2317 = vmatprep.subr.mxu0 0.0
    %2318 = vmatpush1.xpose.msra.mxu0 0.0
    %2319 = vmatprep.mubr.f32.mxu0 0.0
    %2320 = vmatmul.mubr.f32.gmra.mrb[0].mxu0 %v2251
    %v2321 = vpop.f32.mrb[0].mxu0
    %v2322 = vadd.f32 0.0, %v2321
    %v2323 = vpop.f32.mrb[0].mxu0
    %2324 = vdwg.mxu0
    %2326 = vrot.lane.b32.xlu0 %v2245, 96
    %v2327 = vpop.permute.xlu0 %2326
    %v2328 = vsel %vm225, %v2245, 0
    %v2330 = vsel %vm225, %v2327, 0
    %2332 = vmatprep.subr.mxu0 0.0
    %2333 = vmatpush1.xpose.msra.mxu0 %v2330
    %2334 = vmatprep.subr.mxu0 0.0
    %2335 = vmatpush1.xpose.msra.mxu0 0.0
    %2336 = vmatprep.subr.mxu0 0.0
    %2337 = vmatpush1.xpose.msra.mxu0 0.0
    %2338 = vmatprep.subr.mxu0 0.0
    %2339 = vmatpush1.xpose.msra.mxu0 0.0
    %2340 = vmatprep.subr.mxu0 0.0
    %2341 = vmatpush1.xpose.msra.mxu0 0.0
    %2342 = vmatprep.subr.mxu0 0.0
    %2343 = vmatpush1.xpose.msra.mxu0 0.0
    %2344 = vmatprep.subr.mxu0 0.0
    %2345 = vmatpush1.xpose.msra.mxu0 0.0
    %2346 = vmatprep.subr.mxu0 0.0
    %2347 = vmatpush1.xpose.msra.mxu0 0.0
    %2348 = vmatprep.subr.mxu0 0.0
    %2349 = vmatpush1.xpose.msra.mxu0 0.0
    %2350 = vmatprep.subr.mxu0 0.0
    %2351 = vmatpush1.xpose.msra.mxu0 0.0
    %2352 = vmatprep.subr.mxu0 0.0
    %2353 = vmatpush1.xpose.msra.mxu0 0.0
    %2354 = vmatprep.subr.mxu0 0.0
    %2355 = vmatpush1.xpose.msra.mxu0 0.0
    %2356 = vmatprep.subr.mxu0 0.0
    %2357 = vmatpush1.xpose.msra.mxu0 0.0
    %2358 = vmatprep.subr.mxu0 0.0
    %2359 = vmatpush1.xpose.msra.mxu0 0.0
    %2360 = vmatprep.subr.mxu0 0.0
    %2361 = vmatpush1.xpose.msra.mxu0 0.0
    %2362 = vmatprep.subr.mxu0 0.0
    %2363 = vmatpush1.xpose.msra.mxu0 0.0
    %2364 = vmatprep.subr.mxu0 0.0
    %2365 = vmatpush1.xpose.msra.mxu0 0.0
    %2366 = vmatprep.subr.mxu0 0.0
    %2367 = vmatpush1.xpose.msra.mxu0 0.0
    %2368 = vmatprep.subr.mxu0 0.0
    %2369 = vmatpush1.xpose.msra.mxu0 0.0
    %2370 = vmatprep.subr.mxu0 0.0
    %2371 = vmatpush1.xpose.msra.mxu0 0.0
    %2372 = vmatprep.subr.mxu0 0.0
    %2373 = vmatpush1.xpose.msra.mxu0 0.0
    %2374 = vmatprep.subr.mxu0 0.0
    %2375 = vmatpush1.xpose.msra.mxu0 0.0
    %2376 = vmatprep.subr.mxu0 0.0
    %2377 = vmatpush1.xpose.msra.mxu0 0.0
    %2378 = vmatprep.subr.mxu0 0.0
    %2379 = vmatpush1.xpose.msra.mxu0 0.0
    %2380 = vmatprep.subr.mxu0 0.0
    %2381 = vmatpush1.xpose.msra.mxu0 0.0
    %2382 = vmatprep.subr.mxu0 0.0
    %2383 = vmatpush1.xpose.msra.mxu0 0.0
    %2384 = vmatprep.subr.mxu0 0.0
    %2385 = vmatpush1.xpose.msra.mxu0 0.0
    %2386 = vmatprep.subr.mxu0 0.0
    %2387 = vmatpush1.xpose.msra.mxu0 0.0
    %2388 = vmatprep.subr.mxu0 0.0
    %2389 = vmatpush1.xpose.msra.mxu0 0.0
    %2390 = vmatprep.subr.mxu0 0.0
    %2391 = vmatpush1.xpose.msra.mxu0 0.0
    %2392 = vmatprep.subr.mxu0 0.0
    %2393 = vmatpush1.xpose.msra.mxu0 0.0
    %2394 = vmatprep.subr.mxu0 0.0
    %2395 = vmatpush1.xpose.msra.mxu0 0.0
    %2396 = vmatprep.mubr.f32.mxu0 0.0
    %2397 = vmatmul.mubr.f32.gmra.mrb[0].mxu0 %v2328
    %v2398 = vpop.f32.mrb[0].mxu0
    %v2399 = vadd.f32 0.0, %v2398
    %v2400 = vpop.f32.mrb[0].mxu0
    %2401 = vdwg.mxu0
    %v2402 = vsel %vm225, %v2322, -inf
    %2403 = vmax.xlane.f32.xlu0 %v2402
    %v2404 = vpop.xlane.xlu0 %2403
    %v2405 = vsel %vm225, %v2399, -inf
    %2406 = vmax.xlane.f32.xlu0 %v2405
    %v2407 = vpop.xlane.xlu0 %2406
    %v2408 = vsub.f32 %v2322, %v2404
    %v2409 = vsub.f32 %v2399, %v2407
    %v2410 = vmul.f32 %v2408, 1.442695
    %v2411 = vpow.pop %v2410
    %v2412 = vmul.f32 %v2409, 1.442695
    %v2413 = vpow.pop %v2412
    %v2414 = vsel %vm225, %v2411, 0.0
    %2415 = vadd.xlane.f32.xlu0 %v2414
    %v2416 = vpop.xlane.xlu0 %2415
    %v2417 = vsel %vm225, %v2413, 0.0
    %2418 = vadd.xlane.f32.xlu0 %v2417
    %v2419 = vpop.xlane.xlu0 %2418
    %v2420 = vrcp.pop %v2416
    %v2421 = vrcp.pop %v2419
    %v2422 = vmul.f32 %v2411, %v2420
    %v2423 = vmul.f32 %v2413, %v2421
    %2424 = vrot.lane.b32.xlu0 %v2240, 64
    %v2425 = vpop.permute.xlu0 %2424
    %v2428 = vsel %vm225, %v2422, 0
    %2430 = vmatprep.subr.mxu0 0.0
    %2431 = vmatpush1.msra.mxu0 %v2425
    %2432 = vmatprep.subr.mxu0 0.0
    %2433 = vmatpush1.msra.mxu0 0.0
    %2434 = vmatprep.subr.mxu0 0.0
    %2435 = vmatpush1.msra.mxu0 0.0
    %2436 = vmatprep.subr.mxu0 0.0
    %2437 = vmatpush1.msra.mxu0 0.0
    %2438 = vmatprep.subr.mxu0 0.0
    %2439 = vmatpush1.msra.mxu0 0.0
    %2440 = vmatprep.subr.mxu0 0.0
    %2441 = vmatpush1.msra.mxu0 0.0
    %2442 = vmatprep.subr.mxu0 0.0
    %2443 = vmatpush1.msra.mxu0 0.0
    %2444 = vmatprep.subr.mxu0 0.0
    %2445 = vmatpush1.msra.mxu0 0.0
    %2446 = vmatprep.subr.mxu0 0.0
    %2447 = vmatpush1.msra.mxu0 0.0
    %2448 = vmatprep.subr.mxu0 0.0
    %2449 = vmatpush1.msra.mxu0 0.0
    %2450 = vmatprep.subr.mxu0 0.0
    %2451 = vmatpush1.msra.mxu0 0.0
    %2452 = vmatprep.subr.mxu0 0.0
    %2453 = vmatpush1.msra.mxu0 0.0
    %2454 = vmatprep.subr.mxu0 0.0
    %2455 = vmatpush1.msra.mxu0 0.0
    %2456 = vmatprep.subr.mxu0 0.0
    %2457 = vmatpush1.msra.mxu0 0.0
    %2458 = vmatprep.subr.mxu0 0.0
    %2459 = vmatpush1.msra.mxu0 0.0
    %2460 = vmatprep.subr.mxu0 0.0
    %2461 = vmatpush1.msra.mxu0 0.0
    %2462 = vmatprep.subr.mxu0 0.0
    %2463 = vmatpush1.msra.mxu0 0.0
    %2464 = vmatprep.subr.mxu0 0.0
    %2465 = vmatpush1.msra.mxu0 0.0
    %2466 = vmatprep.subr.mxu0 0.0
    %2467 = vmatpush1.msra.mxu0 0.0
    %2468 = vmatprep.subr.mxu0 0.0
    %2469 = vmatpush1.msra.mxu0 0.0
    %2470 = vmatprep.subr.mxu0 0.0
    %2471 = vmatpush1.msra.mxu0 0.0
    %2472 = vmatprep.subr.mxu0 0.0
    %2473 = vmatpush1.msra.mxu0 0.0
    %2474 = vmatprep.subr.mxu0 0.0
    %2475 = vmatpush1.msra.mxu0 0.0
    %2476 = vmatprep.subr.mxu0 0.0
    %2477 = vmatpush1.msra.mxu0 0.0
    %2478 = vmatprep.subr.mxu0 0.0
    %2479 = vmatpush1.msra.mxu0 0.0
    %2480 = vmatprep.subr.mxu0 0.0
    %2481 = vmatpush1.msra.mxu0 0.0
    %2482 = vmatprep.subr.mxu0 0.0
    %2483 = vmatpush1.msra.mxu0 0.0
    %2484 = vmatprep.subr.mxu0 0.0
    %2485 = vmatpush1.msra.mxu0 0.0
    %2486 = vmatprep.subr.mxu0 0.0
    %2487 = vmatpush1.msra.mxu0 0.0
    %2488 = vmatprep.subr.mxu0 0.0
    %2489 = vmatpush1.msra.mxu0 0.0
    %2490 = vmatprep.subr.mxu0 0.0
    %2491 = vmatpush1.msra.mxu0 0.0
    %2492 = vmatprep.subr.mxu0 0.0
    %2493 = vmatpush1.msra.mxu0 0.0
    %2494 = vmatprep.mubr.f32.mxu0 0.0
    %2495 = vmatmul.mubr.f32.gmra.mrb[0].mxu0 %v2428
    %v2496 = vpop.f32.mrb[0].mxu0
    %v2497 = vadd.f32 0.0, %v2496
    %v2498 = vpop.f32.mrb[0].mxu0
    %2499 = vdwg.mxu0
    %2500 = vrot.lane.b32.xlu0 %v2245, 64
    %v2501 = vpop.permute.xlu0 %2500
    %v2504 = vsel %vm225, %v2423, 0
    %2506 = vmatprep.subr.mxu0 0.0
    %2507 = vmatpush1.msra.mxu0 %v2501
    %2508 = vmatprep.subr.mxu0 0.0
    %2509 = vmatpush1.msra.mxu0 0.0
    %2510 = vmatprep.subr.mxu0 0.0
    %2511 = vmatpush1.msra.mxu0 0.0
    %2512 = vmatprep.subr.mxu0 0.0
    %2513 = vmatpush1.msra.mxu0 0.0
    %2514 = vmatprep.subr.mxu0 0.0
    %2515 = vmatpush1.msra.mxu0 0.0
    %2516 = vmatprep.subr.mxu0 0.0
    %2517 = vmatpush1.msra.mxu0 0.0
    %2518 = vmatprep.subr.mxu0 0.0
    %2519 = vmatpush1.msra.mxu0 0.0
    %2520 = vmatprep.subr.mxu0 0.0
    %2521 = vmatpush1.msra.mxu0 0.0
    %2522 = vmatprep.subr.mxu0 0.0
    %2523 = vmatpush1.msra.mxu0 0.0
    %2524 = vmatprep.subr.mxu0 0.0
    %2525 = vmatpush1.msra.mxu0 0.0
    %2526 = vmatprep.subr.mxu0 0.0
    %2527 = vmatpush1.msra.mxu0 0.0
    %2528 = vmatprep.subr.mxu0 0.0
    %2529 = vmatpush1.msra.mxu0 0.0
    %2530 = vmatprep.subr.mxu0 0.0
    %2531 = vmatpush1.msra.mxu0 0.0
    %2532 = vmatprep.subr.mxu0 0.0
    %2533 = vmatpush1.msra.mxu0 0.0
    %2534 = vmatprep.subr.mxu0 0.0
    %2535 = vmatpush1.msra.mxu0 0.0
    %2536 = vmatprep.subr.mxu0 0.0
    %2537 = vmatpush1.msra.mxu0 0.0
    %2538 = vmatprep.subr.mxu0 0.0
    %2539 = vmatpush1.msra.mxu0 0.0
    %2540 = vmatprep.subr.mxu0 0.0
    %2541 = vmatpush1.msra.mxu0 0.0
    %2542 = vmatprep.subr.mxu0 0.0
    %2543 = vmatpush1.msra.mxu0 0.0
    %2544 = vmatprep.subr.mxu0 0.0
    %2545 = vmatpush1.msra.mxu0 0.0
    %2546 = vmatprep.subr.mxu0 0.0
    %2547 = vmatpush1.msra.mxu0 0.0
    %2548 = vmatprep.subr.mxu0 0.0
    %2549 = vmatpush1.msra.mxu0 0.0
    %2550 = vmatprep.subr.mxu0 0.0
    %2551 = vmatpush1.msra.mxu0 0.0
    %2552 = vmatprep.subr.mxu0 0.0
    %2553 = vmatpush1.msra.mxu0 0.0
    %2554 = vmatprep.subr.mxu0 0.0
    %2555 = vmatpush1.msra.mxu0 0.0
    %2556 = vmatprep.subr.mxu0 0.0
    %2557 = vmatpush1.msra.mxu0 0.0
    %2558 = vmatprep.subr.mxu0 0.0
    %2559 = vmatpush1.msra.mxu0 0.0
    %2560 = vmatprep.subr.mxu0 0.0
    %2561 = vmatpush1.msra.mxu0 0.0
    %2562 = vmatprep.subr.mxu0 0.0
    %2563 = vmatpush1.msra.mxu0 0.0
    %2564 = vmatprep.subr.mxu0 0.0
    %2565 = vmatpush1.msra.mxu0 0.0
    %2566 = vmatprep.subr.mxu0 0.0
    %2567 = vmatpush1.msra.mxu0 0.0
    %2568 = vmatprep.subr.mxu0 0.0
    %2569 = vmatpush1.msra.mxu0 0.0
    %2570 = vmatprep.mubr.f32.mxu0 0.0
    %2571 = vmatmul.mubr.f32.gmra.mrb[0].mxu0 %v2504
    %v2572 = vpop.f32.mrb[0].mxu0
    %v2573 = vadd.f32 0.0, %v2572
    %v2574 = vpop.f32.mrb[0].mxu0
    %2575 = vdwg.mxu0
    %2577 = vrot.lane.b32.xlu0 %v2146, 32
    %v2578 = vpop.permute.xlu0 %2577
    %v2581 = vsel %vm225, %v2497, 0
    %v2584 = vsel %vm225, %v2573, 0
    %2586 = vmatprep.subr.mxu0 0.0
    %2587 = vmatpush1.msra.mxu0 %v2578
    %2588 = vmatprep.subr.mxu0 0.0
    %2589 = vmatpush1.msra.mxu0 0.0
    %2590 = vmatprep.subr.mxu0 0.0
    %2591 = vmatpush1.msra.mxu0 0.0
    %2592 = vmatprep.subr.mxu0 0.0
    %2593 = vmatpush1.msra.mxu0 0.0
    %2594 = vmatprep.subr.mxu0 0.0
    %2595 = vmatpush1.msra.mxu0 0.0
    %2596 = vmatprep.subr.mxu0 0.0
    %2597 = vmatpush1.msra.mxu0 0.0
    %2598 = vmatprep.subr.mxu0 0.0
    %2599 = vmatpush1.msra.mxu0 0.0
    %2600 = vmatprep.subr.mxu0 0.0
    %2601 = vmatpush1.msra.mxu0 0.0
    %2602 = vmatprep.subr.mxu0 0.0
    %2603 = vmatpush1.msra.mxu0 0.0
    %2604 = vmatprep.subr.mxu0 0.0
    %2605 = vmatpush1.msra.mxu0 0.0
    %2606 = vmatprep.subr.mxu0 0.0
    %2607 = vmatpush1.msra.mxu0 0.0
    %2608 = vmatprep.subr.mxu0 0.0
    %2609 = vmatpush1.msra.mxu0 0.0
    %2610 = vmatprep.subr.mxu0 0.0
    %2611 = vmatpush1.msra.mxu0 0.0
    %2612 = vmatprep.subr.mxu0 0.0
    %2613 = vmatpush1.msra.mxu0 0.0
    %2614 = vmatprep.subr.mxu0 0.0
    %2615 = vmatpush1.msra.mxu0 0.0
    %2616 = vmatprep.subr.mxu0 0.0
    %2617 = vmatpush1.msra.mxu0 0.0
    %2618 = vmatprep.subr.mxu0 0.0
    %2619 = vmatpush1.msra.mxu0 0.0
    %2620 = vmatprep.subr.mxu0 0.0
    %2621 = vmatpush1.msra.mxu0 0.0
    %2622 = vmatprep.subr.mxu0 0.0
    %2623 = vmatpush1.msra.mxu0 0.0
    %2624 = vmatprep.subr.mxu0 0.0
    %2625 = vmatpush1.msra.mxu0 0.0
    %2626 = vmatprep.subr.mxu0 0.0
    %2627 = vmatpush1.msra.mxu0 0.0
    %2628 = vmatprep.subr.mxu0 0.0
    %2629 = vmatpush1.msra.mxu0 0.0
    %2630 = vmatprep.subr.mxu0 0.0
    %2631 = vmatpush1.msra.mxu0 0.0
    %2632 = vmatprep.subr.mxu0 0.0
    %2633 = vmatpush1.msra.mxu0 0.0
    %2634 = vmatprep.subr.mxu0 0.0
    %2635 = vmatpush1.msra.mxu0 0.0
    %2636 = vmatprep.subr.mxu0 0.0
    %2637 = vmatpush1.msra.mxu0 0.0
    %2638 = vmatprep.subr.mxu0 0.0
    %2639 = vmatpush1.msra.mxu0 0.0
    %2640 = vmatprep.subr.mxu0 0.0
    %2641 = vmatpush1.msra.mxu0 0.0
    %2642 = vmatprep.subr.mxu0 0.0
    %2643 = vmatpush1.msra.mxu0 0.0
    %2644 = vmatprep.subr.mxu0 0.0
    %2645 = vmatpush1.msra.mxu0 0.0
    %2646 = vmatprep.subr.mxu0 0.0
    %2647 = vmatpush1.msra.mxu0 0.0
    %2648 = vmatprep.subr.mxu0 0.0
    %2649 = vmatpush1.msra.mxu0 0.0
    %2650 = vmatprep.mubr.f32.mxu0 0.0
    %2651 = vmatmul.mubr.f32.gmra.mrb[0].mxu0 %v2581
    %v2652 = vpop.f32.mrb[0].mxu0
    %v2653 = vadd.f32 0.0, %v2652
    %v2654 = vpop.f32.mrb[0].mxu0
    %2655 = vmatprep.mubr.f32.mxu0 0.0
    %2656 = vmatmul.mubr.f32.gmra.mrb[0].mxu0 %v2584
    %v2657 = vpop.f32.mrb[0].mxu0
    %v2658 = vadd.f32 0.0, %v2657
    %v2659 = vpop.f32.mrb[0].mxu0
    %2660 = vdwg.mxu0
    %v2661 = vlaneseq
    %v2662 = vshrl.u32 %v2661, 7
    %v2663 = vsub.s32 1, %v2662
    %v2664 = vrot.slane %v2162, %v2663
    %v2665 = vadd.f32 %v2664, %v2653
    %v2666 = vadd.f32 %v2664, %v2658
    %2667 = vrot.lane.b32.xlu0 %v2240, 120
    %v2668 = vpop.permute.xlu0 %2667
    %2669 = vrot.lane.b32.xlu0 %v2240, 88
    %v2670 = vpop.permute.xlu0 %2669
    %v2671 = vsel %vm225, %v2668, 0
    %v2673 = vsel %vm225, %v2670, 0
    %2675 = vmatprep.subr.mxu0 0.0
    %2676 = vmatpush1.xpose.msra.mxu0 %v2673
    %2677 = vmatprep.subr.mxu0 0.0
    %2678 = vmatpush1.xpose.msra.mxu0 0.0
    %2679 = vmatprep.subr.mxu0 0.0
    %2680 = vmatpush1.xpose.msra.mxu0 0.0
    %2681 = vmatprep.subr.mxu0 0.0
    %2682 = vmatpush1.xpose.msra.mxu0 0.0
    %2683 = vmatprep.subr.mxu0 0.0
    %2684 = vmatpush1.xpose.msra.mxu0 0.0
    %2685 = vmatprep.subr.mxu0 0.0
    %2686 = vmatpush1.xpose.msra.mxu0 0.0
    %2687 = vmatprep.subr.mxu0 0.0
    %2688 = vmatpush1.xpose.msra.mxu0 0.0
    %2689 = vmatprep.subr.mxu0 0.0
    %2690 = vmatpush1.xpose.msra.mxu0 0.0
    %2691 = vmatprep.subr.mxu0 0.0
    %2692 = vmatpush1.xpose.msra.mxu0 0.0
    %2693 = vmatprep.subr.mxu0 0.0
    %2694 = vmatpush1.xpose.msra.mxu0 0.0
    %2695 = vmatprep.subr.mxu0 0.0
    %2696 = vmatpush1.xpose.msra.mxu0 0.0
    %2697 = vmatprep.subr.mxu0 0.0
    %2698 = vmatpush1.xpose.msra.mxu0 0.0
    %2699 = vmatprep.subr.mxu0 0.0
    %2700 = vmatpush1.xpose.msra.mxu0 0.0
    %2701 = vmatprep.subr.mxu0 0.0
    %2702 = vmatpush1.xpose.msra.mxu0 0.0
    %2703 = vmatprep.subr.mxu0 0.0
    %2704 = vmatpush1.xpose.msra.mxu0 0.0
    %2705 = vmatprep.subr.mxu0 0.0
    %2706 = vmatpush1.xpose.msra.mxu0 0.0
    %2707 = vmatprep.subr.mxu0 0.0
    %2708 = vmatpush1.xpose.msra.mxu0 0.0
    %2709 = vmatprep.subr.mxu0 0.0
    %2710 = vmatpush1.xpose.msra.mxu0 0.0
    %2711 = vmatprep.subr.mxu0 0.0
    %2712 = vmatpush1.xpose.msra.mxu0 0.0
    %2713 = vmatprep.subr.mxu0 0.0
    %2714 = vmatpush1.xpose.msra.mxu0 0.0
    %2715 = vmatprep.subr.mxu0 0.0
    %2716 = vmatpush1.xpose.msra.mxu0 0.0
    %2717 = vmatprep.subr.mxu0 0.0
    %2718 = vmatpush1.xpose.msra.mxu0 0.0
    %2719 = vmatprep.subr.mxu0 0.0
    %2720 = vmatpush1.xpose.msra.mxu0 0.0
    %2721 = vmatprep.subr.mxu0 0.0
    %2722 = vmatpush1.xpose.msra.mxu0 0.0
    %2723 = vmatprep.subr.mxu0 0.0
    %2724 = vmatpush1.xpose.msra.mxu0 0.0
    %2725 = vmatprep.subr.mxu0 0.0
    %2726 = vmatpush1.xpose.msra.mxu0 0.0
    %2727 = vmatprep.subr.mxu0 0.0
    %2728 = vmatpush1.xpose.msra.mxu0 0.0
    %2729 = vmatprep.subr.mxu0 0.0
    %2730 = vmatpush1.xpose.msra.mxu0 0.0
    %2731 = vmatprep.subr.mxu0 0.0
    %2732 = vmatpush1.xpose.msra.mxu0 0.0
    %2733 = vmatprep.subr.mxu0 0.0
    %2734 = vmatpush1.xpose.msra.mxu0 0.0
    %2735 = vmatprep.subr.mxu0 0.0
    %2736 = vmatpush1.xpose.msra.mxu0 0.0
    %2737 = vmatprep.subr.mxu0 0.0
    %2738 = vmatpush1.xpose.msra.mxu0 0.0
    %2739 = vmatprep.mubr.f32.mxu0 0.0
    %2740 = vmatmul.mubr.f32.gmra.mrb[0].mxu0 %v2671
    %v2741 = vpop.f32.mrb[0].mxu0
    %v2742 = vadd.f32 0.0, %v2741
    %v2743 = vpop.f32.mrb[0].mxu0
    %2744 = vdwg.mxu0
    %2745 = vrot.lane.b32.xlu0 %v2245, 120
    %v2746 = vpop.permute.xlu0 %2745
    %2747 = vrot.lane.b32.xlu0 %v2245, 88
    %v2748 = vpop.permute.xlu0 %2747
    %v2749 = vsel %vm225, %v2746, 0
    %v2751 = vsel %vm225, %v2748, 0
    %2753 = vmatprep.subr.mxu0 0.0
    %2754 = vmatpush1.xpose.msra.mxu0 %v2751
    %2755 = vmatprep.subr.mxu0 0.0
    %2756 = vmatpush1.xpose.msra.mxu0 0.0
    %2757 = vmatprep.subr.mxu0 0.0
    %2758 = vmatpush1.xpose.msra.mxu0 0.0
    %2759 = vmatprep.subr.mxu0 0.0
    %2760 = vmatpush1.xpose.msra.mxu0 0.0
    %2761 = vmatprep.subr.mxu0 0.0
    %2762 = vmatpush1.xpose.msra.mxu0 0.0
    %2763 = vmatprep.subr.mxu0 0.0
    %2764 = vmatpush1.xpose.msra.mxu0 0.0
    %2765 = vmatprep.subr.mxu0 0.0
    %2766 = vmatpush1.xpose.msra.mxu0 0.0
    %2767 = vmatprep.subr.mxu0 0.0
    %2768 = vmatpush1.xpose.msra.mxu0 0.0
    %2769 = vmatprep.subr.mxu0 0.0
    %2770 = vmatpush1.xpose.msra.mxu0 0.0
    %2771 = vmatprep.subr.mxu0 0.0
    %2772 = vmatpush1.xpose.msra.mxu0 0.0
    %2773 = vmatprep.subr.mxu0 0.0
    %2774 = vmatpush1.xpose.msra.mxu0 0.0
    %2775 = vmatprep.subr.mxu0 0.0
    %2776 = vmatpush1.xpose.msra.mxu0 0.0
    %2777 = vmatprep.subr.mxu0 0.0
    %2778 = vmatpush1.xpose.msra.mxu0 0.0
    %2779 = vmatprep.subr.mxu0 0.0
    %2780 = vmatpush1.xpose.msra.mxu0 0.0
    %2781 = vmatprep.subr.mxu0 0.0
    %2782 = vmatpush1.xpose.msra.mxu0 0.0
    %2783 = vmatprep.subr.mxu0 0.0
    %2784 = vmatpush1.xpose.msra.mxu0 0.0
    %2785 = vmatprep.subr.mxu0 0.0
    %2786 = vmatpush1.xpose.msra.mxu0 0.0
    %2787 = vmatprep.subr.mxu0 0.0
    %2788 = vmatpush1.xpose.msra.mxu0 0.0
    %2789 = vmatprep.subr.mxu0 0.0
    %2790 = vmatpush1.xpose.msra.mxu0 0.0
    %2791 = vmatprep.subr.mxu0 0.0
    %2792 = vmatpush1.xpose.msra.mxu0 0.0
    %2793 = vmatprep.subr.mxu0 0.0
    %2794 = vmatpush1.xpose.msra.mxu0 0.0
    %2795 = vmatprep.subr.mxu0 0.0
    %2796 = vmatpush1.xpose.msra.mxu0 0.0
    %2797 = vmatprep.subr.mxu0 0.0
    %2798 = vmatpush1.xpose.msra.mxu0 0.0
    %2799 = vmatprep.subr.mxu0 0.0
    %2800 = vmatpush1.xpose.msra.mxu0 0.0
    %2801 = vmatprep.subr.mxu0 0.0
    %2802 = vmatpush1.xpose.msra.mxu0 0.0
    %2803 = vmatprep.subr.mxu0 0.0
    %2804 = vmatpush1.xpose.msra.mxu0 0.0
    %2805 = vmatprep.subr.mxu0 0.0
    %2806 = vmatpush1.xpose.msra.mxu0 0.0
    %2807 = vmatprep.subr.mxu0 0.0
    %2808 = vmatpush1.xpose.msra.mxu0 0.0
    %2809 = vmatprep.subr.mxu0 0.0
    %2810 = vmatpush1.xpose.msra.mxu0 0.0
    %2811 = vmatprep.subr.mxu0 0.0
    %2812 = vmatpush1.xpose.msra.mxu0 0.0
    %2813 = vmatprep.subr.mxu0 0.0
    %2814 = vmatpush1.xpose.msra.mxu0 0.0
    %2815 = vmatprep.subr.mxu0 0.0
    %2816 = vmatpush1.xpose.msra.mxu0 0.0
    %2817 = vmatprep.mubr.f32.mxu0 0.0
    %2818 = vmatmul.mubr.f32.gmra.mrb[0].mxu0 %v2749
    %v2819 = vpop.f32.mrb[0].mxu0
    %v2820 = vadd.f32 0.0, %v2819
    %v2821 = vpop.f32.mrb[0].mxu0
    %2822 = vdwg.mxu0
    %v2823 = vsel %vm225, %v2742, -inf
    %2824 = vmax.xlane.f32.xlu0 %v2823
    %v2825 = vpop.xlane.xlu0 %2824
    %v2826 = vsel %vm225, %v2820, -inf
    %2827 = vmax.xlane.f32.xlu0 %v2826
    %v2828 = vpop.xlane.xlu0 %2827
    %v2829 = vsub.f32 %v2742, %v2825
    %v2830 = vsub.f32 %v2820, %v2828
    %v2831 = vmul.f32 %v2829, 1.442695
    %v2832 = vpow.pop %v2831
    %v2833 = vmul.f32 %v2830, 1.442695
    %v2834 = vpow.pop %v2833
    %v2835 = vsel %vm225, %v2832, 0.0
    %2836 = vadd.xlane.f32.xlu0 %v2835
    %v2837 = vpop.xlane.xlu0 %2836
    %v2838 = vsel %vm225, %v2834, 0.0
    %2839 = vadd.xlane.f32.xlu0 %v2838
    %v2840 = vpop.xlane.xlu0 %2839
    %v2841 = vrcp.pop %v2837
    %v2842 = vrcp.pop %v2840
    %v2843 = vmul.f32 %v2832, %v2841
    %v2844 = vmul.f32 %v2834, %v2842
    %2845 = vrot.lane.b32.xlu0 %v2240, 56
    %v2846 = vpop.permute.xlu0 %2845
    %v2849 = vsel %vm225, %v2843, 0
    %2851 = vmatprep.subr.mxu0 0.0
    %2852 = vmatpush1.msra.mxu0 %v2846
    %2853 = vmatprep.subr.mxu0 0.0
    %2854 = vmatpush1.msra.mxu0 0.0
    %2855 = vmatprep.subr.mxu0 0.0
    %2856 = vmatpush1.msra.mxu0 0.0
    %2857 = vmatprep.subr.mxu0 0.0
    %2858 = vmatpush1.msra.mxu0 0.0
    %2859 = vmatprep.subr.mxu0 0.0
    %2860 = vmatpush1.msra.mxu0 0.0
    %2861 = vmatprep.subr.mxu0 0.0
    %2862 = vmatpush1.msra.mxu0 0.0
    %2863 = vmatprep.subr.mxu0 0.0
    %2864 = vmatpush1.msra.mxu0 0.0
    %2865 = vmatprep.subr.mxu0 0.0
    %2866 = vmatpush1.msra.mxu0 0.0
    %2867 = vmatprep.subr.mxu0 0.0
    %2868 = vmatpush1.msra.mxu0 0.0
    %2869 = vmatprep.subr.mxu0 0.0
    %2870 = vmatpush1.msra.mxu0 0.0
    %2871 = vmatprep.subr.mxu0 0.0
    %2872 = vmatpush1.msra.mxu0 0.0
    %2873 = vmatprep.subr.mxu0 0.0
    %2874 = vmatpush1.msra.mxu0 0.0
    %2875 = vmatprep.subr.mxu0 0.0
    %2876 = vmatpush1.msra.mxu0 0.0
    %2877 = vmatprep.subr.mxu0 0.0
    %2878 = vmatpush1.msra.mxu0 0.0
    %2879 = vmatprep.subr.mxu0 0.0
    %2880 = vmatpush1.msra.mxu0 0.0
    %2881 = vmatprep.subr.mxu0 0.0
    %2882 = vmatpush1.msra.mxu0 0.0
    %2883 = vmatprep.subr.mxu0 0.0
    %2884 = vmatpush1.msra.mxu0 0.0
    %2885 = vmatprep.subr.mxu0 0.0
    %2886 = vmatpush1.msra.mxu0 0.0
    %2887 = vmatprep.subr.mxu0 0.0
    %2888 = vmatpush1.msra.mxu0 0.0
    %2889 = vmatprep.subr.mxu0 0.0
    %2890 = vmatpush1.msra.mxu0 0.0
    %2891 = vmatprep.subr.mxu0 0.0
    %2892 = vmatpush1.msra.mxu0 0.0
    %2893 = vmatprep.subr.mxu0 0.0
    %2894 = vmatpush1.msra.mxu0 0.0
    %2895 = vmatprep.subr.mxu0 0.0
    %2896 = vmatpush1.msra.mxu0 0.0
    %2897 = vmatprep.subr.mxu0 0.0
    %2898 = vmatpush1.msra.mxu0 0.0
    %2899 = vmatprep.subr.mxu0 0.0
    %2900 = vmatpush1.msra.mxu0 0.0
    %2901 = vmatprep.subr.mxu0 0.0
    %2902 = vmatpush1.msra.mxu0 0.0
    %2903 = vmatprep.subr.mxu0 0.0
    %2904 = vmatpush1.msra.mxu0 0.0
    %2905 = vmatprep.subr.mxu0 0.0
    %2906 = vmatpush1.msra.mxu0 0.0
    %2907 = vmatprep.subr.mxu0 0.0
    %2908 = vmatpush1.msra.mxu0 0.0
    %2909 = vmatprep.subr.mxu0 0.0
    %2910 = vmatpush1.msra.mxu0 0.0
    %2911 = vmatprep.subr.mxu0 0.0
    %2912 = vmatpush1.msra.mxu0 0.0
    %2913 = vmatprep.subr.mxu0 0.0
    %2914 = vmatpush1.msra.mxu0 0.0
    %2915 = vmatprep.mubr.f32.mxu0 0.0
    %2916 = vmatmul.mubr.f32.gmra.mrb[0].mxu0 %v2849
    %v2917 = vpop.f32.mrb[0].mxu0
    %v2918 = vadd.f32 0.0, %v2917
    %v2919 = vpop.f32.mrb[0].mxu0
    %2920 = vdwg.mxu0
    %2921 = vrot.lane.b32.xlu0 %v2245, 56
    %v2922 = vpop.permute.xlu0 %2921
    %v2925 = vsel %vm225, %v2844, 0
    %2927 = vmatprep.subr.mxu0 0.0
    %2928 = vmatpush1.msra.mxu0 %v2922
    %2929 = vmatprep.subr.mxu0 0.0
    %2930 = vmatpush1.msra.mxu0 0.0
    %2931 = vmatprep.subr.mxu0 0.0
    %2932 = vmatpush1.msra.mxu0 0.0
    %2933 = vmatprep.subr.mxu0 0.0
    %2934 = vmatpush1.msra.mxu0 0.0
    %2935 = vmatprep.subr.mxu0 0.0
    %2936 = vmatpush1.msra.mxu0 0.0
    %2937 = vmatprep.subr.mxu0 0.0
    %2938 = vmatpush1.msra.mxu0 0.0
    %2939 = vmatprep.subr.mxu0 0.0
    %2940 = vmatpush1.msra.mxu0 0.0
    %2941 = vmatprep.subr.mxu0 0.0
    %2942 = vmatpush1.msra.mxu0 0.0
    %2943 = vmatprep.subr.mxu0 0.0
    %2944 = vmatpush1.msra.mxu0 0.0
    %2945 = vmatprep.subr.mxu0 0.0
    %2946 = vmatpush1.msra.mxu0 0.0
    %2947 = vmatprep.subr.mxu0 0.0
    %2948 = vmatpush1.msra.mxu0 0.0
    %2949 = vmatprep.subr.mxu0 0.0
    %2950 = vmatpush1.msra.mxu0 0.0
    %2951 = vmatprep.subr.mxu0 0.0
    %2952 = vmatpush1.msra.mxu0 0.0
    %2953 = vmatprep.subr.mxu0 0.0
    %2954 = vmatpush1.msra.mxu0 0.0
    %2955 = vmatprep.subr.mxu0 0.0
    %2956 = vmatpush1.msra.mxu0 0.0
    %2957 = vmatprep.subr.mxu0 0.0
    %2958 = vmatpush1.msra.mxu0 0.0
    %2959 = vmatprep.subr.mxu0 0.0
    %2960 = vmatpush1.msra.mxu0 0.0
    %2961 = vmatprep.subr.mxu0 0.0
    %2962 = vmatpush1.msra.mxu0 0.0
    %2963 = vmatprep.subr.mxu0 0.0
    %2964 = vmatpush1.msra.mxu0 0.0
    %2965 = vmatprep.subr.mxu0 0.0
    %2966 = vmatpush1.msra.mxu0 0.0
    %2967 = vmatprep.subr.mxu0 0.0
    %2968 = vmatpush1.msra.mxu0 0.0
    %2969 = vmatprep.subr.mxu0 0.0
    %2970 = vmatpush1.msra.mxu0 0.0
    %2971 = vmatprep.subr.mxu0 0.0
    %2972 = vmatpush1.msra.mxu0 0.0
    %2973 = vmatprep.subr.mxu0 0.0
    %2974 = vmatpush1.msra.mxu0 0.0
    %2975 = vmatprep.subr.mxu0 0.0
    %2976 = vmatpush1.msra.mxu0 0.0
    %2977 = vmatprep.subr.mxu0 0.0
    %2978 = vmatpush1.msra.mxu0 0.0
    %2979 = vmatprep.subr.mxu0 0.0
    %2980 = vmatpush1.msra.mxu0 0.0
    %2981 = vmatprep.subr.mxu0 0.0
    %2982 = vmatpush1.msra.mxu0 0.0
    %2983 = vmatprep.subr.mxu0 0.0
    %2984 = vmatpush1.msra.mxu0 0.0
    %2985 = vmatprep.subr.mxu0 0.0
    %2986 = vmatpush1.msra.mxu0 0.0
    %2987 = vmatprep.subr.mxu0 0.0
    %2988 = vmatpush1.msra.mxu0 0.0
    %2989 = vmatprep.subr.mxu0 0.0
    %2990 = vmatpush1.msra.mxu0 0.0
    %2991 = vmatprep.mubr.f32.mxu0 0.0
    %2992 = vmatmul.mubr.f32.gmra.mrb[0].mxu0 %v2925
    %v2993 = vpop.f32.mrb[0].mxu0
    %v2994 = vadd.f32 0.0, %v2993
    %v2995 = vpop.f32.mrb[0].mxu0
    %2996 = vdwg.mxu0
    %2998 = vrot.lane.b32.xlu0 %v2147, 32
    %v2999 = vpop.permute.xlu0 %2998
    %v3002 = vsel %vm225, %v2918, 0
    %v3005 = vsel %vm225, %v2994, 0
    %3007 = vmatprep.subr.mxu0 0.0
    %3008 = vmatpush1.msra.mxu0 %v2999
    %3009 = vmatprep.subr.mxu0 0.0
    %3010 = vmatpush1.msra.mxu0 0.0
    %3011 = vmatprep.subr.mxu0 0.0
    %3012 = vmatpush1.msra.mxu0 0.0
    %3013 = vmatprep.subr.mxu0 0.0
    %3014 = vmatpush1.msra.mxu0 0.0
    %3015 = vmatprep.subr.mxu0 0.0
    %3016 = vmatpush1.msra.mxu0 0.0
    %3017 = vmatprep.subr.mxu0 0.0
    %3018 = vmatpush1.msra.mxu0 0.0
    %3019 = vmatprep.subr.mxu0 0.0
    %3020 = vmatpush1.msra.mxu0 0.0
    %3021 = vmatprep.subr.mxu0 0.0
    %3022 = vmatpush1.msra.mxu0 0.0
    %3023 = vmatprep.subr.mxu0 0.0
    %3024 = vmatpush1.msra.mxu0 0.0
    %3025 = vmatprep.subr.mxu0 0.0
    %3026 = vmatpush1.msra.mxu0 0.0
    %3027 = vmatprep.subr.mxu0 0.0
    %3028 = vmatpush1.msra.mxu0 0.0
    %3029 = vmatprep.subr.mxu0 0.0
    %3030 = vmatpush1.msra.mxu0 0.0
    %3031 = vmatprep.subr.mxu0 0.0
    %3032 = vmatpush1.msra.mxu0 0.0
    %3033 = vmatprep.subr.mxu0 0.0
    %3034 = vmatpush1.msra.mxu0 0.0
    %3035 = vmatprep.subr.mxu0 0.0
    %3036 = vmatpush1.msra.mxu0 0.0
    %3037 = vmatprep.subr.mxu0 0.0
    %3038 = vmatpush1.msra.mxu0 0.0
    %3039 = vmatprep.subr.mxu0 0.0
    %3040 = vmatpush1.msra.mxu0 0.0
    %3041 = vmatprep.subr.mxu0 0.0
    %3042 = vmatpush1.msra.mxu0 0.0
    %3043 = vmatprep.subr.mxu0 0.0
    %3044 = vmatpush1.msra.mxu0 0.0
    %3045 = vmatprep.subr.mxu0 0.0
    %3046 = vmatpush1.msra.mxu0 0.0
    %3047 = vmatprep.subr.mxu0 0.0
    %3048 = vmatpush1.msra.mxu0 0.0
    %3049 = vmatprep.subr.mxu0 0.0
    %3050 = vmatpush1.msra.mxu0 0.0
    %3051 = vmatprep.subr.mxu0 0.0
    %3052 = vmatpush1.msra.mxu0 0.0
    %3053 = vmatprep.subr.mxu0 0.0
    %3054 = vmatpush1.msra.mxu0 0.0
    %3055 = vmatprep.subr.mxu0 0.0
    %3056 = vmatpush1.msra.mxu0 0.0
    %3057 = vmatprep.subr.mxu0 0.0
    %3058 = vmatpush1.msra.mxu0 0.0
    %3059 = vmatprep.subr.mxu0 0.0
    %3060 = vmatpush1.msra.mxu0 0.0
    %3061 = vmatprep.subr.mxu0 0.0
    %3062 = vmatpush1.msra.mxu0 0.0
    %3063 = vmatprep.subr.mxu0 0.0
    %3064 = vmatpush1.msra.mxu0 0.0
    %3065 = vmatprep.subr.mxu0 0.0
    %3066 = vmatpush1.msra.mxu0 0.0
    %3067 = vmatprep.subr.mxu0 0.0
    %3068 = vmatpush1.msra.mxu0 0.0
    %3069 = vmatprep.subr.mxu0 0.0
    %3070 = vmatpush1.msra.mxu0 0.0
    %3071 = vmatprep.mubr.f32.mxu0 0.0
    %3072 = vmatmul.mubr.f32.gmra.mrb[0].mxu0 %v3002
    %v3073 = vpop.f32.mrb[0].mxu0
    %v3074 = vadd.f32 0.0, %v3073
    %v3075 = vpop.f32.mrb[0].mxu0
    %3076 = vmatprep.mubr.f32.mxu0 0.0
    %3077 = vmatmul.mubr.f32.gmra.mrb[0].mxu0 %v3005
    %v3078 = vpop.f32.mrb[0].mxu0
    %v3079 = vadd.f32 0.0, %v3078
    %v3080 = vpop.f32.mrb[0].mxu0
    %3081 = vdwg.mxu0
    %v3082 = vadd.f32 %v2665, %v3074
    %v3083 = vadd.f32 %v2666, %v3079
    %3084 = vrot.lane.b32.xlu0 %v2240, 112
    %v3085 = vpop.permute.xlu0 %3084
    %3086 = vrot.lane.b32.xlu0 %v2240, 80
    %v3087 = vpop.permute.xlu0 %3086
    %v3088 = vsel %vm225, %v3085, 0
    %v3090 = vsel %vm225, %v3087, 0
    %3092 = vmatprep.subr.mxu0 0.0
    %3093 = vmatpush1.xpose.msra.mxu0 %v3090
    %3094 = vmatprep.subr.mxu0 0.0
    %3095 = vmatpush1.xpose.msra.mxu0 0.0
    %3096 = vmatprep.subr.mxu0 0.0
    %3097 = vmatpush1.xpose.msra.mxu0 0.0
    %3098 = vmatprep.subr.mxu0 0.0
    %3099 = vmatpush1.xpose.msra.mxu0 0.0
    %3100 = vmatprep.subr.mxu0 0.0
    %3101 = vmatpush1.xpose.msra.mxu0 0.0
    %3102 = vmatprep.subr.mxu0 0.0
    %3103 = vmatpush1.xpose.msra.mxu0 0.0
    %3104 = vmatprep.subr.mxu0 0.0
    %3105 = vmatpush1.xpose.msra.mxu0 0.0
    %3106 = vmatprep.subr.mxu0 0.0
    %3107 = vmatpush1.xpose.msra.mxu0 0.0
    %3108 = vmatprep.subr.mxu0 0.0
    %3109 = vmatpush1.xpose.msra.mxu0 0.0
    %3110 = vmatprep.subr.mxu0 0.0
    %3111 = vmatpush1.xpose.msra.mxu0 0.0
    %3112 = vmatprep.subr.mxu0 0.0
    %3113 = vmatpush1.xpose.msra.mxu0 0.0
    %3114 = vmatprep.subr.mxu0 0.0
    %3115 = vmatpush1.xpose.msra.mxu0 0.0
    %3116 = vmatprep.subr.mxu0 0.0
    %3117 = vmatpush1.xpose.msra.mxu0 0.0
    %3118 = vmatprep.subr.mxu0 0.0
    %3119 = vmatpush1.xpose.msra.mxu0 0.0
    %3120 = vmatprep.subr.mxu0 0.0
    %3121 = vmatpush1.xpose.msra.mxu0 0.0
    %3122 = vmatprep.subr.mxu0 0.0
    %3123 = vmatpush1.xpose.msra.mxu0 0.0
    %3124 = vmatprep.subr.mxu0 0.0
    %3125 = vmatpush1.xpose.msra.mxu0 0.0
    %3126 = vmatprep.subr.mxu0 0.0
    %3127 = vmatpush1.xpose.msra.mxu0 0.0
    %3128 = vmatprep.subr.mxu0 0.0
    %3129 = vmatpush1.xpose.msra.mxu0 0.0
    %3130 = vmatprep.subr.mxu0 0.0
    %3131 = vmatpush1.xpose.msra.mxu0 0.0
    %3132 = vmatprep.subr.mxu0 0.0
    %3133 = vmatpush1.xpose.msra.mxu0 0.0
    %3134 = vmatprep.subr.mxu0 0.0
    %3135 = vmatpush1.xpose.msra.mxu0 0.0
    %3136 = vmatprep.subr.mxu0 0.0
    %3137 = vmatpush1.xpose.msra.mxu0 0.0
    %3138 = vmatprep.subr.mxu0 0.0
    %3139 = vmatpush1.xpose.msra.mxu0 0.0
    %3140 = vmatprep.subr.mxu0 0.0
    %3141 = vmatpush1.xpose.msra.mxu0 0.0
    %3142 = vmatprep.subr.mxu0 0.0
    %3143 = vmatpush1.xpose.msra.mxu0 0.0
    %3144 = vmatprep.subr.mxu0 0.0
    %3145 = vmatpush1.xpose.msra.mxu0 0.0
    %3146 = vmatprep.subr.mxu0 0.0
    %3147 = vmatpush1.xpose.msra.mxu0 0.0
    %3148 = vmatprep.subr.mxu0 0.0
    %3149 = vmatpush1.xpose.msra.mxu0 0.0
    %3150 = vmatprep.subr.mxu0 0.0
    %3151 = vmatpush1.xpose.msra.mxu0 0.0
    %3152 = vmatprep.subr.mxu0 0.0
    %3153 = vmatpush1.xpose.msra.mxu0 0.0
    %3154 = vmatprep.subr.mxu0 0.0
    %3155 = vmatpush1.xpose.msra.mxu0 0.0
    %3156 = vmatprep.mubr.f32.mxu0 0.0
    %3157 = vmatmul.mubr.f32.gmra.mrb[0].mxu0 %v3088
    %v3158 = vpop.f32.mrb[0].mxu0
    %v3159 = vadd.f32 0.0, %v3158
    %v3160 = vpop.f32.mrb[0].mxu0
    %3161 = vdwg.mxu0
    %3162 = vrot.lane.b32.xlu0 %v2245, 112
    %v3163 = vpop.permute.xlu0 %3162
    %3164 = vrot.lane.b32.xlu0 %v2245, 80
    %v3165 = vpop.permute.xlu0 %3164
    %v3166 = vsel %vm225, %v3163, 0
    %v3168 = vsel %vm225, %v3165, 0
    %3170 = vmatprep.subr.mxu0 0.0
    %3171 = vmatpush1.xpose.msra.mxu0 %v3168
    %3172 = vmatprep.subr.mxu0 0.0
    %3173 = vmatpush1.xpose.msra.mxu0 0.0
    %3174 = vmatprep.subr.mxu0 0.0
    %3175 = vmatpush1.xpose.msra.mxu0 0.0
    %3176 = vmatprep.subr.mxu0 0.0
    %3177 = vmatpush1.xpose.msra.mxu0 0.0
    %3178 = vmatprep.subr.mxu0 0.0
    %3179 = vmatpush1.xpose.msra.mxu0 0.0
    %3180 = vmatprep.subr.mxu0 0.0
    %3181 = vmatpush1.xpose.msra.mxu0 0.0
    %3182 = vmatprep.subr.mxu0 0.0
    %3183 = vmatpush1.xpose.msra.mxu0 0.0
    %3184 = vmatprep.subr.mxu0 0.0
    %3185 = vmatpush1.xpose.msra.mxu0 0.0
    %3186 = vmatprep.subr.mxu0 0.0
    %3187 = vmatpush1.xpose.msra.mxu0 0.0
    %3188 = vmatprep.subr.mxu0 0.0
    %3189 = vmatpush1.xpose.msra.mxu0 0.0
    %3190 = vmatprep.subr.mxu0 0.0
    %3191 = vmatpush1.xpose.msra.mxu0 0.0
    %3192 = vmatprep.subr.mxu0 0.0
    %3193 = vmatpush1.xpose.msra.mxu0 0.0
    %3194 = vmatprep.subr.mxu0 0.0
    %3195 = vmatpush1.xpose.msra.mxu0 0.0
    %3196 = vmatprep.subr.mxu0 0.0
    %3197 = vmatpush1.xpose.msra.mxu0 0.0
    %3198 = vmatprep.subr.mxu0 0.0
    %3199 = vmatpush1.xpose.msra.mxu0 0.0
    %3200 = vmatprep.subr.mxu0 0.0
    %3201 = vmatpush1.xpose.msra.mxu0 0.0
    %3202 = vmatprep.subr.mxu0 0.0
    %3203 = vmatpush1.xpose.msra.mxu0 0.0
    %3204 = vmatprep.subr.mxu0 0.0
    %3205 = vmatpush1.xpose.msra.mxu0 0.0
    %3206 = vmatprep.subr.mxu0 0.0
    %3207 = vmatpush1.xpose.msra.mxu0 0.0
    %3208 = vmatprep.subr.mxu0 0.0
    %3209 = vmatpush1.xpose.msra.mxu0 0.0
    %3210 = vmatprep.subr.mxu0 0.0
    %3211 = vmatpush1.xpose.msra.mxu0 0.0
    %3212 = vmatprep.subr.mxu0 0.0
    %3213 = vmatpush1.xpose.msra.mxu0 0.0
    %3214 = vmatprep.subr.mxu0 0.0
    %3215 = vmatpush1.xpose.msra.mxu0 0.0
    %3216 = vmatprep.subr.mxu0 0.0
    %3217 = vmatpush1.xpose.msra.mxu0 0.0
    %3218 = vmatprep.subr.mxu0 0.0
    %3219 = vmatpush1.xpose.msra.mxu0 0.0
    %3220 = vmatprep.subr.mxu0 0.0
    %3221 = vmatpush1.xpose.msra.mxu0 0.0
    %3222 = vmatprep.subr.mxu0 0.0
    %3223 = vmatpush1.xpose.msra.mxu0 0.0
    %3224 = vmatprep.subr.mxu0 0.0
    %3225 = vmatpush1.xpose.msra.mxu0 0.0
    %3226 = vmatprep.subr.mxu0 0.0
    %3227 = vmatpush1.xpose.msra.mxu0 0.0
    %3228 = vmatprep.subr.mxu0 0.0
    %3229 = vmatpush1.xpose.msra.mxu0 0.0
    %3230 = vmatprep.subr.mxu0 0.0
    %3231 = vmatpush1.xpose.msra.mxu0 0.0
    %3232 = vmatprep.subr.mxu0 0.0
    %3233 = vmatpush1.xpose.msra.mxu0 0.0
    %3234 = vmatprep.mubr.f32.mxu0 0.0
    %3235 = vmatmul.mubr.f32.gmra.mrb[0].mxu0 %v3166
    %v3236 = vpop.f32.mrb[0].mxu0
    %v3237 = vadd.f32 0.0, %v3236
    %v3238 = vpop.f32.mrb[0].mxu0
    %3239 = vdwg.mxu0
    %v3240 = vsel %vm225, %v3159, -inf
    %3241 = vmax.xlane.f32.xlu0 %v3240
    %v3242 = vpop.xlane.xlu0 %3241
    %v3243 = vsel %vm225, %v3237, -inf
    %3244 = vmax.xlane.f32.xlu0 %v3243
    %v3245 = vpop.xlane.xlu0 %3244
    %v3246 = vsub.f32 %v3159, %v3242
    %v3247 = vsub.f32 %v3237, %v3245
    %v3248 = vmul.f32 %v3246, 1.442695
    %v3249 = vpow.pop %v3248
    %v3250 = vmul.f32 %v3247, 1.442695
    %v3251 = vpow.pop %v3250
    %v3252 = vsel %vm225, %v3249, 0.0
    %3253 = vadd.xlane.f32.xlu0 %v3252
    %v3254 = vpop.xlane.xlu0 %3253
    %v3255 = vsel %vm225, %v3251, 0.0
    %3256 = vadd.xlane.f32.xlu0 %v3255
    %v3257 = vpop.xlane.xlu0 %3256
    %v3258 = vrcp.pop %v3254
    %v3259 = vrcp.pop %v3257
    %v3260 = vmul.f32 %v3249, %v3258
    %v3261 = vmul.f32 %v3251, %v3259
    %3262 = vrot.lane.b32.xlu0 %v2240, 48
    %v3263 = vpop.permute.xlu0 %3262
    %v3266 = vsel %vm225, %v3260, 0
    %3268 = vmatprep.subr.mxu0 0.0
    %3269 = vmatpush1.msra.mxu0 %v3263
    %3270 = vmatprep.subr.mxu0 0.0
    %3271 = vmatpush1.msra.mxu0 0.0
    %3272 = vmatprep.subr.mxu0 0.0
    %3273 = vmatpush1.msra.mxu0 0.0
    %3274 = vmatprep.subr.mxu0 0.0
    %3275 = vmatpush1.msra.mxu0 0.0
    %3276 = vmatprep.subr.mxu0 0.0
    %3277 = vmatpush1.msra.mxu0 0.0
    %3278 = vmatprep.subr.mxu0 0.0
    %3279 = vmatpush1.msra.mxu0 0.0
    %3280 = vmatprep.subr.mxu0 0.0
    %3281 = vmatpush1.msra.mxu0 0.0
    %3282 = vmatprep.subr.mxu0 0.0
    %3283 = vmatpush1.msra.mxu0 0.0
    %3284 = vmatprep.subr.mxu0 0.0
    %3285 = vmatpush1.msra.mxu0 0.0
    %3286 = vmatprep.subr.mxu0 0.0
    %3287 = vmatpush1.msra.mxu0 0.0
    %3288 = vmatprep.subr.mxu0 0.0
    %3289 = vmatpush1.msra.mxu0 0.0
    %3290 = vmatprep.subr.mxu0 0.0
    %3291 = vmatpush1.msra.mxu0 0.0
    %3292 = vmatprep.subr.mxu0 0.0
    %3293 = vmatpush1.msra.mxu0 0.0
    %3294 = vmatprep.subr.mxu0 0.0
    %3295 = vmatpush1.msra.mxu0 0.0
    %3296 = vmatprep.subr.mxu0 0.0
    %3297 = vmatpush1.msra.mxu0 0.0
    %3298 = vmatprep.subr.mxu0 0.0
    %3299 = vmatpush1.msra.mxu0 0.0
    %3300 = vmatprep.subr.mxu0 0.0
    %3301 = vmatpush1.msra.mxu0 0.0
    %3302 = vmatprep.subr.mxu0 0.0
    %3303 = vmatpush1.msra.mxu0 0.0
    %3304 = vmatprep.subr.mxu0 0.0
    %3305 = vmatpush1.msra.mxu0 0.0
    %3306 = vmatprep.subr.mxu0 0.0
    %3307 = vmatpush1.msra.mxu0 0.0
    %3308 = vmatprep.subr.mxu0 0.0
    %3309 = vmatpush1.msra.mxu0 0.0
    %3310 = vmatprep.subr.mxu0 0.0
    %3311 = vmatpush1.msra.mxu0 0.0
    %3312 = vmatprep.subr.mxu0 0.0
    %3313 = vmatpush1.msra.mxu0 0.0
    %3314 = vmatprep.subr.mxu0 0.0
    %3315 = vmatpush1.msra.mxu0 0.0
    %3316 = vmatprep.subr.mxu0 0.0
    %3317 = vmatpush1.msra.mxu0 0.0
    %3318 = vmatprep.subr.mxu0 0.0
    %3319 = vmatpush1.msra.mxu0 0.0
    %3320 = vmatprep.subr.mxu0 0.0
    %3321 = vmatpush1.msra.mxu0 0.0
    %3322 = vmatprep.subr.mxu0 0.0
    %3323 = vmatpush1.msra.mxu0 0.0
    %3324 = vmatprep.subr.mxu0 0.0
    %3325 = vmatpush1.msra.mxu0 0.0
    %3326 = vmatprep.subr.mxu0 0.0
    %3327 = vmatpush1.msra.mxu0 0.0
    %3328 = vmatprep.subr.mxu0 0.0
    %3329 = vmatpush1.msra.mxu0 0.0
    %3330 = vmatprep.subr.mxu0 0.0
    %3331 = vmatpush1.msra.mxu0 0.0
    %3332 = vmatprep.mubr.f32.mxu0 0.0
    %3333 = vmatmul.mubr.f32.gmra.mrb[0].mxu0 %v3266
    %v3334 = vpop.f32.mrb[0].mxu0
    %v3335 = vadd.f32 0.0, %v3334
    %v3336 = vpop.f32.mrb[0].mxu0
    %3337 = vdwg.mxu0
    %3338 = vrot.lane.b32.xlu0 %v2245, 48
    %v3339 = vpop.permute.xlu0 %3338
    %v3342 = vsel %vm225, %v3261, 0
    %3344 = vmatprep.subr.mxu0 0.0
    %3345 = vmatpush1.msra.mxu0 %v3339
    %3346 = vmatprep.subr.mxu0 0.0
    %3347 = vmatpush1.msra.mxu0 0.0
    %3348 = vmatprep.subr.mxu0 0.0
    %3349 = vmatpush1.msra.mxu0 0.0
    %3350 = vmatprep.subr.mxu0 0.0
    %3351 = vmatpush1.msra.mxu0 0.0
    %3352 = vmatprep.subr.mxu0 0.0
    %3353 = vmatpush1.msra.mxu0 0.0
    %3354 = vmatprep.subr.mxu0 0.0
    %3355 = vmatpush1.msra.mxu0 0.0
    %3356 = vmatprep.subr.mxu0 0.0
    %3357 = vmatpush1.msra.mxu0 0.0
    %3358 = vmatprep.subr.mxu0 0.0
    %3359 = vmatpush1.msra.mxu0 0.0
    %3360 = vmatprep.subr.mxu0 0.0
    %3361 = vmatpush1.msra.mxu0 0.0
    %3362 = vmatprep.subr.mxu0 0.0
    %3363 = vmatpush1.msra.mxu0 0.0
    %3364 = vmatprep.subr.mxu0 0.0
    %3365 = vmatpush1.msra.mxu0 0.0
    %3366 = vmatprep.subr.mxu0 0.0
    %3367 = vmatpush1.msra.mxu0 0.0
    %3368 = vmatprep.subr.mxu0 0.0
    %3369 = vmatpush1.msra.mxu0 0.0
    %3370 = vmatprep.subr.mxu0 0.0
    %3371 = vmatpush1.msra.mxu0 0.0
    %3372 = vmatprep.subr.mxu0 0.0
    %3373 = vmatpush1.msra.mxu0 0.0
    %3374 = vmatprep.subr.mxu0 0.0
    %3375 = vmatpush1.msra.mxu0 0.0
    %3376 = vmatprep.subr.mxu0 0.0
    %3377 = vmatpush1.msra.mxu0 0.0
    %3378 = vmatprep.subr.mxu0 0.0
    %3379 = vmatpush1.msra.mxu0 0.0
    %3380 = vmatprep.subr.mxu0 0.0
    %3381 = vmatpush1.msra.mxu0 0.0
    %3382 = vmatprep.subr.mxu0 0.0
    %3383 = vmatpush1.msra.mxu0 0.0
    %3384 = vmatprep.subr.mxu0 0.0
    %3385 = vmatpush1.msra.mxu0 0.0
    %3386 = vmatprep.subr.mxu0 0.0
    %3387 = vmatpush1.msra.mxu0 0.0
    %3388 = vmatprep.subr.mxu0 0.0
    %3389 = vmatpush1.msra.mxu0 0.0
    %3390 = vmatprep.subr.mxu0 0.0
    %3391 = vmatpush1.msra.mxu0 0.0
    %3392 = vmatprep.subr.mxu0 0.0
    %3393 = vmatpush1.msra.mxu0 0.0
    %3394 = vmatprep.subr.mxu0 0.0
    %3395 = vmatpush1.msra.mxu0 0.0
    %3396 = vmatprep.subr.mxu0 0.0
    %3397 = vmatpush1.msra.mxu0 0.0
    %3398 = vmatprep.subr.mxu0 0.0
    %3399 = vmatpush1.msra.mxu0 0.0
    %3400 = vmatprep.subr.mxu0 0.0
    %3401 = vmatpush1.msra.mxu0 0.0
    %3402 = vmatprep.subr.mxu0 0.0
    %3403 = vmatpush1.msra.mxu0 0.0
    %3404 = vmatprep.subr.mxu0 0.0
    %3405 = vmatpush1.msra.mxu0 0.0
    %3406 = vmatprep.subr.mxu0 0.0
    %3407 = vmatpush1.msra.mxu0 0.0
    %3408 = vmatprep.mubr.f32.mxu0 0.0
    %3409 = vmatmul.mubr.f32.gmra.mrb[0].mxu0 %v3342
    %v3410 = vpop.f32.mrb[0].mxu0
    %v3411 = vadd.f32 0.0, %v3410
    %v3412 = vpop.f32.mrb[0].mxu0
    %3413 = vdwg.mxu0
    %3415 = vrot.lane.b32.xlu0 %v2148, 32
    %v3416 = vpop.permute.xlu0 %3415
    %v3419 = vsel %vm225, %v3335, 0
    %v3422 = vsel %vm225, %v3411, 0
    %3424 = vmatprep.subr.mxu0 0.0
    %3425 = vmatpush1.msra.mxu0 %v3416
    %3426 = vmatprep.subr.mxu0 0.0
    %3427 = vmatpush1.msra.mxu0 0.0
    %3428 = vmatprep.subr.mxu0 0.0
    %3429 = vmatpush1.msra.mxu0 0.0
    %3430 = vmatprep.subr.mxu0 0.0
    %3431 = vmatpush1.msra.mxu0 0.0
    %3432 = vmatprep.subr.mxu0 0.0
    %3433 = vmatpush1.msra.mxu0 0.0
    %3434 = vmatprep.subr.mxu0 0.0
    %3435 = vmatpush1.msra.mxu0 0.0
    %3436 = vmatprep.subr.mxu0 0.0
    %3437 = vmatpush1.msra.mxu0 0.0
    %3438 = vmatprep.subr.mxu0 0.0
    %3439 = vmatpush1.msra.mxu0 0.0
    %3440 = vmatprep.subr.mxu0 0.0
    %3441 = vmatpush1.msra.mxu0 0.0
    %3442 = vmatprep.subr.mxu0 0.0
    %3443 = vmatpush1.msra.mxu0 0.0
    %3444 = vmatprep.subr.mxu0 0.0
    %3445 = vmatpush1.msra.mxu0 0.0
    %3446 = vmatprep.subr.mxu0 0.0
    %3447 = vmatpush1.msra.mxu0 0.0
    %3448 = vmatprep.subr.mxu0 0.0
    %3449 = vmatpush1.msra.mxu0 0.0
    %3450 = vmatprep.subr.mxu0 0.0
    %3451 = vmatpush1.msra.mxu0 0.0
    %3452 = vmatprep.subr.mxu0 0.0
    %3453 = vmatpush1.msra.mxu0 0.0
    %3454 = vmatprep.subr.mxu0 0.0
    %3455 = vmatpush1.msra.mxu0 0.0
    %3456 = vmatprep.subr.mxu0 0.0
    %3457 = vmatpush1.msra.mxu0 0.0
    %3458 = vmatprep.subr.mxu0 0.0
    %3459 = vmatpush1.msra.mxu0 0.0
    %3460 = vmatprep.subr.mxu0 0.0
    %3461 = vmatpush1.msra.mxu0 0.0
    %3462 = vmatprep.subr.mxu0 0.0
    %3463 = vmatpush1.msra.mxu0 0.0
    %3464 = vmatprep.subr.mxu0 0.0
    %3465 = vmatpush1.msra.mxu0 0.0
    %3466 = vmatprep.subr.mxu0 0.0
    %3467 = vmatpush1.msra.mxu0 0.0
    %3468 = vmatprep.subr.mxu0 0.0
    %3469 = vmatpush1.msra.mxu0 0.0
    %3470 = vmatprep.subr.mxu0 0.0
    %3471 = vmatpush1.msra.mxu0 0.0
    %3472 = vmatprep.subr.mxu0 0.0
    %3473 = vmatpush1.msra.mxu0 0.0
    %3474 = vmatprep.subr.mxu0 0.0
    %3475 = vmatpush1.msra.mxu0 0.0
    %3476 = vmatprep.subr.mxu0 0.0
    %3477 = vmatpush1.msra.mxu0 0.0
    %3478 = vmatprep.subr.mxu0 0.0
    %3479 = vmatpush1.msra.mxu0 0.0
    %3480 = vmatprep.subr.mxu0 0.0
    %3481 = vmatpush1.msra.mxu0 0.0
    %3482 = vmatprep.subr.mxu0 0.0
    %3483 = vmatpush1.msra.mxu0 0.0
    %3484 = vmatprep.subr.mxu0 0.0
    %3485 = vmatpush1.msra.mxu0 0.0
    %3486 = vmatprep.subr.mxu0 0.0
    %3487 = vmatpush1.msra.mxu0 0.0
    %3488 = vmatprep.mubr.f32.mxu0 0.0
    %3489 = vmatmul.mubr.f32.gmra.mrb[0].mxu0 %v3419
    %v3490 = vpop.f32.mrb[0].mxu0
    %v3491 = vadd.f32 0.0, %v3490
    %v3492 = vpop.f32.mrb[0].mxu0
    %3493 = vmatprep.mubr.f32.mxu0 0.0
    %3494 = vmatmul.mubr.f32.gmra.mrb[0].mxu0 %v3422
    %v3495 = vpop.f32.mrb[0].mxu0
    %v3496 = vadd.f32 0.0, %v3495
    %v3497 = vpop.f32.mrb[0].mxu0
    %3498 = vdwg.mxu0
    %v3499 = vadd.f32 %v3082, %v3491
    %v3500 = vadd.f32 %v3083, %v3496
    %3501 = vrot.lane.b32.xlu0 %v2240, 104
    %v3502 = vpop.permute.xlu0 %3501
    %3503 = vrot.lane.b32.xlu0 %v2240, 72
    %v3504 = vpop.permute.xlu0 %3503
    %v3505 = vsel %vm225, %v3502, 0
    %v3507 = vsel %vm225, %v3504, 0
    %3509 = vmatprep.subr.mxu0 0.0
    %3510 = vmatpush1.xpose.msra.mxu0 %v3507
    %3511 = vmatprep.subr.mxu0 0.0
    %3512 = vmatpush1.xpose.msra.mxu0 0.0
    %3513 = vmatprep.subr.mxu0 0.0
    %3514 = vmatpush1.xpose.msra.mxu0 0.0
    %3515 = vmatprep.subr.mxu0 0.0
    %3516 = vmatpush1.xpose.msra.mxu0 0.0
    %3517 = vmatprep.subr.mxu0 0.0
    %3518 = vmatpush1.xpose.msra.mxu0 0.0
    %3519 = vmatprep.subr.mxu0 0.0
    %3520 = vmatpush1.xpose.msra.mxu0 0.0
    %3521 = vmatprep.subr.mxu0 0.0
    %3522 = vmatpush1.xpose.msra.mxu0 0.0
    %3523 = vmatprep.subr.mxu0 0.0
    %3524 = vmatpush1.xpose.msra.mxu0 0.0
    %3525 = vmatprep.subr.mxu0 0.0
    %3526 = vmatpush1.xpose.msra.mxu0 0.0
    %3527 = vmatprep.subr.mxu0 0.0
    %3528 = vmatpush1.xpose.msra.mxu0 0.0
    %3529 = vmatprep.subr.mxu0 0.0
    %3530 = vmatpush1.xpose.msra.mxu0 0.0
    %3531 = vmatprep.subr.mxu0 0.0
    %3532 = vmatpush1.xpose.msra.mxu0 0.0
    %3533 = vmatprep.subr.mxu0 0.0
    %3534 = vmatpush1.xpose.msra.mxu0 0.0
    %3535 = vmatprep.subr.mxu0 0.0
    %3536 = vmatpush1.xpose.msra.mxu0 0.0
    %3537 = vmatprep.subr.mxu0 0.0
    %3538 = vmatpush1.xpose.msra.mxu0 0.0
    %3539 = vmatprep.subr.mxu0 0.0
    %3540 = vmatpush1.xpose.msra.mxu0 0.0
    %3541 = vmatprep.subr.mxu0 0.0
    %3542 = vmatpush1.xpose.msra.mxu0 0.0
    %3543 = vmatprep.subr.mxu0 0.0
    %3544 = vmatpush1.xpose.msra.mxu0 0.0
    %3545 = vmatprep.subr.mxu0 0.0
    %3546 = vmatpush1.xpose.msra.mxu0 0.0
    %3547 = vmatprep.subr.mxu0 0.0
    %3548 = vmatpush1.xpose.msra.mxu0 0.0
    %3549 = vmatprep.subr.mxu0 0.0
    %3550 = vmatpush1.xpose.msra.mxu0 0.0
    %3551 = vmatprep.subr.mxu0 0.0
    %3552 = vmatpush1.xpose.msra.mxu0 0.0
    %3553 = vmatprep.subr.mxu0 0.0
    %3554 = vmatpush1.xpose.msra.mxu0 0.0
    %3555 = vmatprep.subr.mxu0 0.0
    %3556 = vmatpush1.xpose.msra.mxu0 0.0
    %3557 = vmatprep.subr.mxu0 0.0
    %3558 = vmatpush1.xpose.msra.mxu0 0.0
    %3559 = vmatprep.subr.mxu0 0.0
    %3560 = vmatpush1.xpose.msra.mxu0 0.0
    %3561 = vmatprep.subr.mxu0 0.0
    %3562 = vmatpush1.xpose.msra.mxu0 0.0
    %3563 = vmatprep.subr.mxu0 0.0
    %3564 = vmatpush1.xpose.msra.mxu0 0.0
    %3565 = vmatprep.subr.mxu0 0.0
    %3566 = vmatpush1.xpose.msra.mxu0 0.0
    %3567 = vmatprep.subr.mxu0 0.0
    %3568 = vmatpush1.xpose.msra.mxu0 0.0
    %3569 = vmatprep.subr.mxu0 0.0
    %3570 = vmatpush1.xpose.msra.mxu0 0.0
    %3571 = vmatprep.subr.mxu0 0.0
    %3572 = vmatpush1.xpose.msra.mxu0 0.0
    %3573 = vmatprep.mubr.f32.mxu0 0.0
    %3574 = vmatmul.mubr.f32.gmra.mrb[0].mxu0 %v3505
    %v3575 = vpop.f32.mrb[0].mxu0
    %v3576 = vadd.f32 0.0, %v3575
    %v3577 = vpop.f32.mrb[0].mxu0
    %3578 = vdwg.mxu0
    %3579 = vrot.lane.b32.xlu0 %v2245, 104
    %v3580 = vpop.permute.xlu0 %3579
    %3581 = vrot.lane.b32.xlu0 %v2245, 72
    %v3582 = vpop.permute.xlu0 %3581
    %v3583 = vsel %vm225, %v3580, 0
    %v3585 = vsel %vm225, %v3582, 0
    %3587 = vmatprep.subr.mxu0 0.0
    %3588 = vmatpush1.xpose.msra.mxu0 %v3585
    %3589 = vmatprep.subr.mxu0 0.0
    %3590 = vmatpush1.xpose.msra.mxu0 0.0
    %3591 = vmatprep.subr.mxu0 0.0
    %3592 = vmatpush1.xpose.msra.mxu0 0.0
    %3593 = vmatprep.subr.mxu0 0.0
    %3594 = vmatpush1.xpose.msra.mxu0 0.0
    %3595 = vmatprep.subr.mxu0 0.0
    %3596 = vmatpush1.xpose.msra.mxu0 0.0
    %3597 = vmatprep.subr.mxu0 0.0
    %3598 = vmatpush1.xpose.msra.mxu0 0.0
    %3599 = vmatprep.subr.mxu0 0.0
    %3600 = vmatpush1.xpose.msra.mxu0 0.0
    %3601 = vmatprep.subr.mxu0 0.0
    %3602 = vmatpush1.xpose.msra.mxu0 0.0
    %3603 = vmatprep.subr.mxu0 0.0
    %3604 = vmatpush1.xpose.msra.mxu0 0.0
    %3605 = vmatprep.subr.mxu0 0.0
    %3606 = vmatpush1.xpose.msra.mxu0 0.0
    %3607 = vmatprep.subr.mxu0 0.0
    %3608 = vmatpush1.xpose.msra.mxu0 0.0
    %3609 = vmatprep.subr.mxu0 0.0
    %3610 = vmatpush1.xpose.msra.mxu0 0.0
    %3611 = vmatprep.subr.mxu0 0.0
    %3612 = vmatpush1.xpose.msra.mxu0 0.0
    %3613 = vmatprep.subr.mxu0 0.0
    %3614 = vmatpush1.xpose.msra.mxu0 0.0
    %3615 = vmatprep.subr.mxu0 0.0
    %3616 = vmatpush1.xpose.msra.mxu0 0.0
    %3617 = vmatprep.subr.mxu0 0.0
    %3618 = vmatpush1.xpose.msra.mxu0 0.0
    %3619 = vmatprep.subr.mxu0 0.0
    %3620 = vmatpush1.xpose.msra.mxu0 0.0
    %3621 = vmatprep.subr.mxu0 0.0
    %3622 = vmatpush1.xpose.msra.mxu0 0.0
    %3623 = vmatprep.subr.mxu0 0.0
    %3624 = vmatpush1.xpose.msra.mxu0 0.0
    %3625 = vmatprep.subr.mxu0 0.0
    %3626 = vmatpush1.xpose.msra.mxu0 0.0
    %3627 = vmatprep.subr.mxu0 0.0
    %3628 = vmatpush1.xpose.msra.mxu0 0.0
    %3629 = vmatprep.subr.mxu0 0.0
    %3630 = vmatpush1.xpose.msra.mxu0 0.0
    %3631 = vmatprep.subr.mxu0 0.0
    %3632 = vmatpush1.xpose.msra.mxu0 0.0
    %3633 = vmatprep.subr.mxu0 0.0
    %3634 = vmatpush1.xpose.msra.mxu0 0.0
    %3635 = vmatprep.subr.mxu0 0.0
    %3636 = vmatpush1.xpose.msra.mxu0 0.0
    %3637 = vmatprep.subr.mxu0 0.0
    %3638 = vmatpush1.xpose.msra.mxu0 0.0
    %3639 = vmatprep.subr.mxu0 0.0
    %3640 = vmatpush1.xpose.msra.mxu0 0.0
    %3641 = vmatprep.subr.mxu0 0.0
    %3642 = vmatpush1.xpose.msra.mxu0 0.0
    %3643 = vmatprep.subr.mxu0 0.0
    %3644 = vmatpush1.xpose.msra.mxu0 0.0
    %3645 = vmatprep.subr.mxu0 0.0
    %3646 = vmatpush1.xpose.msra.mxu0 0.0
    %3647 = vmatprep.subr.mxu0 0.0
    %3648 = vmatpush1.xpose.msra.mxu0 0.0
    %3649 = vmatprep.subr.mxu0 0.0
    %3650 = vmatpush1.xpose.msra.mxu0 0.0
    %3651 = vmatprep.mubr.f32.mxu0 0.0
    %3652 = vmatmul.mubr.f32.gmra.mrb[0].mxu0 %v3583
    %v3653 = vpop.f32.mrb[0].mxu0
    %v3654 = vadd.f32 0.0, %v3653
    %v3655 = vpop.f32.mrb[0].mxu0
    %3656 = vdwg.mxu0
    %v3657 = vsel %vm225, %v3576, -inf
    %3658 = vmax.xlane.f32.xlu0 %v3657
    %v3659 = vpop.xlane.xlu0 %3658
    %v3660 = vsel %vm225, %v3654, -inf
    %3661 = vmax.xlane.f32.xlu0 %v3660
    %v3662 = vpop.xlane.xlu0 %3661
    %v3663 = vsub.f32 %v3576, %v3659
    %v3664 = vsub.f32 %v3654, %v3662
    %v3665 = vmul.f32 %v3663, 1.442695
    %v3666 = vpow.pop %v3665
    %v3667 = vmul.f32 %v3664, 1.442695
    %v3668 = vpow.pop %v3667
    %v3669 = vsel %vm225, %v3666, 0.0
    %3670 = vadd.xlane.f32.xlu0 %v3669
    %v3671 = vpop.xlane.xlu0 %3670
    %v3672 = vsel %vm225, %v3668, 0.0
    %3673 = vadd.xlane.f32.xlu0 %v3672
    %v3674 = vpop.xlane.xlu0 %3673
    %v3675 = vrcp.pop %v3671
    %v3676 = vrcp.pop %v3674
    %v3677 = vmul.f32 %v3666, %v3675
    %v3678 = vmul.f32 %v3668, %v3676
    %3679 = vrot.lane.b32.xlu0 %v2240, 40
    %v3680 = vpop.permute.xlu0 %3679
    %v3683 = vsel %vm225, %v3677, 0
    %3685 = vmatprep.subr.mxu0 0.0
    %3686 = vmatpush1.msra.mxu0 %v3680
    %3687 = vmatprep.subr.mxu0 0.0
    %3688 = vmatpush1.msra.mxu0 0.0
    %3689 = vmatprep.subr.mxu0 0.0
    %3690 = vmatpush1.msra.mxu0 0.0
    %3691 = vmatprep.subr.mxu0 0.0
    %3692 = vmatpush1.msra.mxu0 0.0
    %3693 = vmatprep.subr.mxu0 0.0
    %3694 = vmatpush1.msra.mxu0 0.0
    %3695 = vmatprep.subr.mxu0 0.0
    %3696 = vmatpush1.msra.mxu0 0.0
    %3697 = vmatprep.subr.mxu0 0.0
    %3698 = vmatpush1.msra.mxu0 0.0
    %3699 = vmatprep.subr.mxu0 0.0
    %3700 = vmatpush1.msra.mxu0 0.0
    %3701 = vmatprep.subr.mxu0 0.0
    %3702 = vmatpush1.msra.mxu0 0.0
    %3703 = vmatprep.subr.mxu0 0.0
    %3704 = vmatpush1.msra.mxu0 0.0
    %3705 = vmatprep.subr.mxu0 0.0
    %3706 = vmatpush1.msra.mxu0 0.0
    %3707 = vmatprep.subr.mxu0 0.0
    %3708 = vmatpush1.msra.mxu0 0.0
    %3709 = vmatprep.subr.mxu0 0.0
    %3710 = vmatpush1.msra.mxu0 0.0
    %3711 = vmatprep.subr.mxu0 0.0
    %3712 = vmatpush1.msra.mxu0 0.0
    %3713 = vmatprep.subr.mxu0 0.0
    %3714 = vmatpush1.msra.mxu0 0.0
    %3715 = vmatprep.subr.mxu0 0.0
    %3716 = vmatpush1.msra.mxu0 0.0
    %3717 = vmatprep.subr.mxu0 0.0
    %3718 = vmatpush1.msra.mxu0 0.0
    %3719 = vmatprep.subr.mxu0 0.0
    %3720 = vmatpush1.msra.mxu0 0.0
    %3721 = vmatprep.subr.mxu0 0.0
    %3722 = vmatpush1.msra.mxu0 0.0
    %3723 = vmatprep.subr.mxu0 0.0
    %3724 = vmatpush1.msra.mxu0 0.0
    %3725 = vmatprep.subr.mxu0 0.0
    %3726 = vmatpush1.msra.mxu0 0.0
    %3727 = vmatprep.subr.mxu0 0.0
    %3728 = vmatpush1.msra.mxu0 0.0
    %3729 = vmatprep.subr.mxu0 0.0
    %3730 = vmatpush1.msra.mxu0 0.0
    %3731 = vmatprep.subr.mxu0 0.0
    %3732 = vmatpush1.msra.mxu0 0.0
    %3733 = vmatprep.subr.mxu0 0.0
    %3734 = vmatpush1.msra.mxu0 0.0
    %3735 = vmatprep.subr.mxu0 0.0
    %3736 = vmatpush1.msra.mxu0 0.0
    %3737 = vmatprep.subr.mxu0 0.0
    %3738 = vmatpush1.msra.mxu0 0.0
    %3739 = vmatprep.subr.mxu0 0.0
    %3740 = vmatpush1.msra.mxu0 0.0
    %3741 = vmatprep.subr.mxu0 0.0
    %3742 = vmatpush1.msra.mxu0 0.0
    %3743 = vmatprep.subr.mxu0 0.0
    %3744 = vmatpush1.msra.mxu0 0.0
    %3745 = vmatprep.subr.mxu0 0.0
    %3746 = vmatpush1.msra.mxu0 0.0
    %3747 = vmatprep.subr.mxu0 0.0
    %3748 = vmatpush1.msra.mxu0 0.0
    %3749 = vmatprep.mubr.f32.mxu0 0.0
    %3750 = vmatmul.mubr.f32.gmra.mrb[0].mxu0 %v3683
    %v3751 = vpop.f32.mrb[0].mxu0
    %v3752 = vadd.f32 0.0, %v3751
    %v3753 = vpop.f32.mrb[0].mxu0
    %3754 = vdwg.mxu0
    %3755 = vrot.lane.b32.xlu0 %v2245, 40
    %v3756 = vpop.permute.xlu0 %3755
    %v3759 = vsel %vm225, %v3678, 0
    %3761 = vmatprep.subr.mxu0 0.0
    %3762 = vmatpush1.msra.mxu0 %v3756
    %3763 = vmatprep.subr.mxu0 0.0
    %3764 = vmatpush1.msra.mxu0 0.0
    %3765 = vmatprep.subr.mxu0 0.0
    %3766 = vmatpush1.msra.mxu0 0.0
    %3767 = vmatprep.subr.mxu0 0.0
    %3768 = vmatpush1.msra.mxu0 0.0
    %3769 = vmatprep.subr.mxu0 0.0
    %3770 = vmatpush1.msra.mxu0 0.0
    %3771 = vmatprep.subr.mxu0 0.0
    %3772 = vmatpush1.msra.mxu0 0.0
    %3773 = vmatprep.subr.mxu0 0.0
    %3774 = vmatpush1.msra.mxu0 0.0
    %3775 = vmatprep.subr.mxu0 0.0
    %3776 = vmatpush1.msra.mxu0 0.0
    %3777 = vmatprep.subr.mxu0 0.0
    %3778 = vmatpush1.msra.mxu0 0.0
    %3779 = vmatprep.subr.mxu0 0.0
    %3780 = vmatpush1.msra.mxu0 0.0
    %3781 = vmatprep.subr.mxu0 0.0
    %3782 = vmatpush1.msra.mxu0 0.0
    %3783 = vmatprep.subr.mxu0 0.0
    %3784 = vmatpush1.msra.mxu0 0.0
    %3785 = vmatprep.subr.mxu0 0.0
    %3786 = vmatpush1.msra.mxu0 0.0
    %3787 = vmatprep.subr.mxu0 0.0
    %3788 = vmatpush1.msra.mxu0 0.0
    %3789 = vmatprep.subr.mxu0 0.0
    %3790 = vmatpush1.msra.mxu0 0.0
    %3791 = vmatprep.subr.mxu0 0.0
    %3792 = vmatpush1.msra.mxu0 0.0
    %3793 = vmatprep.subr.mxu0 0.0
    %3794 = vmatpush1.msra.mxu0 0.0
    %3795 = vmatprep.subr.mxu0 0.0
    %3796 = vmatpush1.msra.mxu0 0.0
    %3797 = vmatprep.subr.mxu0 0.0
    %3798 = vmatpush1.msra.mxu0 0.0
    %3799 = vmatprep.subr.mxu0 0.0
    %3800 = vmatpush1.msra.mxu0 0.0
    %3801 = vmatprep.subr.mxu0 0.0
    %3802 = vmatpush1.msra.mxu0 0.0
    %3803 = vmatprep.subr.mxu0 0.0
    %3804 = vmatpush1.msra.mxu0 0.0
    %3805 = vmatprep.subr.mxu0 0.0
    %3806 = vmatpush1.msra.mxu0 0.0
    %3807 = vmatprep.subr.mxu0 0.0
    %3808 = vmatpush1.msra.mxu0 0.0
    %3809 = vmatprep.subr.mxu0 0.0
    %3810 = vmatpush1.msra.mxu0 0.0
    %3811 = vmatprep.subr.mxu0 0.0
    %3812 = vmatpush1.msra.mxu0 0.0
    %3813 = vmatprep.subr.mxu0 0.0
    %3814 = vmatpush1.msra.mxu0 0.0
    %3815 = vmatprep.subr.mxu0 0.0
    %3816 = vmatpush1.msra.mxu0 0.0
    %3817 = vmatprep.subr.mxu0 0.0
    %3818 = vmatpush1.msra.mxu0 0.0
    %3819 = vmatprep.subr.mxu0 0.0
    %3820 = vmatpush1.msra.mxu0 0.0
    %3821 = vmatprep.subr.mxu0 0.0
    %3822 = vmatpush1.msra.mxu0 0.0
    %3823 = vmatprep.subr.mxu0 0.0
    %3824 = vmatpush1.msra.mxu0 0.0
    %3825 = vmatprep.mubr.f32.mxu0 0.0
    %3826 = vmatmul.mubr.f32.gmra.mrb[0].mxu0 %v3759
    %v3827 = vpop.f32.mrb[0].mxu0
    %v3828 = vadd.f32 0.0, %v3827
    %v3829 = vpop.f32.mrb[0].mxu0
    %3830 = vdwg.mxu0
    %3832 = vrot.lane.b32.xlu0 %v2149, 32
    %v3833 = vpop.permute.xlu0 %3832
    %v3836 = vsel %vm225, %v3752, 0
    %v3839 = vsel %vm225, %v3828, 0
    %3841 = vmatprep.subr.mxu0 0.0
    %3842 = vmatpush1.msra.mxu0 %v3833
    %3843 = vmatprep.subr.mxu0 0.0
    %3844 = vmatpush1.msra.mxu0 0.0
    %3845 = vmatprep.subr.mxu0 0.0
    %3846 = vmatpush1.msra.mxu0 0.0
    %3847 = vmatprep.subr.mxu0 0.0
    %3848 = vmatpush1.msra.mxu0 0.0
    %3849 = vmatprep.subr.mxu0 0.0
    %3850 = vmatpush1.msra.mxu0 0.0
    %3851 = vmatprep.subr.mxu0 0.0
    %3852 = vmatpush1.msra.mxu0 0.0
    %3853 = vmatprep.subr.mxu0 0.0
    %3854 = vmatpush1.msra.mxu0 0.0
    %3855 = vmatprep.subr.mxu0 0.0
    %3856 = vmatpush1.msra.mxu0 0.0
    %3857 = vmatprep.subr.mxu0 0.0
    %3858 = vmatpush1.msra.mxu0 0.0
    %3859 = vmatprep.subr.mxu0 0.0
    %3860 = vmatpush1.msra.mxu0 0.0
    %3861 = vmatprep.subr.mxu0 0.0
    %3862 = vmatpush1.msra.mxu0 0.0
    %3863 = vmatprep.subr.mxu0 0.0
    %3864 = vmatpush1.msra.mxu0 0.0
    %3865 = vmatprep.subr.mxu0 0.0
    %3866 = vmatpush1.msra.mxu0 0.0
    %3867 = vmatprep.subr.mxu0 0.0
    %3868 = vmatpush1.msra.mxu0 0.0
    %3869 = vmatprep.subr.mxu0 0.0
    %3870 = vmatpush1.msra.mxu0 0.0
    %3871 = vmatprep.subr.mxu0 0.0
    %3872 = vmatpush1.msra.mxu0 0.0
    %3873 = vmatprep.subr.mxu0 0.0
    %3874 = vmatpush1.msra.mxu0 0.0
    %3875 = vmatprep.subr.mxu0 0.0
    %3876 = vmatpush1.msra.mxu0 0.0
    %3877 = vmatprep.subr.mxu0 0.0
    %3878 = vmatpush1.msra.mxu0 0.0
    %3879 = vmatprep.subr.mxu0 0.0
    %3880 = vmatpush1.msra.mxu0 0.0
    %3881 = vmatprep.subr.mxu0 0.0
    %3882 = vmatpush1.msra.mxu0 0.0
    %3883 = vmatprep.subr.mxu0 0.0
    %3884 = vmatpush1.msra.mxu0 0.0
    %3885 = vmatprep.subr.mxu0 0.0
    %3886 = vmatpush1.msra.mxu0 0.0
    %3887 = vmatprep.subr.mxu0 0.0
    %3888 = vmatpush1.msra.mxu0 0.0
    %3889 = vmatprep.subr.mxu0 0.0
    %3890 = vmatpush1.msra.mxu0 0.0
    %3891 = vmatprep.subr.mxu0 0.0
    %3892 = vmatpush1.msra.mxu0 0.0
    %3893 = vmatprep.subr.mxu0 0.0
    %3894 = vmatpush1.msra.mxu0 0.0
    %3895 = vmatprep.subr.mxu0 0.0
    %3896 = vmatpush1.msra.mxu0 0.0
    %3897 = vmatprep.subr.mxu0 0.0
    %3898 = vmatpush1.msra.mxu0 0.0
    %3899 = vmatprep.subr.mxu0 0.0
    %3900 = vmatpush1.msra.mxu0 0.0
    %3901 = vmatprep.subr.mxu0 0.0
    %3902 = vmatpush1.msra.mxu0 0.0
    %3903 = vmatprep.subr.mxu0 0.0
    %3904 = vmatpush1.msra.mxu0 0.0
    %3905 = vmatprep.mubr.f32.mxu0 0.0
    %3906 = vmatmul.mubr.f32.gmra.mrb[0].mxu0 %v3836
    %v3907 = vpop.f32.mrb[0].mxu0
    %v3908 = vadd.f32 0.0, %v3907
    %v3909 = vpop.f32.mrb[0].mxu0
    %3910 = vmatprep.mubr.f32.mxu0 0.0
    %3911 = vmatmul.mubr.f32.gmra.mrb[0].mxu0 %v3839
    %v3912 = vpop.f32.mrb[0].mxu0
    %v3913 = vadd.f32 0.0, %v3912
    %v3914 = vpop.f32.mrb[0].mxu0
    %3915 = vdwg.mxu0
    %v3916 = vadd.f32 %v3499, %v3908
    %v3917 = vadd.f32 %v3500, %v3913
    %v3918 = vadd.f32 %v2144, %v3916
    %v3919 = vadd.f32 %v2145, %v3917
    %v3920 = vsel %vm140, %v3918, 0.0
    %3921 = vadd.xlane.f32.xlu0 %v3920
    %v3922 = vpop.xlane.xlu0 %3921
    %v3923 = vsel %vm140, %v3919, 0.0
    %3924 = vadd.xlane.f32.xlu0 %v3923
    %v3925 = vpop.xlane.xlu0 %3924
    %v3926 = vmul.f32 %v3922, %v1901
    %v3927 = vmul.f32 %v3925, %v1901
    %v3928 = vsub.f32 %v3918, %v3926
    %v3929 = vsub.f32 %v3919, %v3927
    %v3930 = vmul.f32 %v3928, %v3928
    %v3931 = vmul.f32 %v3929, %v3929
    %v3932 = vsel %vm140, %v3930, 0.0
    %3933 = vadd.xlane.f32.xlu0 %v3932
    %v3934 = vpop.xlane.xlu0 %3933
    %v3935 = vsel %vm140, %v3931, 0.0
    %3936 = vadd.xlane.f32.xlu0 %v3935
    %v3937 = vpop.xlane.xlu0 %3936
    %v3938 = vmul.f32 %v3934, %v1901
    %v3939 = vmul.f32 %v3937, %v1901
    %v3940 = vadd.f32 %v3938, 1e-05
    %v3941 = vadd.f32 %v3939, 1e-05
    %v3942 = vrsqrt.pop %v3940
    %v3943 = vrsqrt.pop %v3941
    %v3944 = vmul.f32 %v3928, %v3942
    %v3945 = vmul.f32 %v3929, %v3943
    %v3946 = vlaneseq
    %v3947 = vshrl.u32 %v3946, 7
    %v3948 = vsub.s32 2, %v3947
    %v3949 = vrot.slane %v2162, %v3948
    %v3950 = vmul.f32 %v3944, %v3949
    %v3951 = vmul.f32 %v3945, %v3949
    %v3952 = vlaneseq
    %v3953 = vshrl.u32 %v3952, 7
    %v3954 = vsub.s32 3, %v3953
    %v3955 = vrot.slane %v2162, %v3954
    %v3956 = vadd.f32 %v3950, %v3955
    %v3957 = vadd.f32 %v3951, %v3955
    %v3958 = vlaneseq
    %v3959 = vshrl.u32 %v3958, 7
    %v3960 = vsub.s32 6, %v3959
    %v3961 = vrot.slane %v2162, %v3960
    %v3963 = vsel %vm140, %v3956, 0
    %v3966 = vsel %vm140, %v3957, 0
    %3968 = vmatprep.subr.mxu0 0.0
    %3969 = vmatpush1.msra.mxu0 %v2150
    %3970 = vmatprep.subr.mxu0 0.0
    %3971 = vmatpush1.msra.mxu0 %v2151
    %3972 = vmatprep.subr.mxu0 0.0
    %3973 = vmatpush1.msra.mxu0 %v2152
    %3974 = vmatprep.subr.mxu0 0.0
    %3975 = vmatpush1.msra.mxu0 %v2153
    %3976 = vmatprep.subr.mxu0 0.0
    %3977 = vmatpush1.msra.mxu0 0.0
    %3978 = vmatprep.subr.mxu0 0.0
    %3979 = vmatpush1.msra.mxu0 0.0
    %3980 = vmatprep.subr.mxu0 0.0
    %3981 = vmatpush1.msra.mxu0 0.0
    %3982 = vmatprep.subr.mxu0 0.0
    %3983 = vmatpush1.msra.mxu0 0.0
    %3984 = vmatprep.subr.mxu0 0.0
    %3985 = vmatpush1.msra.mxu0 0.0
    %3986 = vmatprep.subr.mxu0 0.0
    %3987 = vmatpush1.msra.mxu0 0.0
    %3988 = vmatprep.subr.mxu0 0.0
    %3989 = vmatpush1.msra.mxu0 0.0
    %3990 = vmatprep.subr.mxu0 0.0
    %3991 = vmatpush1.msra.mxu0 0.0
    %3992 = vmatprep.subr.mxu0 0.0
    %3993 = vmatpush1.msra.mxu0 0.0
    %3994 = vmatprep.subr.mxu0 0.0
    %3995 = vmatpush1.msra.mxu0 0.0
    %3996 = vmatprep.subr.mxu0 0.0
    %3997 = vmatpush1.msra.mxu0 0.0
    %3998 = vmatprep.subr.mxu0 0.0
    %3999 = vmatpush1.msra.mxu0 0.0
    %4000 = vmatprep.subr.mxu0 0.0
    %4001 = vmatpush1.msra.mxu0 0.0
    %4002 = vmatprep.subr.mxu0 0.0
    %4003 = vmatpush1.msra.mxu0 0.0
    %4004 = vmatprep.subr.mxu0 0.0
    %4005 = vmatpush1.msra.mxu0 0.0
    %4006 = vmatprep.subr.mxu0 0.0
    %4007 = vmatpush1.msra.mxu0 0.0
    %4008 = vmatprep.subr.mxu0 0.0
    %4009 = vmatpush1.msra.mxu0 0.0
    %4010 = vmatprep.subr.mxu0 0.0
    %4011 = vmatpush1.msra.mxu0 0.0
    %4012 = vmatprep.subr.mxu0 0.0
    %4013 = vmatpush1.msra.mxu0 0.0
    %4014 = vmatprep.subr.mxu0 0.0
    %4015 = vmatpush1.msra.mxu0 0.0
    %4016 = vmatprep.subr.mxu0 0.0
    %4017 = vmatpush1.msra.mxu0 0.0
    %4018 = vmatprep.subr.mxu0 0.0
    %4019 = vmatpush1.msra.mxu0 0.0
    %4020 = vmatprep.subr.mxu0 0.0
    %4021 = vmatpush1.msra.mxu0 0.0
    %4022 = vmatprep.subr.mxu0 0.0
    %4023 = vmatpush1.msra.mxu0 0.0
    %4024 = vmatprep.subr.mxu0 0.0
    %4025 = vmatpush1.msra.mxu0 0.0
    %4026 = vmatprep.subr.mxu0 0.0
    %4027 = vmatpush1.msra.mxu0 0.0
    %4028 = vmatprep.subr.mxu0 0.0
    %4029 = vmatpush1.msra.mxu0 0.0
    %4030 = vmatprep.subr.mxu0 0.0
    %4031 = vmatpush1.msra.mxu0 0.0
    %4032 = vmatprep.mubr.f32.mxu0 0.0
    %4033 = vmatmul.mubr.f32.gmra.mrb[0].mxu0 %v3963
    %v4034 = vpop.f32.mrb[0].mxu0
    %v4035 = vadd.f32 %v3961, %v4034
    %v4036 = vpop.f32.mrb[0].mxu0
    %4037 = vmatprep.mubr.f32.mxu0 0.0
    %4038 = vmatmul.mubr.f32.gmra.mrb[0].mxu0 %v3966
    %v4039 = vpop.f32.mrb[0].mxu0
    %v4040 = vadd.f32 %v3961, %v4039
    %v4041 = vpop.f32.mrb[0].mxu0
    %4042 = vdwg.mxu0
    %v4043 = vmax.f32 %v4035, 0.0
    %v4044 = vmax.f32 %v4040, 0.0
    %v4045 = vlaneseq
    %v4046 = vshrl.u32 %v4045, 7
    %v4047 = vsub.s32 7, %v4046
    %v4048 = vrot.slane %v2162, %v4047
    %v4050 = vsel %vm37, %v4043, 0
    %v4053 = vsel %vm37, %v4044, 0
    %4055 = vmatprep.subr.mxu0 0.0
    %4056 = vmatpush1.msra.mxu0 %v2154
    %4057 = vmatprep.subr.mxu0 0.0
    %4058 = vmatpush1.msra.mxu0 %v2155
    %4059 = vmatprep.subr.mxu0 0.0
    %4060 = vmatpush1.msra.mxu0 %v2156
    %4061 = vmatprep.subr.mxu0 0.0
    %4062 = vmatpush1.msra.mxu0 %v2157
    %4063 = vmatprep.subr.mxu0 0.0
    %4064 = vmatpush1.msra.mxu0 %v2158
    %4065 = vmatprep.subr.mxu0 0.0
    %4066 = vmatpush1.msra.mxu0 %v2159
    %4067 = vmatprep.subr.mxu0 0.0
    %4068 = vmatpush1.msra.mxu0 %v2160
    %4069 = vmatprep.subr.mxu0 0.0
    %4070 = vmatpush1.msra.mxu0 %v2161
    %4071 = vmatprep.subr.mxu0 0.0
    %4072 = vmatpush1.msra.mxu0 0.0
    %4073 = vmatprep.subr.mxu0 0.0
    %4074 = vmatpush1.msra.mxu0 0.0
    %4075 = vmatprep.subr.mxu0 0.0
    %4076 = vmatpush1.msra.mxu0 0.0
    %4077 = vmatprep.subr.mxu0 0.0
    %4078 = vmatpush1.msra.mxu0 0.0
    %4079 = vmatprep.subr.mxu0 0.0
    %4080 = vmatpush1.msra.mxu0 0.0
    %4081 = vmatprep.subr.mxu0 0.0
    %4082 = vmatpush1.msra.mxu0 0.0
    %4083 = vmatprep.subr.mxu0 0.0
    %4084 = vmatpush1.msra.mxu0 0.0
    %4085 = vmatprep.subr.mxu0 0.0
    %4086 = vmatpush1.msra.mxu0 0.0
    %4087 = vmatprep.subr.mxu0 0.0
    %4088 = vmatpush1.msra.mxu0 0.0
    %4089 = vmatprep.subr.mxu0 0.0
    %4090 = vmatpush1.msra.mxu0 0.0
    %4091 = vmatprep.subr.mxu0 0.0
    %4092 = vmatpush1.msra.mxu0 0.0
    %4093 = vmatprep.subr.mxu0 0.0
    %4094 = vmatpush1.msra.mxu0 0.0
    %4095 = vmatprep.subr.mxu0 0.0
    %4096 = vmatpush1.msra.mxu0 0.0
    %4097 = vmatprep.subr.mxu0 0.0
    %4098 = vmatpush1.msra.mxu0 0.0
    %4099 = vmatprep.subr.mxu0 0.0
    %4100 = vmatpush1.msra.mxu0 0.0
    %4101 = vmatprep.subr.mxu0 0.0
    %4102 = vmatpush1.msra.mxu0 0.0
    %4103 = vmatprep.subr.mxu0 0.0
    %4104 = vmatpush1.msra.mxu0 0.0
    %4105 = vmatprep.subr.mxu0 0.0
    %4106 = vmatpush1.msra.mxu0 0.0
    %4107 = vmatprep.subr.mxu0 0.0
    %4108 = vmatpush1.msra.mxu0 0.0
    %4109 = vmatprep.subr.mxu0 0.0
    %4110 = vmatpush1.msra.mxu0 0.0
    %4111 = vmatprep.subr.mxu0 0.0
    %4112 = vmatpush1.msra.mxu0 0.0
    %4113 = vmatprep.subr.mxu0 0.0
    %4114 = vmatpush1.msra.mxu0 0.0
    %4115 = vmatprep.subr.mxu0 0.0
    %4116 = vmatpush1.msra.mxu0 0.0
    %4117 = vmatprep.subr.mxu0 0.0
    %4118 = vmatpush1.msra.mxu0 0.0
    %4119 = vmatprep.mubr.f32.mxu0 0.0
    %4120 = vmatmul.mubr.f32.gmra.mrb[0].mxu0 %v4050
    %v4121 = vpop.f32.mrb[0].mxu0
    %v4122 = vadd.f32 %v4048, %v4121
    %v4123 = vpop.f32.mrb[0].mxu0
    %4124 = vmatprep.mubr.f32.mxu0 0.0
    %4125 = vmatmul.mubr.f32.gmra.mrb[0].mxu0 %v4053
    %v4126 = vpop.f32.mrb[0].mxu0
    %v4127 = vadd.f32 %v4048, %v4126
    %v4128 = vpop.f32.mrb[0].mxu0
    %4129 = vdwg.mxu0
    %v4130 = vadd.f32 %v3956, %v4122
    %v4131 = vadd.f32 %v3957, %v4127
    %v4132 = vsel %vm140, %v4130, 0.0
    %4133 = vadd.xlane.f32.xlu0 %v4132
    %v4134 = vpop.xlane.xlu0 %4133
    %v4135 = vsel %vm140, %v4131, 0.0
    %4136 = vadd.xlane.f32.xlu0 %v4135
    %v4137 = vpop.xlane.xlu0 %4136
    %v4138 = vmul.f32 %v4134, %v1901
    %v4139 = vmul.f32 %v4137, %v1901
    %v4140 = vsub.f32 %v4130, %v4138
    %v4141 = vsub.f32 %v4131, %v4139
    %v4142 = vmul.f32 %v4140, %v4140
    %v4143 = vmul.f32 %v4141, %v4141
    %v4144 = vsel %vm140, %v4142, 0.0
    %4145 = vadd.xlane.f32.xlu0 %v4144
    %v4146 = vpop.xlane.xlu0 %4145
    %v4147 = vsel %vm140, %v4143, 0.0
    %4148 = vadd.xlane.f32.xlu0 %v4147
    %v4149 = vpop.xlane.xlu0 %4148
    %v4150 = vmul.f32 %v4146, %v1901
    %v4151 = vmul.f32 %v4149, %v1901
    %v4152 = vadd.f32 %v4150, 1e-05
    %v4153 = vadd.f32 %v4151, 1e-05
    %v4154 = vrsqrt.pop %v4152
    %v4155 = vrsqrt.pop %v4153
    %v4156 = vmul.f32 %v4140, %v4154
    %v4157 = vmul.f32 %v4141, %v4155
    %v4158 = vlaneseq
    %v4159 = vshrl.u32 %v4158, 7
    %v4160 = vsub.s32 4, %v4159
    %v4161 = vrot.slane %v2162, %v4160
    %v4162 = vmul.f32 %v4156, %v4161
    %v4163 = vmul.f32 %v4157, %v4161
    %v4164 = vlaneseq
    %v4165 = vshrl.u32 %v4164, 7
    %v4166 = vsub.s32 5, %v4165
    %v4167 = vrot.slane %v2162, %v4166
    %v4168 = vadd.f32 %v4162, %v4167
    %v4169 = vadd.f32 %v4163, %v4167
    %4170 = vst.msk [vmem:[%s2] sm:$0xff] %vm140, %v4168
    %4171 = vst.msk [vmem:[%s2 + $0x8] sm:$0xff] %vm140, %v4169
    %v4172 = vadd.f32 %v4168, %v4169
    %v4173 = vmul.f32 %v4172, 0.5
    %v4174 = vld [vmem:[#allocation2 + $0x50] sm:$0xff]
    %v4175 = vld [vmem:[#allocation2 + $0x58] sm:$0xff]
    %v4176 = vld [vmem:[#allocation2 + $0x60] sm:$0xff]
    %v4177 = vld [vmem:[#allocation2 + $0x68] sm:$0xff]
    %v4178 = vld [vmem:[#allocation2 + $0x70] sm:$0x1]
    %v4179 = vlaneseq
    %v4180 = vshrl.u32 %v4179, 7
    %v4181 = vsub.s32 0, %v4180
    %v4182 = vrot.slane %v4178, %v4181
    %v4184 = vsel %vm140, %v4173, 0
    %4186 = vmatprep.subr.mxu0 0.0
    %4187 = vmatpush1.msra.mxu0 %v4174
    %4188 = vmatprep.subr.mxu0 0.0
    %4189 = vmatpush1.msra.mxu0 %v4175
    %4190 = vmatprep.subr.mxu0 0.0
    %4191 = vmatpush1.msra.mxu0 %v4176
    %4192 = vmatprep.subr.mxu0 0.0
    %4193 = vmatpush1.msra.mxu0 %v4177
    %4194 = vmatprep.subr.mxu0 0.0
    %4195 = vmatpush1.msra.mxu0 0.0
    %4196 = vmatprep.subr.mxu0 0.0
    %4197 = vmatpush1.msra.mxu0 0.0
    %4198 = vmatprep.subr.mxu0 0.0
    %4199 = vmatpush1.msra.mxu0 0.0
    %4200 = vmatprep.subr.mxu0 0.0
    %4201 = vmatpush1.msra.mxu0 0.0
    %4202 = vmatprep.subr.mxu0 0.0
    %4203 = vmatpush1.msra.mxu0 0.0
    %4204 = vmatprep.subr.mxu0 0.0
    %4205 = vmatpush1.msra.mxu0 0.0
    %4206 = vmatprep.subr.mxu0 0.0
    %4207 = vmatpush1.msra.mxu0 0.0
    %4208 = vmatprep.subr.mxu0 0.0
    %4209 = vmatpush1.msra.mxu0 0.0
    %4210 = vmatprep.subr.mxu0 0.0
    %4211 = vmatpush1.msra.mxu0 0.0
    %4212 = vmatprep.subr.mxu0 0.0
    %4213 = vmatpush1.msra.mxu0 0.0
    %4214 = vmatprep.subr.mxu0 0.0
    %4215 = vmatpush1.msra.mxu0 0.0
    %4216 = vmatprep.subr.mxu0 0.0
    %4217 = vmatpush1.msra.mxu0 0.0
    %4218 = vmatprep.subr.mxu0 0.0
    %4219 = vmatpush1.msra.mxu0 0.0
    %4220 = vmatprep.subr.mxu0 0.0
    %4221 = vmatpush1.msra.mxu0 0.0
    %4222 = vmatprep.subr.mxu0 0.0
    %4223 = vmatpush1.msra.mxu0 0.0
    %4224 = vmatprep.subr.mxu0 0.0
    %4225 = vmatpush1.msra.mxu0 0.0
    %4226 = vmatprep.subr.mxu0 0.0
    %4227 = vmatpush1.msra.mxu0 0.0
    %4228 = vmatprep.subr.mxu0 0.0
    %4229 = vmatpush1.msra.mxu0 0.0
    %4230 = vmatprep.subr.mxu0 0.0
    %4231 = vmatpush1.msra.mxu0 0.0
    %4232 = vmatprep.subr.mxu0 0.0
    %4233 = vmatpush1.msra.mxu0 0.0
    %4234 = vmatprep.subr.mxu0 0.0
    %4235 = vmatpush1.msra.mxu0 0.0
    %4236 = vmatprep.subr.mxu0 0.0
    %4237 = vmatpush1.msra.mxu0 0.0
    %4238 = vmatprep.subr.mxu0 0.0
    %4239 = vmatpush1.msra.mxu0 0.0
    %4240 = vmatprep.subr.mxu0 0.0
    %4241 = vmatpush1.msra.mxu0 0.0
    %4242 = vmatprep.subr.mxu0 0.0
    %4243 = vmatpush1.msra.mxu0 0.0
    %4244 = vmatprep.subr.mxu0 0.0
    %4245 = vmatpush1.msra.mxu0 0.0
    %4246 = vmatprep.subr.mxu0 0.0
    %4247 = vmatpush1.msra.mxu0 0.0
    %4248 = vmatprep.subr.mxu0 0.0
    %4249 = vmatpush1.msra.mxu0 0.0
    %4250 = vmatprep.mubr.f32.mxu0 0.0
    %4251 = vmatmul.mubr.f32.gmra.mrb[0].mxu0 %v4184
    %v4252 = vpop.f32.mrb[0].mxu0
    %v4253 = vadd.f32 %v4182, %v4252
    %v4254 = vpop.f32.mrb[0].mxu0
    %4255 = vdwg.mxu0
    %4256 = vst.msk [vmem:[%s2 + $0x10] sm:$0xff] %vm140, %v4253
    // Predicated region
    $region14: #{_lambda_.1} parent=1 // pred_check
      _
    $region15: #{_lambda_.1} parent=1 // pred_check_branch
      %4258 = sbr.rel (0) target = $region17
    $region16: #{_lambda_.1} parent=1 // pred_region
      _
    $region17: #{_lambda_.1} parent=1 // pred_fallthru
      _
    // Predicated region
    $region18: #{_lambda_.1} parent=1 // pred_check
      _
    $region19: #{_lambda_.1} parent=1 // pred_check_branch
      %4260 = sbr.rel (0) target = $region21
    $region20: #{_lambda_.1} parent=1 // pred_region
      _
    $region21: #{_lambda_.1} parent=1 // pred_fallthru
      _
    %4261 = vsyncpa [#allocation3], 1

</llo_original>
